<compile_context>
chip_gen: v7x
topology: tpu7x:2x2x1
jax: 0.10.0
libtpu: 0.0.40
codegen_flags: <defaults>
</compile_context>

<pallas_src>
import jax
import jax.numpy as jnp
from jax.experimental import pallas as pl
from jax.experimental.pallas import tpu as pltpu


# --------------------------------------------------------------------------
# helpers
# --------------------------------------------------------------------------
def _round_up(x, m):
    return ((x + m - 1) // m) * m


def _vmem_bytes():
    """Physical VMEM per TensorCore (v5e/v6e: 128 MiB, v7x: 64 MiB)."""
    try:
        info = pltpu.get_tpu_info()
        v = getattr(info, "vmem_capacity_bytes", None)
        if v:
            return int(v)
    except Exception:
        pass
    return 64 << 20  # assume the tightest generation (v7x) if the query fails


def _vmem_limit(vmem_bytes):
    # Explicit scoped-VMEM clamp: well above the 16/32 MiB defaults, just
    # under physical capacity (128 MiB on v5e/v6e, 64 MiB per TC on v7x).
    return max(32 << 20, int(min(vmem_bytes, 128 << 20)) - (2 << 20))


def _choose_tile(E, stream_bytes_per_row, tile_e, vmem_bytes):
    """Edge-tile size: as big as VMEM allows (amortizes ~0.35us/grid-step),
    256-aligned (bf16 sublane packing + MXU cadence + lane-dense output),
    but keeping >= 4 grid steps when there is enough work (pipelining + the
    two v7x TensorCores via the "parallel" edge axis)."""
    if tile_e is None:
        budget = vmem_bytes // 3
        tile_e = max(1024, min(16384, budget // max(int(stream_bytes_per_row), 1)))
    tile = min(int(tile_e), _round_up(E, 256))
    if E > 4 * 256:
        tile = min(tile, _round_up(pl.cdiv(E, 4), 256))
    return max(256, _round_up(tile, 256))


# --------------------------------------------------------------------------
# Primary kernel: gather fused in-kernel, edge axis on lanes (lane-dense out)
# --------------------------------------------------------------------------
def _mlp_edge_kernel_fused(src_ref, dst_ref, ht_ref, w1s_ref, w1d_ref, b1_ref,
                           w2_ref, b2_ref, w3c_ref, b3_ref, out_ref):
    # src/dst: (1, tile) i32      ht: (h, N_pad) f32 (node table, resident)
    # w1s/w1d/w2: (h, h) bf16     b1/b2/w3c: (h, 1) f32    b3: (1, 1) f32
    # out: (1, tile) f32          -- edge axis is the lane axis throughout.
    h_feats = ht_ref.shape[0]
    tile = src_ref.shape[1]
    table = ht_ref[...]                                       # (h, N_pad) f32

    si = jnp.broadcast_to(src_ref[...], (h_feats, tile))       # (h, tile) i32
    di = jnp.broadcast_to(dst_ref[...], (h_feats, tile))
    # In-kernel gather along the lane (node) axis -> (h, tile) per endpoint.
    hs_t = jnp.take_along_axis(table, si, axis=1,
                               mode="promise_in_bounds").astype(jnp.bfloat16)
    hd_t = jnp.take_along_axis(table, di, axis=1,
                               mode="promise_in_bounds").astype(jnp.bfloat16)

    # Layer 1: W1 split into src/dst halves (no (E, 2h) concat), f32 accum.
    z1 = (jnp.dot(w1s_ref[...], hs_t, preferred_element_type=jnp.float32)
          + jnp.dot(w1d_ref[...], hd_t, preferred_element_type=jnp.float32)
          + b1_ref[...])
    a1 = jnp.maximum(z1, 0.0)

    z2 = (jnp.dot(w2_ref[...], a1.astype(jnp.bfloat16),
                  preferred_element_type=jnp.float32) + b2_ref[...])
    a2 = jnp.maximum(z2, 0.0)

    # Layer 3 (h -> 1): VPU multiply + cross-sublane reduce; the result is
    # already a lane-dense (1, tile) row, stored with an unmasked contiguous
    # writeback (no (tile, 1) masked column stores).
    z3 = jnp.sum(a2 * w3c_ref[...], axis=0, keepdims=True) + b3_ref[...]
    out_ref[...] = z3.astype(out_ref.dtype)


def _forward_fused(h, src_idx, dst_idx, params, tile_e=None):
    w1, b1, w2, b2, w3, b3 = params
    N, h_feats = h.shape
    E = src_idx.shape[0]
    vmem = _vmem_bytes()

    # streamed bytes/edge-row (double-buffered idx + scores) + in-flight acts
    tile = _choose_tile(E, 24 + 20 * h_feats, tile_e, vmem)
    n_tiles = pl.cdiv(E, tile)
    e_pad = n_tiles * tile

    # Node table resident in VMEM, transposed so nodes sit on lanes (pad the
    # node axis to 128 for clean lane tiling of the gather source).
    n_pad = _round_up(max(N, 1), 128)
    h_t = h.astype(jnp.float32).T                              # (h, N)
    if n_pad != N:
        h_t = jnp.pad(h_t, ((0, 0), (0, n_pad - N)))

    def prep_idx(idx):
        idx = idx.astype(jnp.int32)
        if e_pad != E:
            idx = jnp.pad(idx, (0, e_pad - E))                 # pad gathers node 0
        return idx.reshape(1, e_pad)

    src2 = prep_idx(src_idx)
    dst2 = prep_idx(dst_idx)

    # Weights pre-transposed so every layer is "weights @ activations".
    w1s_t = w1[:h_feats].T.astype(jnp.bfloat16)                # (h, h)
    w1d_t = w1[h_feats:].T.astype(jnp.bfloat16)                # (h, h)
    w2_t = w2.T.astype(jnp.bfloat16)                           # (h, h)
    b1c = b1.astype(jnp.float32).reshape(h_feats, 1)
    b2c = b2.astype(jnp.float32).reshape(h_feats, 1)
    w3c = w3.astype(jnp.float32).reshape(h_feats, 1)
    b3c = b3.astype(jnp.float32).reshape(1, 1)

    idx_spec = pl.BlockSpec((1, tile), lambda i: (0, i))

    def resident(shape):
        # Same block every grid step -> stays resident in VMEM.
        return pl.BlockSpec(shape, lambda i: (0, 0))

    out = pl.pallas_call(
        _mlp_edge_kernel_fused,
        out_shape=jax.ShapeDtypeStruct((1, e_pad), jnp.float32),
        grid=(n_tiles,),
        in_specs=[
            idx_spec, idx_spec,
            resident((h_feats, n_pad)),
            resident((h_feats, h_feats)), resident((h_feats, h_feats)),
            resident((h_feats, 1)),
            resident((h_feats, h_feats)), resident((h_feats, 1)),
            resident((h_feats, 1)), resident((1, 1)),
        ],
        out_specs=pl.BlockSpec((1, tile), lambda i: (0, i)),
        compiler_params=pltpu.CompilerParams(
            dimension_semantics=("parallel",),
            vmem_limit_bytes=_vmem_limit(vmem)),
    )(src2, dst2, h_t, w1s_t, w1d_t, b1c, w2_t, b2c, w3c, b3c)

    # .squeeze(1) in the PyTorch module; drop padded edges.
    return out[0, :E]


# --------------------------------------------------------------------------
# Fallback kernel: XLA-side gather (previously validated structure)
# --------------------------------------------------------------------------
def _mlp_edge_kernel_pregathered(hs_ref, hd_ref, w1s_ref, w1d_ref, b1_ref,
                                 w2_ref, b2_ref, w3r_ref, b3_ref, out_ref):
    # hs/hd: (tile, h) bf16    w1s/w1d/w2: (h, h) bf16
    # b1/b2: (1, h) f32        w3r: (1, h) f32    b3: (1, 1) f32
    z1 = (jnp.dot(hs_ref[...], w1s_ref[...], preferred_element_type=jnp.float32)
          + jnp.dot(hd_ref[...], w1d_ref[...], preferred_element_type=jnp.float32)
          + b1_ref[...])
    a1 = jnp.maximum(z1, 0.0)
    z2 = (jnp.dot(a1.astype(w2_ref.dtype), w2_ref[...],
                  preferred_element_type=jnp.float32) + b2_ref[...])
    a2 = jnp.maximum(z2, 0.0)
    z3 = jnp.sum(a2 * w3r_ref[...], axis=-1, keepdims=True) + b3_ref[...]
    out_ref[...] = z3.astype(out_ref.dtype)


def _forward_pregathered(h, src_idx, dst_idx, params, tile_e=None):
    w1, b1, w2, b2, w3, b3 = params
    h_feats = h.shape[1]
    E = src_idx.shape[0]
    vmem = _vmem_bytes()

    # Cast the node table to bf16 once, THEN gather: the XLA gather reads and
    # writes half the bytes for large E.
    h_bf = h.astype(jnp.bfloat16)
    h_src = jnp.take(h_bf, src_idx, axis=0)                    # (E, h) bf16
    h_dst = jnp.take(h_bf, dst_idx, axis=0)

    tile = _choose_tile(E, 24 * h_feats + 8, tile_e, vmem)
    n_tiles = pl.cdiv(E, tile)
    e_pad = n_tiles * tile
    if e_pad != E:
        pad = e_pad - E
        h_src = jnp.pad(h_src, ((0, pad), (0, 0)))
        h_dst = jnp.pad(h_dst, ((0, pad), (0, 0)))

    w1s = w1[:h_feats].astype(jnp.bfloat16)
    w1d = w1[h_feats:].astype(jnp.bfloat16)
    w2c = w2.astype(jnp.bfloat16)
    b1f = b1.astype(jnp.float32).reshape(1, h_feats)
    b2f = b2.astype(jnp.float32).reshape(1, h_feats)
    w3r = w3[:, 0].astype(jnp.float32).reshape(1, h_feats)
    b3f = b3.astype(jnp.float32).reshape(1, 1)

    edge_spec = pl.BlockSpec((tile, h_feats), lambda i: (i, 0))

    def resident(shape):
        return pl.BlockSpec(shape, lambda i: (0, 0))

    out = pl.pallas_call(
        _mlp_edge_kernel_pregathered,
        out_shape=jax.ShapeDtypeStruct((e_pad, 1), jnp.float32),
        grid=(n_tiles,),
        in_specs=[
            edge_spec, edge_spec,
            resident((h_feats, h_feats)), resident((h_feats, h_feats)),
            resident((1, h_feats)),
            resident((h_feats, h_feats)), resident((1, h_feats)),
            resident((1, h_feats)), resident((1, 1)),
        ],
        out_specs=pl.BlockSpec((tile, 1), lambda i: (i, 0)),
        compiler_params=pltpu.CompilerParams(
            dimension_semantics=("parallel",),
            vmem_limit_bytes=_vmem_limit(vmem)),
    )(h_src, h_dst, w1s, w1d, b1f, w2c, b2f, w3r, b3f)

    return out[:E, 0]


# --------------------------------------------------------------------------
# Public forward
# --------------------------------------------------------------------------
def mlp_predictor_forward(h, src_idx, dst_idx, params, tile_e=None, impl="auto"):
    """h: (N, h_feats) node features; src_idx/dst_idx: (E,) edge endpoints.
    impl: "fused" | "pregather" | "auto" (fused when the node table fits VMEM,
    with automatic fallback if this build rejects the in-kernel gather)."""
    if impl in ("auto", "fused"):
        table_bytes = h.shape[0] * h.shape[1] * 4
        if impl == "fused" or table_bytes <= _vmem_bytes() // 8:
            try:
                return _forward_fused(h, src_idx, dst_idx, params, tile_e)
            except Exception:
                if impl == "fused":
                    raise
                # TODO(synk): this jax/Mosaic build rejected the in-kernel lane
                # gather -- falling back to the XLA-side gather path.
    return _forward_pregathered(h, src_idx, dst_idx, params, tile_e)


def init_params(key, h_feats):
    """nn.Linear-shaped params (uniform +/- 1/sqrt(fan_in)), stored as
    (in_features, out_features)."""
    ks = jax.random.split(key, 6)

    def lin(kw, kb, fan_in, fan_out):
        bound = 1.0 / jnp.sqrt(jnp.float32(fan_in))
        w = jax.random.uniform(kw, (fan_in, fan_out), jnp.float32, -bound, bound)
        b = jax.random.uniform(kb, (1, fan_out), jnp.float32, -bound, bound)
        return w, b

    w1, b1 = lin(ks[0], ks[1], h_feats * 2, h_feats)
    w2, b2 = lin(ks[2], ks[3], h_feats, h_feats)
    w3, b3 = lin(ks[4], ks[5], h_feats, 1)
    return (w1, b1, w2, b2, w3, b3)


if __name__ == "__main__":
    key = jax.random.PRNGKey(0)
    k_h, k_p, k_src, k_dst = jax.random.split(key, 4)

    h_feats = 32
    num_nodes = 64
    num_edges = 2000   # not a multiple of the tile -> exercises padding; 4 grid steps

    h = jax.random.normal(k_h, (num_nodes, h_feats), jnp.float32)
    src_idx = jax.random.randint(k_src, (num_edges,), 0, num_nodes)
    dst_idx = jax.random.randint(k_dst, (num_edges,), 0, num_nodes)
    params = init_params(k_p, h_feats)

    scores = mlp_predictor_forward(h, src_idx, dst_idx, params)
    scores = jax.block_until_ready(scores)

    # Pure-JAX reference of the same math at the same (bf16-rounded) precision.
    w1, b1, w2, b2, w3, b3 = params
    f32 = jnp.float32
    hi = jax.lax.Precision.HIGHEST
    hs = jnp.take(h, src_idx, 0).astype(jnp.bfloat16).astype(f32)
    hd = jnp.take(h, dst_idx, 0).astype(jnp.bfloat16).astype(f32)
    w1s = w1[:h_feats].astype(jnp.bfloat16).astype(f32)
    w1d = w1[h_feats:].astype(jnp.bfloat16).astype(f32)
    w2c = w2.astype(jnp.bfloat16).astype(f32)
    z1 = jnp.dot(hs, w1s, precision=hi) + jnp.dot(hd, w1d, precision=hi) + b1
    a1 = jnp.maximum(z1, 0.0).astype(jnp.bfloat16).astype(f32)
    z2 = jnp.dot(a1, w2c, precision=hi) + b2
    a2 = jnp.maximum(z2, 0.0)
    ref = jnp.sum(a2 * w3[:, 0][None, :], axis=-1) + b3[0, 0]

    assert scores.shape == (num_edges,)
    assert jnp.allclose(scores, ref, atol=2e-3, rtol=2e-3), (
        float(jnp.max(jnp.abs(scores - ref))))

    print("KERNEL_OK")
</pallas_src>

<mosaic_0001>
module attributes {stable_mosaic.version = 11 : i64} {
  func.func @_mlp_edge_kernel_fused(%arg0: i32, %arg1: memref<1x512xi32, #tpu.memory_space<vmem>>, %arg2: memref<1x512xi32, #tpu.memory_space<vmem>>, %arg3: memref<32x128xf32, #tpu.memory_space<vmem>>, %arg4: memref<32x32xbf16, #tpu.memory_space<vmem>>, %arg5: memref<32x32xbf16, #tpu.memory_space<vmem>>, %arg6: memref<32x1xf32, #tpu.memory_space<vmem>>, %arg7: memref<32x32xbf16, #tpu.memory_space<vmem>>, %arg8: memref<32x1xf32, #tpu.memory_space<vmem>>, %arg9: memref<32x1xf32, #tpu.memory_space<vmem>>, %arg10: memref<1x1xf32, #tpu.memory_space<vmem>>, %arg11: memref<1x512xf32, #tpu.memory_space<vmem>>) attributes {dimension_semantics = [#tpu.dimension_semantics<parallel>], iteration_bounds = array<i64: 4>, scalar_prefetch = 0 : i64, scratch_operands = 0 : i64, tpu.core_type = #tpu.core_type<tc>, window_params = [{transform_indices = @transform_0, window_bounds = array<i64: 1, 512>}, {transform_indices = @transform_1, window_bounds = array<i64: 1, 512>}, {pipeline_mode = #tpu.pipeline_mode<synchronous>, transform_indices = @transform_2, window_bounds = array<i64: 32, 128>}, {pipeline_mode = #tpu.pipeline_mode<synchronous>, transform_indices = @transform_3, window_bounds = array<i64: 32, 32>}, {pipeline_mode = #tpu.pipeline_mode<synchronous>, transform_indices = @transform_4, window_bounds = array<i64: 32, 32>}, {pipeline_mode = #tpu.pipeline_mode<synchronous>, transform_indices = @transform_5, window_bounds = array<i64: 32, 1>}, {pipeline_mode = #tpu.pipeline_mode<synchronous>, transform_indices = @transform_6, window_bounds = array<i64: 32, 32>}, {pipeline_mode = #tpu.pipeline_mode<synchronous>, transform_indices = @transform_7, window_bounds = array<i64: 32, 1>}, {pipeline_mode = #tpu.pipeline_mode<synchronous>, transform_indices = @transform_8, window_bounds = array<i64: 32, 1>}, {pipeline_mode = #tpu.pipeline_mode<synchronous>, transform_indices = @transform_9, window_bounds = array<i64: 1, 1>}, {transform_indices = @transform_10, window_bounds = array<i64: 1, 512>}]} {
    %c0 = arith.constant 0 : index
    %c0_0 = arith.constant 0 : index
    %0 = vector.load %arg3[%c0, %c0_0] : memref<32x128xf32, #tpu.memory_space<vmem>>, vector<32x128xf32>
    %c0_1 = arith.constant 0 : index
    %c0_2 = arith.constant 0 : index
    %1 = vector.load %arg1[%c0_1, %c0_2] : memref<1x512xi32, #tpu.memory_space<vmem>>, vector<1x512xi32>
    %2 = vector.shape_cast %1 : vector<1x512xi32> to vector<1x512xi32>
    %3 = vector.broadcast %2 : vector<1x512xi32> to vector<32x512xi32>
    %c0_3 = arith.constant 0 : index
    %c0_4 = arith.constant 0 : index
    %4 = vector.load %arg2[%c0_3, %c0_4] : memref<1x512xi32, #tpu.memory_space<vmem>>, vector<1x512xi32>
    %5 = vector.shape_cast %4 : vector<1x512xi32> to vector<1x512xi32>
    %6 = vector.broadcast %5 : vector<1x512xi32> to vector<32x512xi32>
    %7 = vector.shape_cast %3 : vector<32x512xi32> to vector<32x512x1xi32>
    %8 = vector.shape_cast %7 : vector<32x512x1xi32> to vector<32x512xi32>
    %9 = tpu.dynamic_gather %0[%8] in [1] : vector<32x128xf32>, vector<32x512xi32> -> vector<32x512xf32>
    %10 = arith.truncf %9 : vector<32x512xf32> to vector<32x512xbf16>
    %11 = vector.shape_cast %6 : vector<32x512xi32> to vector<32x512x1xi32>
    %12 = vector.shape_cast %11 : vector<32x512x1xi32> to vector<32x512xi32>
    %13 = tpu.dynamic_gather %0[%12] in [1] : vector<32x128xf32>, vector<32x512xi32> -> vector<32x512xf32>
    %14 = arith.truncf %13 : vector<32x512xf32> to vector<32x512xbf16>
    %c0_5 = arith.constant 0 : index
    %c0_6 = arith.constant 0 : index
    %15 = vector.load %arg4[%c0_5, %c0_6] : memref<32x32xbf16, #tpu.memory_space<vmem>>, vector<32x32xbf16>
    %cst = arith.constant dense<0.000000e+00> : vector<32x512xf32>
    %16 = tpu.matmul %15, %10, %cst {dimension_numbers = #tpu.dot_dimension_numbers<[1], [0], [0], [1], [0, 0, 1, 1], [], []>} : vector<32x32xbf16>, vector<32x512xbf16>, vector<32x512xf32> -> vector<32x512xf32>
    %c0_7 = arith.constant 0 : index
    %c0_8 = arith.constant 0 : index
    %17 = vector.load %arg5[%c0_7, %c0_8] : memref<32x32xbf16, #tpu.memory_space<vmem>>, vector<32x32xbf16>
    %cst_9 = arith.constant dense<0.000000e+00> : vector<32x512xf32>
    %18 = tpu.matmul %17, %14, %cst_9 {dimension_numbers = #tpu.dot_dimension_numbers<[1], [0], [0], [1], [0, 0, 1, 1], [], []>} : vector<32x32xbf16>, vector<32x512xbf16>, vector<32x512xf32> -> vector<32x512xf32>
    %19 = arith.addf %16, %18 : vector<32x512xf32>
    %c0_10 = arith.constant 0 : index
    %c0_11 = arith.constant 0 : index
    %20 = vector.load %arg6[%c0_10, %c0_11] : memref<32x1xf32, #tpu.memory_space<vmem>>, vector<32x1xf32>
    %21 = vector.broadcast %20 : vector<32x1xf32> to vector<32x512xf32>
    %22 = arith.addf %19, %21 : vector<32x512xf32>
    %cst_12 = arith.constant 0.000000e+00 : f32
    %23 = vector.broadcast %cst_12 : f32 to vector<32x512xf32>
    %24 = arith.maximumf %22, %23 : vector<32x512xf32>
    %c0_13 = arith.constant 0 : index
    %c0_14 = arith.constant 0 : index
    %25 = vector.load %arg7[%c0_13, %c0_14] : memref<32x32xbf16, #tpu.memory_space<vmem>>, vector<32x32xbf16>
    %26 = arith.truncf %24 : vector<32x512xf32> to vector<32x512xbf16>
    %cst_15 = arith.constant dense<0.000000e+00> : vector<32x512xf32>
    %27 = tpu.matmul %25, %26, %cst_15 {dimension_numbers = #tpu.dot_dimension_numbers<[1], [0], [0], [1], [0, 0, 1, 1], [], []>} : vector<32x32xbf16>, vector<32x512xbf16>, vector<32x512xf32> -> vector<32x512xf32>
    %c0_16 = arith.constant 0 : index
    %c0_17 = arith.constant 0 : index
    %28 = vector.load %arg8[%c0_16, %c0_17] : memref<32x1xf32, #tpu.memory_space<vmem>>, vector<32x1xf32>
    %29 = vector.broadcast %28 : vector<32x1xf32> to vector<32x512xf32>
    %30 = arith.addf %27, %29 : vector<32x512xf32>
    %cst_18 = arith.constant 0.000000e+00 : f32
    %31 = vector.broadcast %cst_18 : f32 to vector<32x512xf32>
    %32 = arith.maximumf %30, %31 : vector<32x512xf32>
    %c0_19 = arith.constant 0 : index
    %c0_20 = arith.constant 0 : index
    %33 = vector.load %arg9[%c0_19, %c0_20] : memref<32x1xf32, #tpu.memory_space<vmem>>, vector<32x1xf32>
    %34 = vector.broadcast %33 : vector<32x1xf32> to vector<32x512xf32>
    %35 = arith.mulf %32, %34 : vector<32x512xf32>
    %cst_21 = arith.constant dense<0.000000e+00> : vector<512xf32>
    %36 = vector.multi_reduction <add>, %35, %cst_21 [0] : vector<32x512xf32> to vector<512xf32>
    %37 = vector.shape_cast %36 : vector<512xf32> to vector<1x512xf32>
    %c0_22 = arith.constant 0 : index
    %c0_23 = arith.constant 0 : index
    %38 = vector.load %arg10[%c0_22, %c0_23] : memref<1x1xf32, #tpu.memory_space<vmem>>, vector<1x1xf32>
    %39 = vector.broadcast %38 : vector<1x1xf32> to vector<1x512xf32>
    %40 = arith.addf %37, %39 : vector<1x512xf32>
    %c0_24 = arith.constant 0 : index
    %c0_25 = arith.constant 0 : index
    %41 = vector.load %arg11[%c0_24, %c0_25] : memref<1x512xf32, #tpu.memory_space<vmem>>, vector<1x512xf32>
    tpu.vector_store %arg11[%c0_24, %c0_25], %40 {strides = array<i32>} : memref<1x512xf32, #tpu.memory_space<vmem>>, vector<1x512xf32>,
    return
  }
  func.func @transform_0(%arg0: i32) -> (i32, i32) {
    %c0_i32 = arith.constant 0 : i32
    %c0_i32_0 = arith.constant 0 : i32
    return %c0_i32, %arg0 : i32, i32
  }
  func.func @transform_1(%arg0: i32) -> (i32, i32) {
    %c0_i32 = arith.constant 0 : i32
    %c0_i32_0 = arith.constant 0 : i32
    return %c0_i32, %arg0 : i32, i32
  }
  func.func @transform_2(%arg0: i32) -> (i32, i32) {
    %c0_i32 = arith.constant 0 : i32
    %c0_i32_0 = arith.constant 0 : i32
    %c0_i32_1 = arith.constant 0 : i32
    return %c0_i32, %c0_i32_0 : i32, i32
  }
  func.func @transform_3(%arg0: i32) -> (i32, i32) {
    %c0_i32 = arith.constant 0 : i32
    %c0_i32_0 = arith.constant 0 : i32
    %c0_i32_1 = arith.constant 0 : i32
    return %c0_i32, %c0_i32_0 : i32, i32
  }
  func.func @transform_4(%arg0: i32) -> (i32, i32) {
    %c0_i32 = arith.constant 0 : i32
    %c0_i32_0 = arith.constant 0 : i32
    %c0_i32_1 = arith.constant 0 : i32
    return %c0_i32, %c0_i32_0 : i32, i32
  }
  func.func @transform_5(%arg0: i32) -> (i32, i32) {
    %c0_i32 = arith.constant 0 : i32
    %c0_i32_0 = arith.constant 0 : i32
    %c0_i32_1 = arith.constant 0 : i32
    return %c0_i32, %c0_i32_0 : i32, i32
  }
  func.func @transform_6(%arg0: i32) -> (i32, i32) {
    %c0_i32 = arith.constant 0 : i32
    %c0_i32_0 = arith.constant 0 : i32
    %c0_i32_1 = arith.constant 0 : i32
    return %c0_i32, %c0_i32_0 : i32, i32
  }
  func.func @transform_7(%arg0: i32) -> (i32, i32) {
    %c0_i32 = arith.constant 0 : i32
    %c0_i32_0 = arith.constant 0 : i32
    %c0_i32_1 = arith.constant 0 : i32
    return %c0_i32, %c0_i32_0 : i32, i32
  }
  func.func @transform_8(%arg0: i32) -> (i32, i32) {
    %c0_i32 = arith.constant 0 : i32
    %c0_i32_0 = arith.constant 0 : i32
    %c0_i32_1 = arith.constant 0 : i32
    return %c0_i32, %c0_i32_0 : i32, i32
  }
  func.func @transform_9(%arg0: i32) -> (i32, i32) {
    %c0_i32 = arith.constant 0 : i32
    %c0_i32_0 = arith.constant 0 : i32
    %c0_i32_1 = arith.constant 0 : i32
    return %c0_i32, %c0_i32_0 : i32, i32
  }
  func.func @transform_10(%arg0: i32) -> (i32, i32) {
    %c0_i32 = arith.constant 0 : i32
    %c0_i32_0 = arith.constant 0 : i32
    return %c0_i32, %arg0 : i32, i32
  }
}

module attributes {stable_mosaic.version = 11 : i64} {
  func.func @_mlp_edge_kernel_pregathered(%arg0: i32, %arg1: memref<512x32xbf16, #tpu.memory_space<vmem>>, %arg2: memref<512x32xbf16, #tpu.memory_space<vmem>>, %arg3: memref<32x32xbf16, #tpu.memory_space<vmem>>, %arg4: memref<32x32xbf16, #tpu.memory_space<vmem>>, %arg5: memref<1x32xf32, #tpu.memory_space<vmem>>, %arg6: memref<32x32xbf16, #tpu.memory_space<vmem>>, %arg7: memref<1x32xf32, #tpu.memory_space<vmem>>, %arg8: memref<1x32xf32, #tpu.memory_space<vmem>>, %arg9: memref<1x1xf32, #tpu.memory_space<vmem>>, %arg10: memref<512x1xf32, #tpu.memory_space<vmem>>) attributes {dimension_semantics = [#tpu.dimension_semantics<parallel>], iteration_bounds = array<i64: 4>, scalar_prefetch = 0 : i64, scratch_operands = 0 : i64, tpu.core_type = #tpu.core_type<tc>, window_params = [{transform_indices = @transform_0, window_bounds = array<i64: 512, 32>}, {transform_indices = @transform_1, window_bounds = array<i64: 512, 32>}, {pipeline_mode = #tpu.pipeline_mode<synchronous>, transform_indices = @transform_2, window_bounds = array<i64: 32, 32>}, {pipeline_mode = #tpu.pipeline_mode<synchronous>, transform_indices = @transform_3, window_bounds = array<i64: 32, 32>}, {pipeline_mode = #tpu.pipeline_mode<synchronous>, transform_indices = @transform_4, window_bounds = array<i64: 1, 32>}, {pipeline_mode = #tpu.pipeline_mode<synchronous>, transform_indices = @transform_5, window_bounds = array<i64: 32, 32>}, {pipeline_mode = #tpu.pipeline_mode<synchronous>, transform_indices = @transform_6, window_bounds = array<i64: 1, 32>}, {pipeline_mode = #tpu.pipeline_mode<synchronous>, transform_indices = @transform_7, window_bounds = array<i64: 1, 32>}, {pipeline_mode = #tpu.pipeline_mode<synchronous>, transform_indices = @transform_8, window_bounds = array<i64: 1, 1>}, {transform_indices = @transform_9, window_bounds = array<i64: 512, 1>}]} {
    %c0 = arith.constant 0 : index
    %c0_0 = arith.constant 0 : index
    %0 = vector.load %arg1[%c0, %c0_0] : memref<512x32xbf16, #tpu.memory_space<vmem>>, vector<512x32xbf16>
    %c0_1 = arith.constant 0 : index
    %c0_2 = arith.constant 0 : index
    %1 = vector.load %arg3[%c0_1, %c0_2] : memref<32x32xbf16, #tpu.memory_space<vmem>>, vector<32x32xbf16>
    %cst = arith.constant dense<0.000000e+00> : vector<512x32xf32>
    %2 = tpu.matmul %0, %1, %cst {dimension_numbers = #tpu.dot_dimension_numbers<[1], [0], [0], [1], [0, 0, 1, 1], [], []>} : vector<512x32xbf16>, vector<32x32xbf16>, vector<512x32xf32> -> vector<512x32xf32>
    %c0_3 = arith.constant 0 : index
    %c0_4 = arith.constant 0 : index
    %3 = vector.load %arg2[%c0_3, %c0_4] : memref<512x32xbf16, #tpu.memory_space<vmem>>, vector<512x32xbf16>
    %c0_5 = arith.constant 0 : index
    %c0_6 = arith.constant 0 : index
    %4 = vector.load %arg4[%c0_5, %c0_6] : memref<32x32xbf16, #tpu.memory_space<vmem>>, vector<32x32xbf16>
    %cst_7 = arith.constant dense<0.000000e+00> : vector<512x32xf32>
    %5 = tpu.matmul %3, %4, %cst_7 {dimension_numbers = #tpu.dot_dimension_numbers<[1], [0], [0], [1], [0, 0, 1, 1], [], []>} : vector<512x32xbf16>, vector<32x32xbf16>, vector<512x32xf32> -> vector<512x32xf32>
    %6 = arith.addf %2, %5 : vector<512x32xf32>
    %c0_8 = arith.constant 0 : index
    %c0_9 = arith.constant 0 : index
    %7 = vector.load %arg5[%c0_8, %c0_9] : memref<1x32xf32, #tpu.memory_space<vmem>>, vector<1x32xf32>
    %8 = vector.broadcast %7 : vector<1x32xf32> to vector<512x32xf32>
    %9 = arith.addf %6, %8 : vector<512x32xf32>
    %cst_10 = arith.constant 0.000000e+00 : f32
    %10 = vector.broadcast %cst_10 : f32 to vector<512x32xf32>
    %11 = arith.maximumf %9, %10 : vector<512x32xf32>
    %12 = arith.truncf %11 : vector<512x32xf32> to vector<512x32xbf16>
    %c0_11 = arith.constant 0 : index
    %c0_12 = arith.constant 0 : index
    %13 = vector.load %arg6[%c0_11, %c0_12] : memref<32x32xbf16, #tpu.memory_space<vmem>>, vector<32x32xbf16>
    %cst_13 = arith.constant dense<0.000000e+00> : vector<512x32xf32>
    %14 = tpu.matmul %12, %13, %cst_13 {dimension_numbers = #tpu.dot_dimension_numbers<[1], [0], [0], [1], [0, 0, 1, 1], [], []>} : vector<512x32xbf16>, vector<32x32xbf16>, vector<512x32xf32> -> vector<512x32xf32>
    %c0_14 = arith.constant 0 : index
    %c0_15 = arith.constant 0 : index
    %15 = vector.load %arg7[%c0_14, %c0_15] : memref<1x32xf32, #tpu.memory_space<vmem>>, vector<1x32xf32>
    %16 = vector.broadcast %15 : vector<1x32xf32> to vector<512x32xf32>
    %17 = arith.addf %14, %16 : vector<512x32xf32>
    %cst_16 = arith.constant 0.000000e+00 : f32
    %18 = vector.broadcast %cst_16 : f32 to vector<512x32xf32>
    %19 = arith.maximumf %17, %18 : vector<512x32xf32>
    %c0_17 = arith.constant 0 : index
    %c0_18 = arith.constant 0 : index
    %20 = vector.load %arg8[%c0_17, %c0_18] : memref<1x32xf32, #tpu.memory_space<vmem>>, vector<1x32xf32>
    %21 = vector.broadcast %20 : vector<1x32xf32> to vector<512x32xf32>
    %22 = arith.mulf %19, %21 : vector<512x32xf32>
    %cst_19 = arith.constant dense<0.000000e+00> : vector<512xf32>
    %23 = vector.multi_reduction <add>, %22, %cst_19 [1] : vector<512x32xf32> to vector<512xf32>
    %24 = vector.shape_cast %23 : vector<512xf32> to vector<512x1xf32>
    %c0_20 = arith.constant 0 : index
    %c0_21 = arith.constant 0 : index
    %25 = vector.load %arg9[%c0_20, %c0_21] : memref<1x1xf32, #tpu.memory_space<vmem>>, vector<1x1xf32>
    %26 = vector.broadcast %25 : vector<1x1xf32> to vector<512x1xf32>
    %27 = arith.addf %24, %26 : vector<512x1xf32>
    %c0_22 = arith.constant 0 : index
    %c0_23 = arith.constant 0 : index
    %28 = vector.load %arg10[%c0_22, %c0_23] : memref<512x1xf32, #tpu.memory_space<vmem>>, vector<512x1xf32>
    tpu.vector_store %arg10[%c0_22, %c0_23], %27 {strides = array<i32>} : memref<512x1xf32, #tpu.memory_space<vmem>>, vector<512x1xf32>,
    return
  }
  func.func @transform_0(%arg0: i32) -> (i32, i32) {
    %c0_i32 = arith.constant 0 : i32
    %c0_i32_0 = arith.constant 0 : i32
    return %arg0, %c0_i32 : i32, i32
  }
  func.func @transform_1(%arg0: i32) -> (i32, i32) {
    %c0_i32 = arith.constant 0 : i32
    %c0_i32_0 = arith.constant 0 : i32
    return %arg0, %c0_i32 : i32, i32
  }
  func.func @transform_2(%arg0: i32) -> (i32, i32) {
    %c0_i32 = arith.constant 0 : i32
    %c0_i32_0 = arith.constant 0 : i32
    %c0_i32_1 = arith.constant 0 : i32
    return %c0_i32, %c0_i32_0 : i32, i32
  }
  func.func @transform_3(%arg0: i32) -> (i32, i32) {
    %c0_i32 = arith.constant 0 : i32
    %c0_i32_0 = arith.constant 0 : i32
    %c0_i32_1 = arith.constant 0 : i32
    return %c0_i32, %c0_i32_0 : i32, i32
  }
  func.func @transform_4(%arg0: i32) -> (i32, i32) {
    %c0_i32 = arith.constant 0 : i32
    %c0_i32_0 = arith.constant 0 : i32
    %c0_i32_1 = arith.constant 0 : i32
    return %c0_i32, %c0_i32_0 : i32, i32
  }
  func.func @transform_5(%arg0: i32) -> (i32, i32) {
    %c0_i32 = arith.constant 0 : i32
    %c0_i32_0 = arith.constant 0 : i32
    %c0_i32_1 = arith.constant 0 : i32
    return %c0_i32, %c0_i32_0 : i32, i32
  }
  func.func @transform_6(%arg0: i32) -> (i32, i32) {
    %c0_i32 = arith.constant 0 : i32
    %c0_i32_0 = arith.constant 0 : i32
    %c0_i32_1 = arith.constant 0 : i32
    return %c0_i32, %c0_i32_0 : i32, i32
  }
  func.func @transform_7(%arg0: i32) -> (i32, i32) {
    %c0_i32 = arith.constant 0 : i32
    %c0_i32_0 = arith.constant 0 : i32
    %c0_i32_1 = arith.constant 0 : i32
    return %c0_i32, %c0_i32_0 : i32, i32
  }
  func.func @transform_8(%arg0: i32) -> (i32, i32) {
    %c0_i32 = arith.constant 0 : i32
    %c0_i32_0 = arith.constant 0 : i32
    %c0_i32_1 = arith.constant 0 : i32
    return %c0_i32, %c0_i32_0 : i32, i32
  }
  func.func @transform_9(%arg0: i32) -> (i32, i32) {
    %c0_i32 = arith.constant 0 : i32
    %c0_i32_0 = arith.constant 0 : i32
    return %arg0, %c0_i32 : i32, i32
  }
}

</mosaic_0001>

<llo_original>
// kernel: tpu_custom_call.1
$region0: #{tpu_custom_call.1}
  #allocation0 [shape = 'u32[]', space=smem, size = 0x4, offset = 0x4, fixed_abs, tag = 'smem constant byte address 0x4 - core index']
  #allocation1 [shape = 'u32[144,128]{1,0:T(1,128)}', space=vmem, size = 0x12000, scoped, tag = 'internal scratch']
  #allocation2 [shape = 'f32[1,1]{1,0:T(1,128)S(1)}', space=vmem, size = 0x200, scoped, tag = 'scoped memory for tpu_custom_call.1']
  %s0 = inlined_call_operand.vmem [shape: s32[1,2048], index: 0, kind: input, shape index: {}]
  %s1 = inlined_call_operand.vmem [shape: s32[1,2048], index: 1, kind: input, shape index: {}]
  %s2 = inlined_call_operand.vmem [shape: f32[32,128], index: 2, kind: input, shape index: {}]
  %s3 = inlined_call_operand.vmem [shape: bf16[32,32], index: 3, kind: input, shape index: {}]
  %s4 = inlined_call_operand.vmem [shape: bf16[32,32], index: 4, kind: input, shape index: {}]
  %s5 = inlined_call_operand.vmem [shape: f32[32,1], index: 5, kind: input, shape index: {}]
  %s6 = inlined_call_operand.vmem [shape: bf16[32,32], index: 6, kind: input, shape index: {}]
  %s7 = inlined_call_operand.vmem [shape: f32[32,1], index: 7, kind: input, shape index: {}]
  %s8 = inlined_call_operand.vmem [shape: f32[32,1], index: 8, kind: input, shape index: {}]
  %s9 = inlined_call_operand.<no memory space> [shape: f32[1,1], index: 9, kind: input, shape index: {}]
  %s10 = inlined_call_operand.hbm [shape: f32[1,2048], index: 10, kind: output, shape index: {}]
  %s11 = sld [smem:[#allocation0]]
  $region73: #{tpu_custom_call.1} parent=0
    _
  %s13 = ssub.s32 1, %s11
  %s14 = scalar_select 0, %s13, %s11
  %v15 = vstv %s9
  %16 = vst [vmem:[#allocation2] sm:$0x1] %v15
  $region1: #{tpu_custom_call.1} parent=0
    #allocation3 [shape = 'u8[4096]{0}', space=vmem, size = 0x1000, scoped, tag = 'output window, operand 0']
    #allocation4 [shape = 's32[2]{0}', space=sflag, size = 0x8, scoped, tag = 'scoped memory for tpu_custom_call.1']
    %17 = vsyncpa [#allocation4], 0
    %s18 = scalar_lea.sflag [#allocation4], 1
    %19 = vsyncpa %s18, 0
    loop: start=0, step=1, limit=6
    $region2: #{tpu_custom_call.1} parent=1 // loop_pre_header
      _
    $region3: #{tpu_custom_call.1} parent=1 // loop_header
      %s21 = sphi 0, %s25
      %p22 = scmp.ge.s32.totalorder %s21, 6
      %s31 = sphi 0, %s33
      %s34 = sphi 0, %s31
      %s35 = sphi 0, %s34
      %s51 = sphi 0, %s35
      %s57 = sphi 0, %s59
      %s60 = sphi 0, %s57
      %s61 = sphi 0, %s60
      %s77 = sphi 0, %s61
      %s81 = sphi 0, %s81
      %s83 = sphi 0, %s81
      %s84 = sphi 0, %s83
      %s98 = sphi 0, %s84
      %s102 = sphi 0, %s102
      %s104 = sphi 0, %s102
      %s105 = sphi 0, %s104
      %s119 = sphi 0, %s105
      %s123 = sphi 0, %s123
      %s125 = sphi 0, %s123
      %s126 = sphi 0, %s125
      %s140 = sphi 0, %s126
      %s144 = sphi 0, %s144
      %s146 = sphi 0, %s144
      %s147 = sphi 0, %s146
      %s161 = sphi 0, %s147
      %s165 = sphi 0, %s165
      %s167 = sphi 0, %s165
      %s168 = sphi 0, %s167
      %s182 = sphi 0, %s168
      %s186 = sphi 0, %s186
      %s188 = sphi 0, %s186
      %s189 = sphi 0, %s188
      %s203 = sphi 0, %s189
      %s207 = sphi 0, %s207
      %s209 = sphi 0, %s207
      %s210 = sphi 0, %s209
      %s224 = sphi 0, %s210
      %s228 = sphi 0, %s228
      %s230 = sphi 0, %s228
      %s231 = sphi 0, %s230
      %s245 = sphi 0, %s231
      %s251 = sphi 0, %s253
      %s254 = sphi 0, %s251
      %s255 = sphi 0, %s254
      %s271 = sphi 0, %s255
    $region4: #{tpu_custom_call.1} parent=1 // loop_header_branch
      %24 = sbr.rel (%p22) target = $region8
    $region5: #{tpu_custom_call.1} parent=1 // loop_body
      %s26 = ssub.s32 %s21, 1
      %s27 = ssub.s32 %s21, 2
      %s28 = sadd.s32 %s21, 1
      %s29 = ssub.s32 %s21, %s28
      %p30 = scmp.eq.s32.totalorder %s29, 0
      %s32 = sadd.s32 %s31, 1
      %s33 = scalar_select %p30, %s31, %s32
      %p36 = pneg %p30
      %p37 = scmp.eq.s32.totalorder %s21, 3
      %p38 = por %p36, %p37
      %p39 = scmp.ne.s32.totalorder %s31, %s34
      %p40 = scmp.eq.s32.totalorder %s21, 0
      %p41 = por %p39, %p40
      %p42 = scmp.ne.s32.totalorder %s31, %s34
      %p43 = scmp.eq.s32.totalorder %s26, 3
      %p44 = por %p42, %p43
      %p45 = scmp.ne.s32.totalorder %s34, %s35
      %p46 = scmp.eq.s32.totalorder %s26, 0
      %p47 = por %p45, %p46
      %p48 = scmp.ne.s32.totalorder %s34, %s35
      %p49 = scmp.eq.s32.totalorder %s27, 3
      %p50 = por %p48, %p49
      %p52 = scmp.ne.s32.totalorder %s35, %s51
      %p53 = scmp.eq.s32.totalorder %s27, 0
      %p54 = por %p52, %p53
      %s55 = ssub.s32 %s21, %s28
      %p56 = scmp.eq.s32.totalorder %s55, 0
      %s58 = sadd.s32 %s57, 1
      %s59 = scalar_select %p56, %s57, %s58
      %p62 = pneg %p56
      %p63 = scmp.eq.s32.totalorder %s21, 3
      %p64 = por %p62, %p63
      %p65 = scmp.ne.s32.totalorder %s57, %s60
      %p66 = scmp.eq.s32.totalorder %s21, 0
      %p67 = por %p65, %p66
      %p68 = scmp.ne.s32.totalorder %s57, %s60
      %p69 = scmp.eq.s32.totalorder %s26, 3
      %p70 = por %p68, %p69
      %p71 = scmp.ne.s32.totalorder %s60, %s61
      %p72 = scmp.eq.s32.totalorder %s26, 0
      %p73 = por %p71, %p72
      %p74 = scmp.ne.s32.totalorder %s60, %s61
      %p75 = scmp.eq.s32.totalorder %s27, 3
      %p76 = por %p74, %p75
      %p78 = scmp.ne.s32.totalorder %s61, %s77
      %p79 = scmp.eq.s32.totalorder %s27, 0
      %p80 = por %p78, %p79
      %s82 = sadd.s32 %s81, 1
      %p85 = scmp.eq.s32.totalorder %s21, 3
      %p86 = scmp.ne.s32.totalorder %s81, %s83
      %p87 = scmp.eq.s32.totalorder %s21, 0
      %p88 = por %p86, %p87
      %p89 = scmp.ne.s32.totalorder %s81, %s83
      %p90 = scmp.eq.s32.totalorder %s26, 3
      %p91 = por %p89, %p90
      %p92 = scmp.ne.s32.totalorder %s83, %s84
      %p93 = scmp.eq.s32.totalorder %s26, 0
      %p94 = por %p92, %p93
      %p95 = scmp.ne.s32.totalorder %s83, %s84
      %p96 = scmp.eq.s32.totalorder %s27, 3
      %p97 = por %p95, %p96
      %p99 = scmp.ne.s32.totalorder %s84, %s98
      %p100 = scmp.eq.s32.totalorder %s27, 0
      %p101 = por %p99, %p100
      %s103 = sadd.s32 %s102, 1
      %p106 = scmp.eq.s32.totalorder %s21, 3
      %p107 = scmp.ne.s32.totalorder %s102, %s104
      %p108 = scmp.eq.s32.totalorder %s21, 0
      %p109 = por %p107, %p108
      %p110 = scmp.ne.s32.totalorder %s102, %s104
      %p111 = scmp.eq.s32.totalorder %s26, 3
      %p112 = por %p110, %p111
      %p113 = scmp.ne.s32.totalorder %s104, %s105
      %p114 = scmp.eq.s32.totalorder %s26, 0
      %p115 = por %p113, %p114
      %p116 = scmp.ne.s32.totalorder %s104, %s105
      %p117 = scmp.eq.s32.totalorder %s27, 3
      %p118 = por %p116, %p117
      %p120 = scmp.ne.s32.totalorder %s105, %s119
      %p121 = scmp.eq.s32.totalorder %s27, 0
      %p122 = por %p120, %p121
      %s124 = sadd.s32 %s123, 1
      %p127 = scmp.eq.s32.totalorder %s21, 3
      %p128 = scmp.ne.s32.totalorder %s123, %s125
      %p129 = scmp.eq.s32.totalorder %s21, 0
      %p130 = por %p128, %p129
      %p131 = scmp.ne.s32.totalorder %s123, %s125
      %p132 = scmp.eq.s32.totalorder %s26, 3
      %p133 = por %p131, %p132
      %p134 = scmp.ne.s32.totalorder %s125, %s126
      %p135 = scmp.eq.s32.totalorder %s26, 0
      %p136 = por %p134, %p135
      %p137 = scmp.ne.s32.totalorder %s125, %s126
      %p138 = scmp.eq.s32.totalorder %s27, 3
      %p139 = por %p137, %p138
      %p141 = scmp.ne.s32.totalorder %s126, %s140
      %p142 = scmp.eq.s32.totalorder %s27, 0
      %p143 = por %p141, %p142
      %s145 = sadd.s32 %s144, 1
      %p148 = scmp.eq.s32.totalorder %s21, 3
      %p149 = scmp.ne.s32.totalorder %s144, %s146
      %p150 = scmp.eq.s32.totalorder %s21, 0
      %p151 = por %p149, %p150
      %p152 = scmp.ne.s32.totalorder %s144, %s146
      %p153 = scmp.eq.s32.totalorder %s26, 3
      %p154 = por %p152, %p153
      %p155 = scmp.ne.s32.totalorder %s146, %s147
      %p156 = scmp.eq.s32.totalorder %s26, 0
      %p157 = por %p155, %p156
      %p158 = scmp.ne.s32.totalorder %s146, %s147
      %p159 = scmp.eq.s32.totalorder %s27, 3
      %p160 = por %p158, %p159
      %p162 = scmp.ne.s32.totalorder %s147, %s161
      %p163 = scmp.eq.s32.totalorder %s27, 0
      %p164 = por %p162, %p163
      %s166 = sadd.s32 %s165, 1
      %p169 = scmp.eq.s32.totalorder %s21, 3
      %p170 = scmp.ne.s32.totalorder %s165, %s167
      %p171 = scmp.eq.s32.totalorder %s21, 0
      %p172 = por %p170, %p171
      %p173 = scmp.ne.s32.totalorder %s165, %s167
      %p174 = scmp.eq.s32.totalorder %s26, 3
      %p175 = por %p173, %p174
      %p176 = scmp.ne.s32.totalorder %s167, %s168
      %p177 = scmp.eq.s32.totalorder %s26, 0
      %p178 = por %p176, %p177
      %p179 = scmp.ne.s32.totalorder %s167, %s168
      %p180 = scmp.eq.s32.totalorder %s27, 3
      %p181 = por %p179, %p180
      %p183 = scmp.ne.s32.totalorder %s168, %s182
      %p184 = scmp.eq.s32.totalorder %s27, 0
      %p185 = por %p183, %p184
      %s187 = sadd.s32 %s186, 1
      %p190 = scmp.eq.s32.totalorder %s21, 3
      %p191 = scmp.ne.s32.totalorder %s186, %s188
      %p192 = scmp.eq.s32.totalorder %s21, 0
      %p193 = por %p191, %p192
      %p194 = scmp.ne.s32.totalorder %s186, %s188
      %p195 = scmp.eq.s32.totalorder %s26, 3
      %p196 = por %p194, %p195
      %p197 = scmp.ne.s32.totalorder %s188, %s189
      %p198 = scmp.eq.s32.totalorder %s26, 0
      %p199 = por %p197, %p198
      %p200 = scmp.ne.s32.totalorder %s188, %s189
      %p201 = scmp.eq.s32.totalorder %s27, 3
      %p202 = por %p200, %p201
      %p204 = scmp.ne.s32.totalorder %s189, %s203
      %p205 = scmp.eq.s32.totalorder %s27, 0
      %p206 = por %p204, %p205
      %s208 = sadd.s32 %s207, 1
      %p211 = scmp.eq.s32.totalorder %s21, 3
      %p212 = scmp.ne.s32.totalorder %s207, %s209
      %p213 = scmp.eq.s32.totalorder %s21, 0
      %p214 = por %p212, %p213
      %p215 = scmp.ne.s32.totalorder %s207, %s209
      %p216 = scmp.eq.s32.totalorder %s26, 3
      %p217 = por %p215, %p216
      %p218 = scmp.ne.s32.totalorder %s209, %s210
      %p219 = scmp.eq.s32.totalorder %s26, 0
      %p220 = por %p218, %p219
      %p221 = scmp.ne.s32.totalorder %s209, %s210
      %p222 = scmp.eq.s32.totalorder %s27, 3
      %p223 = por %p221, %p222
      %p225 = scmp.ne.s32.totalorder %s210, %s224
      %p226 = scmp.eq.s32.totalorder %s27, 0
      %p227 = por %p225, %p226
      %s229 = sadd.s32 %s228, 1
      %p232 = scmp.eq.s32.totalorder %s21, 3
      %p233 = scmp.ne.s32.totalorder %s228, %s230
      %p234 = scmp.eq.s32.totalorder %s21, 0
      %p235 = por %p233, %p234
      %p236 = scmp.ne.s32.totalorder %s228, %s230
      %p237 = scmp.eq.s32.totalorder %s26, 3
      %p238 = por %p236, %p237
      %p239 = scmp.ne.s32.totalorder %s230, %s231
      %p240 = scmp.eq.s32.totalorder %s26, 0
      %p241 = por %p239, %p240
      %p242 = scmp.ne.s32.totalorder %s230, %s231
      %p243 = scmp.eq.s32.totalorder %s27, 3
      %p244 = por %p242, %p243
      %p246 = scmp.ne.s32.totalorder %s231, %s245
      %p247 = scmp.eq.s32.totalorder %s27, 0
      %p248 = por %p246, %p247
      %s249 = ssub.s32 %s21, %s28
      %p250 = scmp.eq.s32.totalorder %s249, 0
      %s252 = sadd.s32 %s251, 1
      %s253 = scalar_select %p250, %s251, %s252
      %p256 = pneg %p250
      %p257 = scmp.eq.s32.totalorder %s21, 3
      %p258 = por %p256, %p257
      %p259 = scmp.ne.s32.totalorder %s251, %s254
      %p260 = scmp.eq.s32.totalorder %s21, 0
      %p261 = por %p259, %p260
      %p262 = scmp.ne.s32.totalorder %s251, %s254
      %p263 = scmp.eq.s32.totalorder %s26, 3
      %p264 = por %p262, %p263
      %p265 = scmp.ne.s32.totalorder %s254, %s255
      %p266 = scmp.eq.s32.totalorder %s26, 0
      %p267 = por %p265, %p266
      %p268 = scmp.ne.s32.totalorder %s254, %s255
      %p269 = scmp.eq.s32.totalorder %s27, 3
      %p270 = por %p268, %p269
      %p272 = scmp.ne.s32.totalorder %s255, %s271
      %p273 = scmp.eq.s32.totalorder %s27, 0
      %p274 = por %p272, %p273
      %p275 = scmp.le.s32.totalorder 1, %s21
      %p276 = scmp.lt.s32.totalorder %s21, 5
      %p277 = pnand %p275, %p276
      %p278 = pneg %p277
      // Predicated region
      $region9: #{tpu_custom_call.1} parent=5 // pred_check
        _
      $region10: #{tpu_custom_call.1} parent=5 // pred_check_branch
        %280 = sbr.rel (%p277) target = $region12
      $region11: #{tpu_custom_call.1} parent=5 // pred_region
        %s281 = ssub.s32 %s21, 1
        // Predicated region
        $region13: #{tpu_custom_call.1} parent=11 // pred_check
          %p282 = pneg %p94
        $region14: #{tpu_custom_call.1} parent=11 // pred_check_branch
          %284 = sbr.rel (%p282) target = $region16
        $region15: #{tpu_custom_call.1} parent=11 // pred_region
          _
        $region16: #{tpu_custom_call.1} parent=11 // pred_fallthru
          _
        // Predicated region
        $region17: #{tpu_custom_call.1} parent=11 // pred_check
          %p285 = pneg %p115
        $region18: #{tpu_custom_call.1} parent=11 // pred_check_branch
          %287 = sbr.rel (%p285) target = $region20
        $region19: #{tpu_custom_call.1} parent=11 // pred_region
          _
        $region20: #{tpu_custom_call.1} parent=11 // pred_fallthru
          _
        // Predicated region
        $region21: #{tpu_custom_call.1} parent=11 // pred_check
          %p288 = pneg %p136
        $region22: #{tpu_custom_call.1} parent=11 // pred_check_branch
          %290 = sbr.rel (%p288) target = $region24
        $region23: #{tpu_custom_call.1} parent=11 // pred_region
          _
        $region24: #{tpu_custom_call.1} parent=11 // pred_fallthru
          _
        // Predicated region
        $region25: #{tpu_custom_call.1} parent=11 // pred_check
          %p291 = pneg %p157
        $region26: #{tpu_custom_call.1} parent=11 // pred_check_branch
          %293 = sbr.rel (%p291) target = $region28
        $region27: #{tpu_custom_call.1} parent=11 // pred_region
          _
        $region28: #{tpu_custom_call.1} parent=11 // pred_fallthru
          _
        // Predicated region
        $region29: #{tpu_custom_call.1} parent=11 // pred_check
          %p294 = pneg %p178
        $region30: #{tpu_custom_call.1} parent=11 // pred_check_branch
          %296 = sbr.rel (%p294) target = $region32
        $region31: #{tpu_custom_call.1} parent=11 // pred_region
          _
        $region32: #{tpu_custom_call.1} parent=11 // pred_fallthru
          _
        // Predicated region
        $region33: #{tpu_custom_call.1} parent=11 // pred_check
          %p297 = pneg %p199
        $region34: #{tpu_custom_call.1} parent=11 // pred_check_branch
          %299 = sbr.rel (%p297) target = $region36
        $region35: #{tpu_custom_call.1} parent=11 // pred_region
          _
        $region36: #{tpu_custom_call.1} parent=11 // pred_fallthru
          _
        // Predicated region
        $region37: #{tpu_custom_call.1} parent=11 // pred_check
          %p300 = pneg %p220
        $region38: #{tpu_custom_call.1} parent=11 // pred_check_branch
          %302 = sbr.rel (%p300) target = $region40
        $region39: #{tpu_custom_call.1} parent=11 // pred_region
          _
        $region40: #{tpu_custom_call.1} parent=11 // pred_fallthru
          _
        // Predicated region
        $region41: #{tpu_custom_call.1} parent=11 // pred_check
          %p303 = pneg %p241
        $region42: #{tpu_custom_call.1} parent=11 // pred_check_branch
          %305 = sbr.rel (%p303) target = $region44
        $region43: #{tpu_custom_call.1} parent=11 // pred_region
          _
        $region44: #{tpu_custom_call.1} parent=11 // pred_fallthru
          _
      $region12: #{tpu_custom_call.1} parent=5 // pred_fallthru
        _
      %p306 = scmp.lt.s32.totalorder %s21, 4
      // Predicated region
      $region45: #{tpu_custom_call.1} parent=5 // pred_check
        %p307 = pneg %p306
      $region46: #{tpu_custom_call.1} parent=5 // pred_check_branch
        %309 = sbr.rel (%p307) target = $region48
      $region47: #{tpu_custom_call.1} parent=5 // pred_region
        // Predicated region
        $region49: #{tpu_custom_call.1} parent=47 // pred_check
          %p310 = pneg %p41
        $region50: #{tpu_custom_call.1} parent=47 // pred_check_branch
          %312 = sbr.rel (%p310) target = $region52
        $region51: #{tpu_custom_call.1} parent=47 // pred_region
          %s313 = smul.u32 4, %s21
          %p314 = scmp.lt.s32.totalorder %s313, 15
          %s315 = scalar_select %p314, %s313, 15
          %s316 = scalar_lea.vmem %s0, %s315
          %s317 = smul.u32 4, %s21
        $region52: #{tpu_custom_call.1} parent=47 // pred_fallthru
          _
        // Predicated region
        $region53: #{tpu_custom_call.1} parent=47 // pred_check
          %p318 = pneg %p67
        $region54: #{tpu_custom_call.1} parent=47 // pred_check_branch
          %320 = sbr.rel (%p318) target = $region56
        $region55: #{tpu_custom_call.1} parent=47 // pred_region
          %s321 = smul.u32 4, %s21
          %p322 = scmp.lt.s32.totalorder %s321, 15
          %s323 = scalar_select %p322, %s321, 15
          %s324 = scalar_lea.vmem %s1, %s323
          %s325 = smul.u32 4, %s21
        $region56: #{tpu_custom_call.1} parent=47 // pred_fallthru
          _
      $region48: #{tpu_custom_call.1} parent=5 // pred_fallthru
        _
      %p326 = scmp.le.s32.totalorder 1, %s21
      %p327 = scmp.lt.s32.totalorder %s21, 5
      %p328 = pnand %p326, %p327
      %p329 = pneg %p328
      // Predicated region
      $region57: #{tpu_custom_call.1} parent=5 // pred_check
        _
      $region58: #{tpu_custom_call.1} parent=5 // pred_check_branch
        %331 = sbr.rel (%p328) target = $region60
      $region59: #{tpu_custom_call.1} parent=5 // pred_region
        %s332 = ssub.s32 %s21, 1
        %s333 = smul.u32 4, %s26
        %p334 = scmp.lt.s32.totalorder %s333, 15
        %s335 = scalar_select %p334, %s333, 15
        %s336 = scalar_lea.vmem %s0, %s335
        %p337 = pneg %p47
        %p338 = pneg %p44
        %s339 = smul.u32 4, %s26
        %p340 = scmp.lt.s32.totalorder %s339, 15
        %s341 = scalar_select %p340, %s339, 15
        %s342 = scalar_lea.vmem %s1, %s341
        %p343 = pneg %p73
        %p344 = pneg %p70
        %p345 = pneg %p94
        %p346 = pneg %p91
        %p347 = pneg %p115
        %p348 = pneg %p112
        %p349 = pneg %p136
        %p350 = pneg %p133
        %p351 = pneg %p157
        %p352 = pneg %p154
        %p353 = pneg %p178
        %p354 = pneg %p175
        %p355 = pneg %p199
        %p356 = pneg %p196
        %p357 = pneg %p220
        %p358 = pneg %p217
        %p359 = pneg %p241
        %p360 = pneg %p238
        %p361 = pneg %p267
        %p362 = pneg %p264
        %s363 = sand.u32 %s254, 1
        %s364 = scalar_lea.sflag [#allocation4], %s363
        %s365 = sand.u32 %s254, 1
        %s366 = smul.addr %s365, 4
        %s367 = scalar_lea.vmem [#allocation3], %s366
        %s368 = smul.u32 4, %s26
        %p369 = scmp.lt.s32.totalorder %s368, 15
        %s370 = scalar_select %p369, %s368, 15
        %s371 = scalar_lea.vmem %s0, %s370
        %s372 = smul.u32 4, %s26
        %s373 = smul.u32 4, %s26
        %p374 = scmp.lt.s32.totalorder %s373, 15
        %s375 = scalar_select %p374, %s373, 15
        %s376 = scalar_lea.vmem %s1, %s375
        %s377 = smul.u32 4, %s26
        %s378 = smul.u32 4, %s26
        %v380 = vld [vmem:[%s2] sm:$0xff]
        %v381 = vld [vmem:[%s2 + $0x8] sm:$0xff]
        %v382 = vld [vmem:[%s2 + $0x10] sm:$0xff]
        %v383 = vld [vmem:[%s2 + $0x18] sm:$0xff]
        %v384 = vld [vmem:[%s371] sm:$0xf]
        %v385 = vlaneseq
        %v386 = vshrl.u32 %v385, 7
        %v387 = vsub.s32 0, %v386
        %v388 = vrot.slane %v384, %v387
        %v389 = vlaneseq
        %v390 = vshrl.u32 %v389, 7
        %v391 = vsub.s32 1, %v390
        %v392 = vrot.slane %v384, %v391
        %v393 = vlaneseq
        %v394 = vshrl.u32 %v393, 7
        %v395 = vsub.s32 2, %v394
        %v396 = vrot.slane %v384, %v395
        %v397 = vlaneseq
        %v398 = vshrl.u32 %v397, 7
        %v399 = vsub.s32 3, %v398
        %v400 = vrot.slane %v384, %v399
        %v401 = vld [vmem:[%s376] sm:$0xf]
        %v402 = vlaneseq
        %v403 = vshrl.u32 %v402, 7
        %v404 = vsub.s32 0, %v403
        %v405 = vrot.slane %v401, %v404
        %v406 = vlaneseq
        %v407 = vshrl.u32 %v406, 7
        %v408 = vsub.s32 1, %v407
        %v409 = vrot.slane %v401, %v408
        %v410 = vlaneseq
        %v411 = vshrl.u32 %v410, 7
        %v412 = vsub.s32 2, %v411
        %v413 = vrot.slane %v401, %v412
        %v414 = vlaneseq
        %v415 = vshrl.u32 %v414, 7
        %v416 = vsub.s32 3, %v415
        %v417 = vrot.slane %v401, %v416
        %418 = vset.pattern.permute.xlu0 %v388
        %419 = vperm.xlu0 %418, %v380
        %v420 = vpop.permute.xlu0 %419
        %421 = vset.pattern.permute.xlu0 %v392
        %422 = vperm.xlu0 %421, %v380
        %v423 = vpop.permute.xlu0 %422
        %424 = vset.pattern.permute.xlu0 %v396
        %425 = vperm.xlu0 %424, %v380
        %v426 = vpop.permute.xlu0 %425
        %427 = vset.pattern.permute.xlu0 %v400
        %428 = vperm.xlu0 %427, %v380
        %v429 = vpop.permute.xlu0 %428
        %430 = vset.pattern.permute.xlu0 %v388
        %431 = vperm.xlu0 %430, %v381
        %v432 = vpop.permute.xlu0 %431
        %433 = vset.pattern.permute.xlu0 %v392
        %434 = vperm.xlu0 %433, %v381
        %v435 = vpop.permute.xlu0 %434
        %436 = vset.pattern.permute.xlu0 %v396
        %437 = vperm.xlu0 %436, %v381
        %v438 = vpop.permute.xlu0 %437
        %439 = vset.pattern.permute.xlu0 %v400
        %440 = vperm.xlu0 %439, %v381
        %v441 = vpop.permute.xlu0 %440
        %442 = vset.pattern.permute.xlu0 %v388
        %443 = vperm.xlu0 %442, %v382
        %v444 = vpop.permute.xlu0 %443
        %445 = vset.pattern.permute.xlu0 %v392
        %446 = vperm.xlu0 %445, %v382
        %v447 = vpop.permute.xlu0 %446
        %448 = vset.pattern.permute.xlu0 %v396
        %449 = vperm.xlu0 %448, %v382
        %v450 = vpop.permute.xlu0 %449
        %451 = vset.pattern.permute.xlu0 %v400
        %452 = vperm.xlu0 %451, %v382
        %v453 = vpop.permute.xlu0 %452
        %454 = vset.pattern.permute.xlu0 %v388
        %455 = vperm.xlu0 %454, %v383
        %v456 = vpop.permute.xlu0 %455
        %457 = vset.pattern.permute.xlu0 %v392
        %458 = vperm.xlu0 %457, %v383
        %v459 = vpop.permute.xlu0 %458
        %460 = vset.pattern.permute.xlu0 %v396
        %461 = vperm.xlu0 %460, %v383
        %v462 = vpop.permute.xlu0 %461
        %463 = vset.pattern.permute.xlu0 %v400
        %464 = vperm.xlu0 %463, %v383
        %v465 = vpop.permute.xlu0 %464
        %v466 = vpack.c.bf16 %v432, %v420
        %v467 = vpack.c.bf16 %v435, %v423
        %v468 = vpack.c.bf16 %v438, %v426
        %v469 = vpack.c.bf16 %v441, %v429
        %v470 = vpack.c.bf16 %v456, %v444
        %v471 = vpack.c.bf16 %v459, %v447
        %v472 = vpack.c.bf16 %v462, %v450
        %v473 = vpack.c.bf16 %v465, %v453
        %474 = vset.pattern.permute.xlu0 %v405
        %475 = vperm.xlu0 %474, %v380
        %v476 = vpop.permute.xlu0 %475
        %477 = vset.pattern.permute.xlu0 %v409
        %478 = vperm.xlu0 %477, %v380
        %v479 = vpop.permute.xlu0 %478
        %480 = vset.pattern.permute.xlu0 %v413
        %481 = vperm.xlu0 %480, %v380
        %v482 = vpop.permute.xlu0 %481
        %483 = vset.pattern.permute.xlu0 %v417
        %484 = vperm.xlu0 %483, %v380
        %v485 = vpop.permute.xlu0 %484
        %486 = vset.pattern.permute.xlu0 %v405
        %487 = vperm.xlu0 %486, %v381
        %v488 = vpop.permute.xlu0 %487
        %489 = vset.pattern.permute.xlu0 %v409
        %490 = vperm.xlu0 %489, %v381
        %v491 = vpop.permute.xlu0 %490
        %492 = vset.pattern.permute.xlu0 %v413
        %493 = vperm.xlu0 %492, %v381
        %v494 = vpop.permute.xlu0 %493
        %495 = vset.pattern.permute.xlu0 %v417
        %496 = vperm.xlu0 %495, %v381
        %v497 = vpop.permute.xlu0 %496
        %498 = vset.pattern.permute.xlu0 %v405
        %499 = vperm.xlu0 %498, %v382
        %v500 = vpop.permute.xlu0 %499
        %501 = vset.pattern.permute.xlu0 %v409
        %502 = vperm.xlu0 %501, %v382
        %v503 = vpop.permute.xlu0 %502
        %504 = vset.pattern.permute.xlu0 %v413
        %505 = vperm.xlu0 %504, %v382
        %v506 = vpop.permute.xlu0 %505
        %507 = vset.pattern.permute.xlu0 %v417
        %508 = vperm.xlu0 %507, %v382
        %v509 = vpop.permute.xlu0 %508
        %510 = vset.pattern.permute.xlu0 %v405
        %511 = vperm.xlu0 %510, %v383
        %v512 = vpop.permute.xlu0 %511
        %513 = vset.pattern.permute.xlu0 %v409
        %514 = vperm.xlu0 %513, %v383
        %v515 = vpop.permute.xlu0 %514
        %516 = vset.pattern.permute.xlu0 %v413
        %517 = vperm.xlu0 %516, %v383
        %v518 = vpop.permute.xlu0 %517
        %519 = vset.pattern.permute.xlu0 %v417
        %520 = vperm.xlu0 %519, %v383
        %v521 = vpop.permute.xlu0 %520
        %v522 = vpack.c.bf16 %v488, %v476
        %v523 = vpack.c.bf16 %v491, %v479
        %v524 = vpack.c.bf16 %v494, %v482
        %v525 = vpack.c.bf16 %v497, %v485
        %v526 = vpack.c.bf16 %v512, %v500
        %v527 = vpack.c.bf16 %v515, %v503
        %v528 = vpack.c.bf16 %v518, %v506
        %v529 = vpack.c.bf16 %v521, %v509
        %v530 = vld [vmem:[%s3] sm:$0xf]
        %v531 = vld [vmem:[%s3 + $0x4] sm:$0xf]
        %v532 = vld [vmem:[%s3 + $0x8] sm:$0xf]
        %v533 = vld [vmem:[%s3 + $0xc] sm:$0xf]
        %v534 = vld [vmem:[%s4] sm:$0xf]
        %v535 = vld [vmem:[%s4 + $0x4] sm:$0xf]
        %v536 = vld [vmem:[%s4 + $0x8] sm:$0xf]
        %v537 = vld [vmem:[%s4 + $0xc] sm:$0xf]
        %v542 = vunpack.c.l.b16 %v534
        %v543 = vunpack.c.l.b16 %v535
        %v544 = vunpack.c.l.b16 %v536
        %v545 = vunpack.c.l.b16 %v537
        %v546 = vpack.c.b16 %v543, %v542
        %v547 = vpack.c.b16 %v545, %v544
        %vm548 = vcmask 261120
        %v550 = vsel %vm548, %v546, 0
        %v553 = vsel %vm548, %v547, 0
        %555 = vmatprep.subr.bf16.mxu0 %v523
        %556 = vmatpush1.bf16.msra.mxu0 %v522
        %557 = vmatprep.subr.bf16.mxu0 %v527
        %558 = vmatpush1.bf16.msra.mxu0 %v526
        %559 = vmatprep.subr.bf16.mxu0 0
        %560 = vmatpush1.bf16.msra.mxu0 0
        %561 = vmatprep.subr.bf16.mxu0 0
        %562 = vmatpush1.bf16.msra.mxu0 0
        %563 = vmatprep.subr.bf16.mxu0 0
        %564 = vmatpush1.bf16.msra.mxu0 0
        %565 = vmatprep.subr.bf16.mxu0 0
        %566 = vmatpush1.bf16.msra.mxu0 0
        %567 = vmatprep.subr.bf16.mxu0 0
        %568 = vmatpush1.bf16.msra.mxu0 0
        %569 = vmatprep.subr.bf16.mxu0 0
        %570 = vmatpush1.bf16.msra.mxu0 0
        %571 = vmatprep.subr.bf16.mxu0 0
        %572 = vmatpush1.bf16.msra.mxu0 0
        %573 = vmatprep.subr.bf16.mxu0 0
        %574 = vmatpush1.bf16.msra.mxu0 0
        %575 = vmatprep.subr.bf16.mxu0 0
        %576 = vmatpush1.bf16.msra.mxu0 0
        %577 = vmatprep.subr.bf16.mxu0 0
        %578 = vmatpush1.bf16.msra.mxu0 0
        %579 = vmatprep.subr.bf16.mxu0 0
        %580 = vmatpush1.bf16.msra.mxu0 0
        %581 = vmatprep.subr.bf16.mxu0 0
        %582 = vmatpush1.bf16.msra.mxu0 0
        %583 = vmatprep.subr.bf16.mxu0 0
        %584 = vmatpush1.bf16.msra.mxu0 0
        %585 = vmatprep.subr.bf16.mxu0 0
        %586 = vmatpush1.bf16.msra.mxu0 0
        %587 = vmatprep.mubr.bf16.mxu0 0
        %588 = vmatmul.mubr.bf16.gmra.mrb[0].mxu0 %v550
        %v589 = vpop.f32.mrb[0].mxu0
        %v590 = vadd.f32 0.0, %v589
        %v591 = vpop.f32.mrb[0].mxu0
        %v592 = vadd.f32 0.0, %v591
        %v593 = vpop.f32.mrb[0].mxu0
        %v594 = vadd.f32 0.0, %v593
        %v595 = vpop.f32.mrb[0].mxu0
        %v596 = vadd.f32 0.0, %v595
        %597 = vmatprep.mubr.bf16.mxu0 0
        %598 = vmatmul.mubr.bf16.gmra.mrb[0].mxu0 %v553
        %v599 = vpop.f32.mrb[0].mxu0
        %v600 = vadd.f32 0.0, %v599
        %v601 = vpop.f32.mrb[0].mxu0
        %v602 = vadd.f32 0.0, %v601
        %v603 = vpop.f32.mrb[0].mxu0
        %v604 = vadd.f32 0.0, %v603
        %v605 = vpop.f32.mrb[0].mxu0
        %v606 = vadd.f32 0.0, %v605
        %607 = vdwg.mxu0
        %608 = vmatprep.subr.bf16.mxu0 %v525
        %609 = vmatpush1.bf16.msra.mxu0 %v524
        %610 = vmatprep.subr.bf16.mxu0 %v529
        %611 = vmatpush1.bf16.msra.mxu0 %v528
        %612 = vmatprep.subr.bf16.mxu0 0
        %613 = vmatpush1.bf16.msra.mxu0 0
        %614 = vmatprep.subr.bf16.mxu0 0
        %615 = vmatpush1.bf16.msra.mxu0 0
        %616 = vmatprep.subr.bf16.mxu0 0
        %617 = vmatpush1.bf16.msra.mxu0 0
        %618 = vmatprep.subr.bf16.mxu0 0
        %619 = vmatpush1.bf16.msra.mxu0 0
        %620 = vmatprep.subr.bf16.mxu0 0
        %621 = vmatpush1.bf16.msra.mxu0 0
        %622 = vmatprep.subr.bf16.mxu0 0
        %623 = vmatpush1.bf16.msra.mxu0 0
        %624 = vmatprep.subr.bf16.mxu0 0
        %625 = vmatpush1.bf16.msra.mxu0 0
        %626 = vmatprep.subr.bf16.mxu0 0
        %627 = vmatpush1.bf16.msra.mxu0 0
        %628 = vmatprep.subr.bf16.mxu0 0
        %629 = vmatpush1.bf16.msra.mxu0 0
        %630 = vmatprep.subr.bf16.mxu0 0
        %631 = vmatpush1.bf16.msra.mxu0 0
        %632 = vmatprep.subr.bf16.mxu0 0
        %633 = vmatpush1.bf16.msra.mxu0 0
        %634 = vmatprep.subr.bf16.mxu0 0
        %635 = vmatpush1.bf16.msra.mxu0 0
        %636 = vmatprep.subr.bf16.mxu0 0
        %637 = vmatpush1.bf16.msra.mxu0 0
        %638 = vmatprep.subr.bf16.mxu0 0
        %639 = vmatpush1.bf16.msra.mxu0 0
        %640 = vmatprep.mubr.bf16.mxu0 0
        %641 = vmatmul.mubr.bf16.gmra.mrb[0].mxu0 %v550
        %v642 = vpop.f32.mrb[0].mxu0
        %v643 = vadd.f32 0.0, %v642
        %v644 = vpop.f32.mrb[0].mxu0
        %v645 = vadd.f32 0.0, %v644
        %v646 = vpop.f32.mrb[0].mxu0
        %v647 = vadd.f32 0.0, %v646
        %v648 = vpop.f32.mrb[0].mxu0
        %v649 = vadd.f32 0.0, %v648
        %650 = vmatprep.mubr.bf16.mxu0 0
        %651 = vmatmul.mubr.bf16.gmra.mrb[0].mxu0 %v553
        %v652 = vpop.f32.mrb[0].mxu0
        %v653 = vadd.f32 0.0, %v652
        %v654 = vpop.f32.mrb[0].mxu0
        %v655 = vadd.f32 0.0, %v654
        %v656 = vpop.f32.mrb[0].mxu0
        %v657 = vadd.f32 0.0, %v656
        %v658 = vpop.f32.mrb[0].mxu0
        %v659 = vadd.f32 0.0, %v658
        %660 = vdwg.mxu0
        %v665 = vunpack.c.l.b16 %v530
        %v666 = vunpack.c.l.b16 %v531
        %v667 = vunpack.c.l.b16 %v532
        %v668 = vunpack.c.l.b16 %v533
        %v669 = vpack.c.b16 %v666, %v665
        %v670 = vpack.c.b16 %v668, %v667
        %v672 = vsel %vm548, %v669, 0
        %v675 = vsel %vm548, %v670, 0
        %677 = vmatprep.subr.bf16.mxu0 %v467
        %678 = vmatpush1.bf16.msra.mxu0 %v466
        %679 = vmatprep.subr.bf16.mxu0 %v471
        %680 = vmatpush1.bf16.msra.mxu0 %v470
        %681 = vmatprep.subr.bf16.mxu0 0
        %682 = vmatpush1.bf16.msra.mxu0 0
        %683 = vmatprep.subr.bf16.mxu0 0
        %684 = vmatpush1.bf16.msra.mxu0 0
        %685 = vmatprep.subr.bf16.mxu0 0
        %686 = vmatpush1.bf16.msra.mxu0 0
        %687 = vmatprep.subr.bf16.mxu0 0
        %688 = vmatpush1.bf16.msra.mxu0 0
        %689 = vmatprep.subr.bf16.mxu0 0
        %690 = vmatpush1.bf16.msra.mxu0 0
        %691 = vmatprep.subr.bf16.mxu0 0
        %692 = vmatpush1.bf16.msra.mxu0 0
        %693 = vmatprep.subr.bf16.mxu0 0
        %694 = vmatpush1.bf16.msra.mxu0 0
        %695 = vmatprep.subr.bf16.mxu0 0
        %696 = vmatpush1.bf16.msra.mxu0 0
        %697 = vmatprep.subr.bf16.mxu0 0
        %698 = vmatpush1.bf16.msra.mxu0 0
        %699 = vmatprep.subr.bf16.mxu0 0
        %700 = vmatpush1.bf16.msra.mxu0 0
        %701 = vmatprep.subr.bf16.mxu0 0
        %702 = vmatpush1.bf16.msra.mxu0 0
        %703 = vmatprep.subr.bf16.mxu0 0
        %704 = vmatpush1.bf16.msra.mxu0 0
        %705 = vmatprep.subr.bf16.mxu0 0
        %706 = vmatpush1.bf16.msra.mxu0 0
        %707 = vmatprep.subr.bf16.mxu0 0
        %708 = vmatpush1.bf16.msra.mxu0 0
        %709 = vmatprep.mubr.bf16.mxu0 0
        %710 = vmatmul.mubr.bf16.gmra.mrb[0].mxu0 %v672
        %v711 = vpop.f32.mrb[0].mxu0
        %v712 = vadd.f32 %v590, %v711
        %v713 = vpop.f32.mrb[0].mxu0
        %v714 = vadd.f32 %v592, %v713
        %v715 = vpop.f32.mrb[0].mxu0
        %v716 = vadd.f32 %v594, %v715
        %v717 = vpop.f32.mrb[0].mxu0
        %v718 = vadd.f32 %v596, %v717
        %719 = vmatprep.mubr.bf16.mxu0 0
        %720 = vmatmul.mubr.bf16.gmra.mrb[0].mxu0 %v675
        %v721 = vpop.f32.mrb[0].mxu0
        %v722 = vadd.f32 %v600, %v721
        %v723 = vpop.f32.mrb[0].mxu0
        %v724 = vadd.f32 %v602, %v723
        %v725 = vpop.f32.mrb[0].mxu0
        %v726 = vadd.f32 %v604, %v725
        %v727 = vpop.f32.mrb[0].mxu0
        %v728 = vadd.f32 %v606, %v727
        %729 = vdwg.mxu0
        %730 = vmatprep.subr.bf16.mxu0 %v469
        %731 = vmatpush1.bf16.msra.mxu0 %v468
        %732 = vmatprep.subr.bf16.mxu0 %v473
        %733 = vmatpush1.bf16.msra.mxu0 %v472
        %734 = vmatprep.subr.bf16.mxu0 0
        %735 = vmatpush1.bf16.msra.mxu0 0
        %736 = vmatprep.subr.bf16.mxu0 0
        %737 = vmatpush1.bf16.msra.mxu0 0
        %738 = vmatprep.subr.bf16.mxu0 0
        %739 = vmatpush1.bf16.msra.mxu0 0
        %740 = vmatprep.subr.bf16.mxu0 0
        %741 = vmatpush1.bf16.msra.mxu0 0
        %742 = vmatprep.subr.bf16.mxu0 0
        %743 = vmatpush1.bf16.msra.mxu0 0
        %744 = vmatprep.subr.bf16.mxu0 0
        %745 = vmatpush1.bf16.msra.mxu0 0
        %746 = vmatprep.subr.bf16.mxu0 0
        %747 = vmatpush1.bf16.msra.mxu0 0
        %748 = vmatprep.subr.bf16.mxu0 0
        %749 = vmatpush1.bf16.msra.mxu0 0
        %750 = vmatprep.subr.bf16.mxu0 0
        %751 = vmatpush1.bf16.msra.mxu0 0
        %752 = vmatprep.subr.bf16.mxu0 0
        %753 = vmatpush1.bf16.msra.mxu0 0
        %754 = vmatprep.subr.bf16.mxu0 0
        %755 = vmatpush1.bf16.msra.mxu0 0
        %756 = vmatprep.subr.bf16.mxu0 0
        %757 = vmatpush1.bf16.msra.mxu0 0
        %758 = vmatprep.subr.bf16.mxu0 0
        %759 = vmatpush1.bf16.msra.mxu0 0
        %760 = vmatprep.subr.bf16.mxu0 0
        %761 = vmatpush1.bf16.msra.mxu0 0
        %762 = vmatprep.mubr.bf16.mxu0 0
        %763 = vmatmul.mubr.bf16.gmra.mrb[0].mxu0 %v672
        %v764 = vpop.f32.mrb[0].mxu0
        %v765 = vadd.f32 %v643, %v764
        %v766 = vpop.f32.mrb[0].mxu0
        %v767 = vadd.f32 %v645, %v766
        %v768 = vpop.f32.mrb[0].mxu0
        %v769 = vadd.f32 %v647, %v768
        %v770 = vpop.f32.mrb[0].mxu0
        %v771 = vadd.f32 %v649, %v770
        %772 = vmatprep.mubr.bf16.mxu0 0
        %773 = vmatmul.mubr.bf16.gmra.mrb[0].mxu0 %v675
        %v774 = vpop.f32.mrb[0].mxu0
        %v775 = vadd.f32 %v653, %v774
        %v776 = vpop.f32.mrb[0].mxu0
        %v777 = vadd.f32 %v655, %v776
        %v778 = vpop.f32.mrb[0].mxu0
        %v779 = vadd.f32 %v657, %v778
        %v780 = vpop.f32.mrb[0].mxu0
        %v781 = vadd.f32 %v659, %v780
        %782 = vdwg.mxu0
        %v783 = vld [vmem:[%s5] sm:$0xff]
        %v784 = vld [vmem:[%s5 + $0x8] sm:$0xff]
        %v785 = vld [vmem:[%s5 + $0x10] sm:$0xff]
        %v786 = vld [vmem:[%s5 + $0x18] sm:$0xff]
        %788 = vset.pattern.permute.xlu0 0
        %789 = vperm.xlu0 %788, %v783
        %v790 = vpop.permute.xlu0 %789
        %793 = vset.pattern.permute.xlu0 0
        %794 = vperm.xlu0 %793, %v784
        %v795 = vpop.permute.xlu0 %794
        %798 = vset.pattern.permute.xlu0 0
        %799 = vperm.xlu0 %798, %v785
        %v800 = vpop.permute.xlu0 %799
        %803 = vset.pattern.permute.xlu0 0
        %804 = vperm.xlu0 %803, %v786
        %v805 = vpop.permute.xlu0 %804
        %v807 = vadd.f32 %v712, %v790
        %v808 = vadd.f32 %v714, %v790
        %v809 = vadd.f32 %v765, %v790
        %v810 = vadd.f32 %v767, %v790
        %v811 = vadd.f32 %v716, %v795
        %v812 = vadd.f32 %v718, %v795
        %v813 = vadd.f32 %v769, %v795
        %v814 = vadd.f32 %v771, %v795
        %v815 = vadd.f32 %v722, %v800
        %v816 = vadd.f32 %v724, %v800
        %v817 = vadd.f32 %v775, %v800
        %v818 = vadd.f32 %v777, %v800
        %v819 = vadd.f32 %v726, %v805
        %v820 = vadd.f32 %v728, %v805
        %v821 = vadd.f32 %v779, %v805
        %v822 = vadd.f32 %v781, %v805
        %v823 = vmax.f32 %v807, 0.0
        %v824 = vmax.f32 %v808, 0.0
        %v825 = vmax.f32 %v809, 0.0
        %v826 = vmax.f32 %v810, 0.0
        %v827 = vmax.f32 %v811, 0.0
        %v828 = vmax.f32 %v812, 0.0
        %v829 = vmax.f32 %v813, 0.0
        %v830 = vmax.f32 %v814, 0.0
        %v831 = vmax.f32 %v815, 0.0
        %v832 = vmax.f32 %v816, 0.0
        %v833 = vmax.f32 %v817, 0.0
        %v834 = vmax.f32 %v818, 0.0
        %v835 = vmax.f32 %v819, 0.0
        %v836 = vmax.f32 %v820, 0.0
        %v837 = vmax.f32 %v821, 0.0
        %v838 = vmax.f32 %v822, 0.0
        %v839 = vld [vmem:[%s6] sm:$0xf]
        %v840 = vld [vmem:[%s6 + $0x4] sm:$0xf]
        %v841 = vld [vmem:[%s6 + $0x8] sm:$0xf]
        %v842 = vld [vmem:[%s6 + $0xc] sm:$0xf]
        %v843 = vpack.c.bf16 %v827, %v823
        %v844 = vpack.c.bf16 %v828, %v824
        %v845 = vpack.c.bf16 %v829, %v825
        %v846 = vpack.c.bf16 %v830, %v826
        %v847 = vpack.c.bf16 %v835, %v831
        %v848 = vpack.c.bf16 %v836, %v832
        %v849 = vpack.c.bf16 %v837, %v833
        %v850 = vpack.c.bf16 %v838, %v834
        %v851 = vld [vmem:[%s7] sm:$0xff]
        %v852 = vld [vmem:[%s7 + $0x8] sm:$0xff]
        %v853 = vld [vmem:[%s7 + $0x10] sm:$0xff]
        %v854 = vld [vmem:[%s7 + $0x18] sm:$0xff]
        %856 = vset.pattern.permute.xlu0 0
        %857 = vperm.xlu0 %856, %v851
        %v858 = vpop.permute.xlu0 %857
        %861 = vset.pattern.permute.xlu0 0
        %862 = vperm.xlu0 %861, %v852
        %v863 = vpop.permute.xlu0 %862
        %866 = vset.pattern.permute.xlu0 0
        %867 = vperm.xlu0 %866, %v853
        %v868 = vpop.permute.xlu0 %867
        %871 = vset.pattern.permute.xlu0 0
        %872 = vperm.xlu0 %871, %v854
        %v873 = vpop.permute.xlu0 %872
        %v879 = vunpack.c.l.b16 %v839
        %v880 = vunpack.c.l.b16 %v840
        %v881 = vunpack.c.l.b16 %v841
        %v882 = vunpack.c.l.b16 %v842
        %v883 = vpack.c.b16 %v880, %v879
        %v884 = vpack.c.b16 %v882, %v881
        %v886 = vsel %vm548, %v883, 0
        %v889 = vsel %vm548, %v884, 0
        %891 = vmatprep.subr.bf16.mxu0 %v844
        %892 = vmatpush1.bf16.msra.mxu0 %v843
        %893 = vmatprep.subr.bf16.mxu0 %v848
        %894 = vmatpush1.bf16.msra.mxu0 %v847
        %895 = vmatprep.subr.bf16.mxu0 0
        %896 = vmatpush1.bf16.msra.mxu0 0
        %897 = vmatprep.subr.bf16.mxu0 0
        %898 = vmatpush1.bf16.msra.mxu0 0
        %899 = vmatprep.subr.bf16.mxu0 0
        %900 = vmatpush1.bf16.msra.mxu0 0
        %901 = vmatprep.subr.bf16.mxu0 0
        %902 = vmatpush1.bf16.msra.mxu0 0
        %903 = vmatprep.subr.bf16.mxu0 0
        %904 = vmatpush1.bf16.msra.mxu0 0
        %905 = vmatprep.subr.bf16.mxu0 0
        %906 = vmatpush1.bf16.msra.mxu0 0
        %907 = vmatprep.subr.bf16.mxu0 0
        %908 = vmatpush1.bf16.msra.mxu0 0
        %909 = vmatprep.subr.bf16.mxu0 0
        %910 = vmatpush1.bf16.msra.mxu0 0
        %911 = vmatprep.subr.bf16.mxu0 0
        %912 = vmatpush1.bf16.msra.mxu0 0
        %913 = vmatprep.subr.bf16.mxu0 0
        %914 = vmatpush1.bf16.msra.mxu0 0
        %915 = vmatprep.subr.bf16.mxu0 0
        %916 = vmatpush1.bf16.msra.mxu0 0
        %917 = vmatprep.subr.bf16.mxu0 0
        %918 = vmatpush1.bf16.msra.mxu0 0
        %919 = vmatprep.subr.bf16.mxu0 0
        %920 = vmatpush1.bf16.msra.mxu0 0
        %921 = vmatprep.subr.bf16.mxu0 0
        %922 = vmatpush1.bf16.msra.mxu0 0
        %923 = vmatprep.mubr.bf16.mxu0 0
        %924 = vmatmul.mubr.bf16.gmra.mrb[0].mxu0 %v886
        %v925 = vpop.f32.mrb[0].mxu0
        %v926 = vadd.f32 %v858, %v925
        %v927 = vpop.f32.mrb[0].mxu0
        %v928 = vadd.f32 %v858, %v927
        %v929 = vpop.f32.mrb[0].mxu0
        %v930 = vadd.f32 %v863, %v929
        %v931 = vpop.f32.mrb[0].mxu0
        %v932 = vadd.f32 %v863, %v931
        %933 = vmatprep.mubr.bf16.mxu0 0
        %934 = vmatmul.mubr.bf16.gmra.mrb[0].mxu0 %v889
        %v935 = vpop.f32.mrb[0].mxu0
        %v936 = vadd.f32 %v868, %v935
        %v937 = vpop.f32.mrb[0].mxu0
        %v938 = vadd.f32 %v868, %v937
        %v939 = vpop.f32.mrb[0].mxu0
        %v940 = vadd.f32 %v873, %v939
        %v941 = vpop.f32.mrb[0].mxu0
        %v942 = vadd.f32 %v873, %v941
        %943 = vdwg.mxu0
        %944 = vmatprep.subr.bf16.mxu0 %v846
        %945 = vmatpush1.bf16.msra.mxu0 %v845
        %946 = vmatprep.subr.bf16.mxu0 %v850
        %947 = vmatpush1.bf16.msra.mxu0 %v849
        %948 = vmatprep.subr.bf16.mxu0 0
        %949 = vmatpush1.bf16.msra.mxu0 0
        %950 = vmatprep.subr.bf16.mxu0 0
        %951 = vmatpush1.bf16.msra.mxu0 0
        %952 = vmatprep.subr.bf16.mxu0 0
        %953 = vmatpush1.bf16.msra.mxu0 0
        %954 = vmatprep.subr.bf16.mxu0 0
        %955 = vmatpush1.bf16.msra.mxu0 0
        %956 = vmatprep.subr.bf16.mxu0 0
        %957 = vmatpush1.bf16.msra.mxu0 0
        %958 = vmatprep.subr.bf16.mxu0 0
        %959 = vmatpush1.bf16.msra.mxu0 0
        %960 = vmatprep.subr.bf16.mxu0 0
        %961 = vmatpush1.bf16.msra.mxu0 0
        %962 = vmatprep.subr.bf16.mxu0 0
        %963 = vmatpush1.bf16.msra.mxu0 0
        %964 = vmatprep.subr.bf16.mxu0 0
        %965 = vmatpush1.bf16.msra.mxu0 0
        %966 = vmatprep.subr.bf16.mxu0 0
        %967 = vmatpush1.bf16.msra.mxu0 0
        %968 = vmatprep.subr.bf16.mxu0 0
        %969 = vmatpush1.bf16.msra.mxu0 0
        %970 = vmatprep.subr.bf16.mxu0 0
        %971 = vmatpush1.bf16.msra.mxu0 0
        %972 = vmatprep.subr.bf16.mxu0 0
        %973 = vmatpush1.bf16.msra.mxu0 0
        %974 = vmatprep.subr.bf16.mxu0 0
        %975 = vmatpush1.bf16.msra.mxu0 0
        %976 = vmatprep.mubr.bf16.mxu0 0
        %977 = vmatmul.mubr.bf16.gmra.mrb[0].mxu0 %v886
        %v978 = vpop.f32.mrb[0].mxu0
        %v979 = vadd.f32 %v858, %v978
        %v980 = vpop.f32.mrb[0].mxu0
        %v981 = vadd.f32 %v858, %v980
        %v982 = vpop.f32.mrb[0].mxu0
        %v983 = vadd.f32 %v863, %v982
        %v984 = vpop.f32.mrb[0].mxu0
        %v985 = vadd.f32 %v863, %v984
        %986 = vmatprep.mubr.bf16.mxu0 0
        %987 = vmatmul.mubr.bf16.gmra.mrb[0].mxu0 %v889
        %v988 = vpop.f32.mrb[0].mxu0
        %v989 = vadd.f32 %v868, %v988
        %v990 = vpop.f32.mrb[0].mxu0
        %v991 = vadd.f32 %v868, %v990
        %v992 = vpop.f32.mrb[0].mxu0
        %v993 = vadd.f32 %v873, %v992
        %v994 = vpop.f32.mrb[0].mxu0
        %v995 = vadd.f32 %v873, %v994
        %996 = vdwg.mxu0
        %v997 = vmax.f32 %v926, 0.0
        %v998 = vmax.f32 %v928, 0.0
        %v999 = vmax.f32 %v979, 0.0
        %v1000 = vmax.f32 %v981, 0.0
        %v1001 = vmax.f32 %v930, 0.0
        %v1002 = vmax.f32 %v932, 0.0
        %v1003 = vmax.f32 %v983, 0.0
        %v1004 = vmax.f32 %v985, 0.0
        %v1005 = vmax.f32 %v936, 0.0
        %v1006 = vmax.f32 %v938, 0.0
        %v1007 = vmax.f32 %v989, 0.0
        %v1008 = vmax.f32 %v991, 0.0
        %v1009 = vmax.f32 %v940, 0.0
        %v1010 = vmax.f32 %v942, 0.0
        %v1011 = vmax.f32 %v993, 0.0
        %v1012 = vmax.f32 %v995, 0.0
        %v1013 = vld [vmem:[%s8] sm:$0xff]
        %v1014 = vld [vmem:[%s8 + $0x8] sm:$0xff]
        %v1015 = vld [vmem:[%s8 + $0x10] sm:$0xff]
        %v1016 = vld [vmem:[%s8 + $0x18] sm:$0xff]
        %1018 = vset.pattern.permute.xlu0 0
        %1019 = vperm.xlu0 %1018, %v1013
        %v1020 = vpop.permute.xlu0 %1019
        %1023 = vset.pattern.permute.xlu0 0
        %1024 = vperm.xlu0 %1023, %v1014
        %v1025 = vpop.permute.xlu0 %1024
        %1028 = vset.pattern.permute.xlu0 0
        %1029 = vperm.xlu0 %1028, %v1015
        %v1030 = vpop.permute.xlu0 %1029
        %1033 = vset.pattern.permute.xlu0 0
        %1034 = vperm.xlu0 %1033, %v1016
        %v1035 = vpop.permute.xlu0 %1034
        %v1037 = vmul.f32 %v997, %v1020
        %v1038 = vmul.f32 %v998, %v1020
        %v1039 = vmul.f32 %v999, %v1020
        %v1040 = vmul.f32 %v1000, %v1020
        %v1041 = vmul.f32 %v1001, %v1025
        %v1042 = vmul.f32 %v1002, %v1025
        %v1043 = vmul.f32 %v1003, %v1025
        %v1044 = vmul.f32 %v1004, %v1025
        %v1045 = vmul.f32 %v1005, %v1030
        %v1046 = vmul.f32 %v1006, %v1030
        %v1047 = vmul.f32 %v1007, %v1030
        %v1048 = vmul.f32 %v1008, %v1030
        %v1049 = vmul.f32 %v1009, %v1035
        %v1050 = vmul.f32 %v1010, %v1035
        %v1051 = vmul.f32 %v1011, %v1035
        %v1052 = vmul.f32 %v1012, %v1035
        %v1053 = vadd.f32 %v1037, %v1041
        %v1054 = vadd.f32 %v1053, %v1045
        %v1055 = vadd.f32 %v1054, %v1049
        %v1056 = vrot.slane %v1055, 4
        %v1057 = vadd.f32 %v1055, %v1056
        %v1058 = vrot.slane %v1057, 2
        %v1059 = vadd.f32 %v1057, %v1058
        %v1060 = vrot.slane %v1059, 1
        %v1061 = vadd.f32 %v1059, %v1060
        %v1062 = vadd.f32 %v1038, %v1042
        %v1063 = vadd.f32 %v1062, %v1046
        %v1064 = vadd.f32 %v1063, %v1050
        %v1065 = vrot.slane %v1064, 4
        %v1066 = vadd.f32 %v1064, %v1065
        %v1067 = vrot.slane %v1066, 2
        %v1068 = vadd.f32 %v1066, %v1067
        %v1069 = vrot.slane %v1068, 1
        %v1070 = vadd.f32 %v1068, %v1069
        %v1071 = vadd.f32 %v1039, %v1043
        %v1072 = vadd.f32 %v1071, %v1047
        %v1073 = vadd.f32 %v1072, %v1051
        %v1074 = vrot.slane %v1073, 4
        %v1075 = vadd.f32 %v1073, %v1074
        %v1076 = vrot.slane %v1075, 2
        %v1077 = vadd.f32 %v1075, %v1076
        %v1078 = vrot.slane %v1077, 1
        %v1079 = vadd.f32 %v1077, %v1078
        %v1080 = vadd.f32 %v1040, %v1044
        %v1081 = vadd.f32 %v1080, %v1048
        %v1082 = vadd.f32 %v1081, %v1052
        %v1083 = vrot.slane %v1082, 4
        %v1084 = vadd.f32 %v1082, %v1083
        %v1085 = vrot.slane %v1084, 2
        %v1086 = vadd.f32 %v1084, %v1085
        %v1087 = vrot.slane %v1086, 1
        %v1088 = vadd.f32 %v1086, %v1087
        %v1089 = vld [vmem:[#allocation2] sm:$0x1]
        %1091 = vset.pattern.permute.xlu0 0
        %1092 = vperm.xlu0 %1091, %v1089
        %v1093 = vpop.permute.xlu0 %1092
        %v1095 = vlaneseq
        %v1096 = vshrl.u32 %v1095, 7
        %v1097 = vsub.s32 0, %v1096
        %v1098 = vrot.slane %v1093, %v1097
        %v1099 = vadd.f32 %v1061, %v1098
        %v1100 = vadd.f32 %v1070, %v1098
        %v1101 = vadd.f32 %v1079, %v1098
        %v1102 = vadd.f32 %v1088, %v1098
        %v1107 = vcombine.low %v1099, %v1100
        %v1108 = vcombine.low %v1101, %v1102
        %v1110 = vunpack.c.l.s4 1966171168
        %v1111 = vunpack.c.0.s8 %v1110
        %v1112 = vlaneseq
        %v1113 = vshrl.u32 %v1112, 7
        %v1114 = vsub.s32 %v1111, %v1113
        %v1115 = vrot.slane %v1107, %v1114
        %v1117 = vunpack.c.l.s4 1966171168
        %v1118 = vunpack.c.0.s8 %v1117
        %v1119 = vlaneseq
        %v1120 = vshrl.u32 %v1119, 7
        %v1121 = vsub.s32 %v1118, %v1120
        %v1122 = vrot.slane %v1108, %v1121
        %v1123 = vcombine.low %v1115, %v1122
        %v1125 = vunpack.c.l.s4 1966171168
        %v1126 = vunpack.c.0.s8 %v1125
        %v1127 = vlaneseq
        %v1128 = vshrl.u32 %v1127, 7
        %v1129 = vsub.s32 %v1126, %v1128
        %v1130 = vrot.slane %v1123, %v1129
        %v1132 = vlaneseq
        %vm1133 = vcmp.ge.s32.totalorder %v1132, 0
        %vm1134 = vcmp.lt.s32.totalorder %v1132, 512
        %vm1135 = vmand %vm1133, %vm1134
        %1136 = vst.msk [vmem:[%s367] sm:$0xf] %vm1135, %v1130
        %s1137 = sand.u32 %s254, 1
        %s1138 = scalar_lea.sflag [#allocation4], %s1137
        %s1139 = sand.u32 %s254, 1
        %s1140 = smul.addr %s1139, 4
        %s1141 = scalar_lea.vmem [#allocation3], %s1140
        // Predicated region
        $region61: #{tpu_custom_call.1} parent=59 // pred_check
          %p1142 = pneg %p264
        $region62: #{tpu_custom_call.1} parent=59 // pred_check_branch
          %1144 = sbr.rel (%p1142) target = $region64
        $region63: #{tpu_custom_call.1} parent=59 // pred_region
          %s1145 = smul.u32 4, %s26
          %s1147 = ssub.s32 64, 64
          %1148 = vsyncadd %s1138, %s1147
          %s1149 = smul.addr %s1145, 16
          %s1150 = scalar_lea.hbm %s10, %s1149
          %s1152 = sshll.u32 %s1141, 4
          %s1153 = int_to_ptr.vmem [resolvable:$true] %s1152
          %1155 = dma.vmem_to_hbm [thread:$0]  %s1153, 64, %s1150, %s1138
        $region64: #{tpu_custom_call.1} parent=59 // pred_fallthru
          _
      $region60: #{tpu_custom_call.1} parent=5 // pred_fallthru
        _
      %p1156 = scmp.le.s32.totalorder 2, %s21
      // Predicated region
      $region65: #{tpu_custom_call.1} parent=5 // pred_check
        %p1157 = pneg %p1156
      $region66: #{tpu_custom_call.1} parent=5 // pred_check_branch
        %1159 = sbr.rel (%p1157) target = $region68
      $region67: #{tpu_custom_call.1} parent=5 // pred_region
        %s1160 = ssub.s32 %s21, 2
        // Predicated region
        $region69: #{tpu_custom_call.1} parent=67 // pred_check
          %p1161 = pneg %p270
        $region70: #{tpu_custom_call.1} parent=67 // pred_check_branch
          %1163 = sbr.rel (%p1161) target = $region72
        $region71: #{tpu_custom_call.1} parent=67 // pred_region
          %s1164 = sand.u32 %s255, 1
          %s1165 = scalar_lea.sflag [#allocation4], %s1164
          %s1166 = sand.u32 %s255, 1
          %s1167 = smul.addr %s1166, 4
          %s1168 = scalar_lea.vmem [#allocation3], %s1167
          %1169 = dma.done %s1165, 64
        $region72: #{tpu_custom_call.1} parent=67 // pred_fallthru
          _
      $region68: #{tpu_custom_call.1} parent=5 // pred_fallthru
        _
    $region6: #{tpu_custom_call.1} parent=1 // loop_footer
      %s25 = sadd.s32 1, %s21
    $region7: #{tpu_custom_call.1} parent=1 // loop_footer_branch
      %20 = sbr.rel target = $region3
    $region8: #{tpu_custom_call.1} parent=1 // loop_exit
      _
    %1170 = vsyncpa [#allocation4], 1
    %s1171 = scalar_lea.sflag [#allocation4], 1
    %1172 = vsyncpa %s1171, 1

// kernel: tpu_custom_call.1
$region0: #{tpu_custom_call.1}
  #allocation0 [shape = 'u32[]', space=smem, size = 0x4, offset = 0x4, fixed_abs, tag = 'smem constant byte address 0x4 - core index']
  #allocation1 [shape = 'u32[144,128]{1,0:T(1,128)}', space=vmem, size = 0x12000, scoped, tag = 'internal scratch']
  #allocation2 [shape = 'f32[1,1]{1,0:T(1,128)S(1)}', space=vmem, size = 0x200, scoped, tag = 'scoped memory for tpu_custom_call.1']
  %s0 = inlined_call_operand.vmem [shape: bf16[2048,32], index: 0, kind: input, shape index: {}]
  %s1 = inlined_call_operand.vmem [shape: bf16[2048,32], index: 1, kind: input, shape index: {}]
  %s2 = inlined_call_operand.hbm [shape: bf16[32,32], index: 2, kind: input, shape index: {}]
  %s3 = inlined_call_operand.hbm [shape: bf16[32,32], index: 3, kind: input, shape index: {}]
  %s4 = inlined_call_operand.hbm [shape: f32[1,32], index: 4, kind: input, shape index: {}]
  %s5 = inlined_call_operand.hbm [shape: bf16[32,32], index: 5, kind: input, shape index: {}]
  %s6 = inlined_call_operand.hbm [shape: f32[1,32], index: 6, kind: input, shape index: {}]
  %s7 = inlined_call_operand.hbm [shape: f32[1,32], index: 7, kind: input, shape index: {}]
  %s8 = inlined_call_operand.<no memory space> [shape: f32[1,1], index: 8, kind: input, shape index: {}]
  %s9 = inlined_call_operand.vmem [shape: f32[2048,1], index: 9, kind: output, shape index: {}]
  %s10 = sld [smem:[#allocation0]]
  $region93: #{tpu_custom_call.1} parent=0
    _
  %s12 = ssub.s32 1, %s10
  %s13 = scalar_select 0, %s12, %s10
  %v14 = vstv %s8
  %15 = vst [vmem:[#allocation2] sm:$0x1] %v14
  $region1: #{tpu_custom_call.1} parent=0
    #allocation3 [shape = 'u8[8192]{0}', space=vmem, size = 0x2000, scoped, tag = 'input window, operand 2, single buffered']
    #allocation4 [shape = 's32[2]{0}', space=sflag, size = 0x8, scoped, tag = 'scoped memory for tpu_custom_call.1']
    #allocation5 [shape = 'u8[8192]{0}', space=vmem, size = 0x2000, scoped, tag = 'input window, operand 3, single buffered']
    #allocation6 [shape = 's32[1]{0}', space=sflag, size = 0x4, scoped, tag = 'scoped memory for tpu_custom_call.1']
    #allocation7 [shape = 'u8[512]{0}', space=vmem, size = 0x400, scoped, tag = 'input window, operand 4, single buffered']
    #allocation8 [shape = 'u8[8192]{0}', space=vmem, size = 0x2000, scoped, tag = 'input window, operand 5, single buffered']
    #allocation9 [shape = 's32[1]{0}', space=sflag, size = 0x4, scoped, tag = 'scoped memory for tpu_custom_call.1']
    #allocation10 [shape = 'u8[512]{0}', space=vmem, size = 0x400, scoped, tag = 'input window, operand 6, single buffered']
    #allocation11 [shape = 'u8[512]{0}', space=vmem, size = 0x400, scoped, tag = 'input window, operand 7, single buffered']
    #allocation12 [shape = 's32[1]{0}', space=sflag, size = 0x4, scoped, tag = 'scoped memory for tpu_custom_call.1']
    %16 = vsyncpa [#allocation4], 0
    %17 = vsyncpa [#allocation6], 0
    %18 = vsyncpa [#allocation9], 0
    %19 = vsyncpa [#allocation12], 0
    loop: start=0, step=1, limit=6
    $region2: #{tpu_custom_call.1} parent=1 // loop_pre_header
      _
    $region3: #{tpu_custom_call.1} parent=1 // loop_header
      %s21 = sphi 0, %s25
      %p22 = scmp.ge.s32.totalorder %s21, 6
      %s31 = sphi 0, %s33
      %s34 = sphi 0, %s31
      %s35 = sphi 0, %s34
      %s51 = sphi 0, %s35
      %s57 = sphi 0, %s59
      %s60 = sphi 0, %s57
      %s61 = sphi 0, %s60
      %s77 = sphi 0, %s61
      %s81 = sphi 0, %s81
      %s83 = sphi 0, %s81
      %s84 = sphi 0, %s83
      %s98 = sphi 0, %s84
      %s102 = sphi 0, %s102
      %s104 = sphi 0, %s102
      %s105 = sphi 0, %s104
      %s119 = sphi 0, %s105
      %s123 = sphi 0, %s123
      %s125 = sphi 0, %s123
      %s126 = sphi 0, %s125
      %s140 = sphi 0, %s126
      %s144 = sphi 0, %s144
      %s146 = sphi 0, %s144
      %s147 = sphi 0, %s146
      %s161 = sphi 0, %s147
      %s165 = sphi 0, %s165
      %s167 = sphi 0, %s165
      %s168 = sphi 0, %s167
      %s182 = sphi 0, %s168
      %s186 = sphi 0, %s186
      %s188 = sphi 0, %s186
      %s189 = sphi 0, %s188
      %s203 = sphi 0, %s189
      %s207 = sphi 0, %s207
      %s209 = sphi 0, %s207
      %s210 = sphi 0, %s209
      %s224 = sphi 0, %s210
      %s230 = sphi 0, %s232
      %s233 = sphi 0, %s230
      %s234 = sphi 0, %s233
      %s250 = sphi 0, %s234
    $region4: #{tpu_custom_call.1} parent=1 // loop_header_branch
      %24 = sbr.rel (%p22) target = $region8
    $region5: #{tpu_custom_call.1} parent=1 // loop_body
      %s26 = ssub.s32 %s21, 1
      %s27 = ssub.s32 %s21, 2
      %s28 = sadd.s32 %s21, 1
      %s29 = ssub.s32 %s21, %s28
      %p30 = scmp.eq.s32.totalorder %s29, 0
      %s32 = sadd.s32 %s31, 1
      %s33 = scalar_select %p30, %s31, %s32
      %p36 = pneg %p30
      %p37 = scmp.eq.s32.totalorder %s21, 3
      %p38 = por %p36, %p37
      %p39 = scmp.ne.s32.totalorder %s31, %s34
      %p40 = scmp.eq.s32.totalorder %s21, 0
      %p41 = por %p39, %p40
      %p42 = scmp.ne.s32.totalorder %s31, %s34
      %p43 = scmp.eq.s32.totalorder %s26, 3
      %p44 = por %p42, %p43
      %p45 = scmp.ne.s32.totalorder %s34, %s35
      %p46 = scmp.eq.s32.totalorder %s26, 0
      %p47 = por %p45, %p46
      %p48 = scmp.ne.s32.totalorder %s34, %s35
      %p49 = scmp.eq.s32.totalorder %s27, 3
      %p50 = por %p48, %p49
      %p52 = scmp.ne.s32.totalorder %s35, %s51
      %p53 = scmp.eq.s32.totalorder %s27, 0
      %p54 = por %p52, %p53
      %s55 = ssub.s32 %s21, %s28
      %p56 = scmp.eq.s32.totalorder %s55, 0
      %s58 = sadd.s32 %s57, 1
      %s59 = scalar_select %p56, %s57, %s58
      %p62 = pneg %p56
      %p63 = scmp.eq.s32.totalorder %s21, 3
      %p64 = por %p62, %p63
      %p65 = scmp.ne.s32.totalorder %s57, %s60
      %p66 = scmp.eq.s32.totalorder %s21, 0
      %p67 = por %p65, %p66
      %p68 = scmp.ne.s32.totalorder %s57, %s60
      %p69 = scmp.eq.s32.totalorder %s26, 3
      %p70 = por %p68, %p69
      %p71 = scmp.ne.s32.totalorder %s60, %s61
      %p72 = scmp.eq.s32.totalorder %s26, 0
      %p73 = por %p71, %p72
      %p74 = scmp.ne.s32.totalorder %s60, %s61
      %p75 = scmp.eq.s32.totalorder %s27, 3
      %p76 = por %p74, %p75
      %p78 = scmp.ne.s32.totalorder %s61, %s77
      %p79 = scmp.eq.s32.totalorder %s27, 0
      %p80 = por %p78, %p79
      %s82 = sadd.s32 %s81, 1
      %p85 = scmp.eq.s32.totalorder %s21, 3
      %p86 = scmp.ne.s32.totalorder %s81, %s83
      %p87 = scmp.eq.s32.totalorder %s21, 0
      %p88 = por %p86, %p87
      %p89 = scmp.ne.s32.totalorder %s81, %s83
      %p90 = scmp.eq.s32.totalorder %s26, 3
      %p91 = por %p89, %p90
      %p92 = scmp.ne.s32.totalorder %s83, %s84
      %p93 = scmp.eq.s32.totalorder %s26, 0
      %p94 = por %p92, %p93
      %p95 = scmp.ne.s32.totalorder %s83, %s84
      %p96 = scmp.eq.s32.totalorder %s27, 3
      %p97 = por %p95, %p96
      %p99 = scmp.ne.s32.totalorder %s84, %s98
      %p100 = scmp.eq.s32.totalorder %s27, 0
      %p101 = por %p99, %p100
      %s103 = sadd.s32 %s102, 1
      %p106 = scmp.eq.s32.totalorder %s21, 3
      %p107 = scmp.ne.s32.totalorder %s102, %s104
      %p108 = scmp.eq.s32.totalorder %s21, 0
      %p109 = por %p107, %p108
      %p110 = scmp.ne.s32.totalorder %s102, %s104
      %p111 = scmp.eq.s32.totalorder %s26, 3
      %p112 = por %p110, %p111
      %p113 = scmp.ne.s32.totalorder %s104, %s105
      %p114 = scmp.eq.s32.totalorder %s26, 0
      %p115 = por %p113, %p114
      %p116 = scmp.ne.s32.totalorder %s104, %s105
      %p117 = scmp.eq.s32.totalorder %s27, 3
      %p118 = por %p116, %p117
      %p120 = scmp.ne.s32.totalorder %s105, %s119
      %p121 = scmp.eq.s32.totalorder %s27, 0
      %p122 = por %p120, %p121
      %s124 = sadd.s32 %s123, 1
      %p127 = scmp.eq.s32.totalorder %s21, 3
      %p128 = scmp.ne.s32.totalorder %s123, %s125
      %p129 = scmp.eq.s32.totalorder %s21, 0
      %p130 = por %p128, %p129
      %p131 = scmp.ne.s32.totalorder %s123, %s125
      %p132 = scmp.eq.s32.totalorder %s26, 3
      %p133 = por %p131, %p132
      %p134 = scmp.ne.s32.totalorder %s125, %s126
      %p135 = scmp.eq.s32.totalorder %s26, 0
      %p136 = por %p134, %p135
      %p137 = scmp.ne.s32.totalorder %s125, %s126
      %p138 = scmp.eq.s32.totalorder %s27, 3
      %p139 = por %p137, %p138
      %p141 = scmp.ne.s32.totalorder %s126, %s140
      %p142 = scmp.eq.s32.totalorder %s27, 0
      %p143 = por %p141, %p142
      %s145 = sadd.s32 %s144, 1
      %p148 = scmp.eq.s32.totalorder %s21, 3
      %p149 = scmp.ne.s32.totalorder %s144, %s146
      %p150 = scmp.eq.s32.totalorder %s21, 0
      %p151 = por %p149, %p150
      %p152 = scmp.ne.s32.totalorder %s144, %s146
      %p153 = scmp.eq.s32.totalorder %s26, 3
      %p154 = por %p152, %p153
      %p155 = scmp.ne.s32.totalorder %s146, %s147
      %p156 = scmp.eq.s32.totalorder %s26, 0
      %p157 = por %p155, %p156
      %p158 = scmp.ne.s32.totalorder %s146, %s147
      %p159 = scmp.eq.s32.totalorder %s27, 3
      %p160 = por %p158, %p159
      %p162 = scmp.ne.s32.totalorder %s147, %s161
      %p163 = scmp.eq.s32.totalorder %s27, 0
      %p164 = por %p162, %p163
      %s166 = sadd.s32 %s165, 1
      %p169 = scmp.eq.s32.totalorder %s21, 3
      %p170 = scmp.ne.s32.totalorder %s165, %s167
      %p171 = scmp.eq.s32.totalorder %s21, 0
      %p172 = por %p170, %p171
      %p173 = scmp.ne.s32.totalorder %s165, %s167
      %p174 = scmp.eq.s32.totalorder %s26, 3
      %p175 = por %p173, %p174
      %p176 = scmp.ne.s32.totalorder %s167, %s168
      %p177 = scmp.eq.s32.totalorder %s26, 0
      %p178 = por %p176, %p177
      %p179 = scmp.ne.s32.totalorder %s167, %s168
      %p180 = scmp.eq.s32.totalorder %s27, 3
      %p181 = por %p179, %p180
      %p183 = scmp.ne.s32.totalorder %s168, %s182
      %p184 = scmp.eq.s32.totalorder %s27, 0
      %p185 = por %p183, %p184
      %s187 = sadd.s32 %s186, 1
      %p190 = scmp.eq.s32.totalorder %s21, 3
      %p191 = scmp.ne.s32.totalorder %s186, %s188
      %p192 = scmp.eq.s32.totalorder %s21, 0
      %p193 = por %p191, %p192
      %p194 = scmp.ne.s32.totalorder %s186, %s188
      %p195 = scmp.eq.s32.totalorder %s26, 3
      %p196 = por %p194, %p195
      %p197 = scmp.ne.s32.totalorder %s188, %s189
      %p198 = scmp.eq.s32.totalorder %s26, 0
      %p199 = por %p197, %p198
      %p200 = scmp.ne.s32.totalorder %s188, %s189
      %p201 = scmp.eq.s32.totalorder %s27, 3
      %p202 = por %p200, %p201
      %p204 = scmp.ne.s32.totalorder %s189, %s203
      %p205 = scmp.eq.s32.totalorder %s27, 0
      %p206 = por %p204, %p205
      %s208 = sadd.s32 %s207, 1
      %p211 = scmp.eq.s32.totalorder %s21, 3
      %p212 = scmp.ne.s32.totalorder %s207, %s209
      %p213 = scmp.eq.s32.totalorder %s21, 0
      %p214 = por %p212, %p213
      %p215 = scmp.ne.s32.totalorder %s207, %s209
      %p216 = scmp.eq.s32.totalorder %s26, 3
      %p217 = por %p215, %p216
      %p218 = scmp.ne.s32.totalorder %s209, %s210
      %p219 = scmp.eq.s32.totalorder %s26, 0
      %p220 = por %p218, %p219
      %p221 = scmp.ne.s32.totalorder %s209, %s210
      %p222 = scmp.eq.s32.totalorder %s27, 3
      %p223 = por %p221, %p222
      %p225 = scmp.ne.s32.totalorder %s210, %s224
      %p226 = scmp.eq.s32.totalorder %s27, 0
      %p227 = por %p225, %p226
      %s228 = ssub.s32 %s21, %s28
      %p229 = scmp.eq.s32.totalorder %s228, 0
      %s231 = sadd.s32 %s230, 1
      %s232 = scalar_select %p229, %s230, %s231
      %p235 = pneg %p229
      %p236 = scmp.eq.s32.totalorder %s21, 3
      %p237 = por %p235, %p236
      %p238 = scmp.ne.s32.totalorder %s230, %s233
      %p239 = scmp.eq.s32.totalorder %s21, 0
      %p240 = por %p238, %p239
      %p241 = scmp.ne.s32.totalorder %s230, %s233
      %p242 = scmp.eq.s32.totalorder %s26, 3
      %p243 = por %p241, %p242
      %p244 = scmp.ne.s32.totalorder %s233, %s234
      %p245 = scmp.eq.s32.totalorder %s26, 0
      %p246 = por %p244, %p245
      %p247 = scmp.ne.s32.totalorder %s233, %s234
      %p248 = scmp.eq.s32.totalorder %s27, 3
      %p249 = por %p247, %p248
      %p251 = scmp.ne.s32.totalorder %s234, %s250
      %p252 = scmp.eq.s32.totalorder %s27, 0
      %p253 = por %p251, %p252
      %p254 = scmp.le.s32.totalorder 1, %s21
      %p255 = scmp.lt.s32.totalorder %s21, 5
      %p256 = pnand %p254, %p255
      %p257 = pneg %p256
      // Predicated region
      $region9: #{tpu_custom_call.1} parent=5 // pred_check
        _
      $region10: #{tpu_custom_call.1} parent=5 // pred_check_branch
        %259 = sbr.rel (%p256) target = $region12
      $region11: #{tpu_custom_call.1} parent=5 // pred_region
        %s260 = ssub.s32 %s21, 1
        // Predicated region
        $region13: #{tpu_custom_call.1} parent=11 // pred_check
          %p261 = pneg %p94
        $region14: #{tpu_custom_call.1} parent=11 // pred_check_branch
          %263 = sbr.rel (%p261) target = $region16
        $region15: #{tpu_custom_call.1} parent=11 // pred_region
          %s265 = ssub.s32 256, 256
          %266 = vsyncadd [#allocation4], %s265
          %s267 = sshll.u32 [#allocation3], 4
          %s268 = int_to_ptr.vmem [resolvable:$true] %s267
          %273 = dma.hbm_to_vmem [thread:$0]  %s2, 256, %s268, [#allocation4], 64, 64, 4
        $region16: #{tpu_custom_call.1} parent=11 // pred_fallthru
          _
        // Predicated region
        $region17: #{tpu_custom_call.1} parent=11 // pred_check
          %p274 = pneg %p115
        $region18: #{tpu_custom_call.1} parent=11 // pred_check_branch
          %276 = sbr.rel (%p274) target = $region20
        $region19: #{tpu_custom_call.1} parent=11 // pred_region
          %s278 = ssub.s32 256, 256
          %279 = vsyncadd [#allocation6], %s278
          %s280 = sshll.u32 [#allocation5], 4
          %s281 = int_to_ptr.vmem [resolvable:$true] %s280
          %286 = dma.hbm_to_vmem [thread:$0]  %s3, 256, %s281, [#allocation6], 64, 64, 4
        $region20: #{tpu_custom_call.1} parent=11 // pred_fallthru
          _
        // Predicated region
        $region21: #{tpu_custom_call.1} parent=11 // pred_check
          %p287 = pneg %p136
        $region22: #{tpu_custom_call.1} parent=11 // pred_check_branch
          %289 = sbr.rel (%p287) target = $region24
        $region23: #{tpu_custom_call.1} parent=11 // pred_region
          %s291 = ssub.s32 16, 16
          %292 = vsyncadd [#allocation6], %s291
          %s294 = sshll.u32 [#allocation7], 4
          %s295 = int_to_ptr.vmem [resolvable:$true] %s294
          %297 = dma.hbm_to_vmem [thread:$0]  %s4, 16, %s295, [#allocation6]
        $region24: #{tpu_custom_call.1} parent=11 // pred_fallthru
          _
        // Predicated region
        $region25: #{tpu_custom_call.1} parent=11 // pred_check
          %p298 = pneg %p157
        $region26: #{tpu_custom_call.1} parent=11 // pred_check_branch
          %300 = sbr.rel (%p298) target = $region28
        $region27: #{tpu_custom_call.1} parent=11 // pred_region
          %s302 = ssub.s32 256, 256
          %303 = vsyncadd [#allocation9], %s302
          %s304 = sshll.u32 [#allocation8], 4
          %s305 = int_to_ptr.vmem [resolvable:$true] %s304
          %310 = dma.hbm_to_vmem [thread:$0]  %s5, 256, %s305, [#allocation9], 64, 64, 4
        $region28: #{tpu_custom_call.1} parent=11 // pred_fallthru
          _
        // Predicated region
        $region29: #{tpu_custom_call.1} parent=11 // pred_check
          %p311 = pneg %p178
        $region30: #{tpu_custom_call.1} parent=11 // pred_check_branch
          %313 = sbr.rel (%p311) target = $region32
        $region31: #{tpu_custom_call.1} parent=11 // pred_region
          %s315 = ssub.s32 16, 16
          %316 = vsyncadd [#allocation9], %s315
          %s318 = sshll.u32 [#allocation10], 4
          %s319 = int_to_ptr.vmem [resolvable:$true] %s318
          %321 = dma.hbm_to_vmem [thread:$0]  %s6, 16, %s319, [#allocation9]
        $region32: #{tpu_custom_call.1} parent=11 // pred_fallthru
          _
        // Predicated region
        $region33: #{tpu_custom_call.1} parent=11 // pred_check
          %p322 = pneg %p199
        $region34: #{tpu_custom_call.1} parent=11 // pred_check_branch
          %324 = sbr.rel (%p322) target = $region36
        $region35: #{tpu_custom_call.1} parent=11 // pred_region
          %s326 = ssub.s32 16, 16
          %327 = vsyncadd [#allocation12], %s326
          %s329 = sshll.u32 [#allocation11], 4
          %s330 = int_to_ptr.vmem [resolvable:$true] %s329
          %332 = dma.hbm_to_vmem [thread:$0]  %s7, 16, %s330, [#allocation12]
        $region36: #{tpu_custom_call.1} parent=11 // pred_fallthru
          _
        // Predicated region
        $region37: #{tpu_custom_call.1} parent=11 // pred_check
          %p333 = pneg %p220
        $region38: #{tpu_custom_call.1} parent=11 // pred_check_branch
          %335 = sbr.rel (%p333) target = $region40
        $region39: #{tpu_custom_call.1} parent=11 // pred_region
          _
        $region40: #{tpu_custom_call.1} parent=11 // pred_fallthru
          _
      $region12: #{tpu_custom_call.1} parent=5 // pred_fallthru
        _
      %p336 = scmp.lt.s32.totalorder %s21, 4
      // Predicated region
      $region41: #{tpu_custom_call.1} parent=5 // pred_check
        %p337 = pneg %p336
      $region42: #{tpu_custom_call.1} parent=5 // pred_check_branch
        %339 = sbr.rel (%p337) target = $region44
      $region43: #{tpu_custom_call.1} parent=5 // pred_region
        // Predicated region
        $region45: #{tpu_custom_call.1} parent=43 // pred_check
          %p340 = pneg %p41
        $region46: #{tpu_custom_call.1} parent=43 // pred_check_branch
          %342 = sbr.rel (%p340) target = $region48
        $region47: #{tpu_custom_call.1} parent=43 // pred_region
          %s343 = smul.u32 64, %s21
          %p344 = scmp.lt.s32.totalorder %s343, 255
          %s345 = scalar_select %p344, %s343, 255
          %s346 = smul.addr %s345, 4
          %s347 = scalar_lea.vmem %s0, %s346
          %s348 = smul.u32 64, %s21
        $region48: #{tpu_custom_call.1} parent=43 // pred_fallthru
          _
        // Predicated region
        $region49: #{tpu_custom_call.1} parent=43 // pred_check
          %p349 = pneg %p67
        $region50: #{tpu_custom_call.1} parent=43 // pred_check_branch
          %351 = sbr.rel (%p349) target = $region52
        $region51: #{tpu_custom_call.1} parent=43 // pred_region
          %s352 = smul.u32 64, %s21
          %p353 = scmp.lt.s32.totalorder %s352, 255
          %s354 = scalar_select %p353, %s352, 255
          %s355 = smul.addr %s354, 4
          %s356 = scalar_lea.vmem %s1, %s355
          %s357 = smul.u32 64, %s21
        $region52: #{tpu_custom_call.1} parent=43 // pred_fallthru
          _
      $region44: #{tpu_custom_call.1} parent=5 // pred_fallthru
        _
      %p358 = scmp.le.s32.totalorder 1, %s21
      %p359 = scmp.lt.s32.totalorder %s21, 5
      %p360 = pnand %p358, %p359
      %p361 = pneg %p360
      // Predicated region
      $region53: #{tpu_custom_call.1} parent=5 // pred_check
        _
      $region54: #{tpu_custom_call.1} parent=5 // pred_check_branch
        %363 = sbr.rel (%p360) target = $region56
      $region55: #{tpu_custom_call.1} parent=5 // pred_region
        %s364 = ssub.s32 %s21, 1
        // Predicated region
        $region57: #{tpu_custom_call.1} parent=55 // pred_check
          %p365 = pneg %p94
        $region58: #{tpu_custom_call.1} parent=55 // pred_check_branch
          %367 = sbr.rel (%p365) target = $region60
        $region59: #{tpu_custom_call.1} parent=55 // pred_region
          %368 = dma.done [#allocation4], 256
        $region60: #{tpu_custom_call.1} parent=55 // pred_fallthru
          _
        // Predicated region
        $region61: #{tpu_custom_call.1} parent=55 // pred_check
          %p369 = pneg %p115
        $region62: #{tpu_custom_call.1} parent=55 // pred_check_branch
          %371 = sbr.rel (%p369) target = $region64
        $region63: #{tpu_custom_call.1} parent=55 // pred_region
          %372 = dma.done [#allocation6], 256
        $region64: #{tpu_custom_call.1} parent=55 // pred_fallthru
          _
        // Predicated region
        $region65: #{tpu_custom_call.1} parent=55 // pred_check
          %p373 = pneg %p136
        $region66: #{tpu_custom_call.1} parent=55 // pred_check_branch
          %375 = sbr.rel (%p373) target = $region68
        $region67: #{tpu_custom_call.1} parent=55 // pred_region
          %376 = dma.done [#allocation6], 16
        $region68: #{tpu_custom_call.1} parent=55 // pred_fallthru
          _
        // Predicated region
        $region69: #{tpu_custom_call.1} parent=55 // pred_check
          %p377 = pneg %p157
        $region70: #{tpu_custom_call.1} parent=55 // pred_check_branch
          %379 = sbr.rel (%p377) target = $region72
        $region71: #{tpu_custom_call.1} parent=55 // pred_region
          %380 = dma.done [#allocation9], 256
        $region72: #{tpu_custom_call.1} parent=55 // pred_fallthru
          _
        // Predicated region
        $region73: #{tpu_custom_call.1} parent=55 // pred_check
          %p381 = pneg %p178
        $region74: #{tpu_custom_call.1} parent=55 // pred_check_branch
          %383 = sbr.rel (%p381) target = $region76
        $region75: #{tpu_custom_call.1} parent=55 // pred_region
          %384 = dma.done [#allocation9], 16
        $region76: #{tpu_custom_call.1} parent=55 // pred_fallthru
          _
        // Predicated region
        $region77: #{tpu_custom_call.1} parent=55 // pred_check
          %p385 = pneg %p199
        $region78: #{tpu_custom_call.1} parent=55 // pred_check_branch
          %387 = sbr.rel (%p385) target = $region80
        $region79: #{tpu_custom_call.1} parent=55 // pred_region
          %388 = dma.done [#allocation12], 16
        $region80: #{tpu_custom_call.1} parent=55 // pred_fallthru
          _
        %s389 = smul.u32 64, %s26
        %p390 = scmp.lt.s32.totalorder %s389, 255
        %s391 = scalar_select %p390, %s389, 255
        %s392 = smul.addr %s391, 4
        %s393 = scalar_lea.vmem %s0, %s392
        %p394 = pneg %p47
        %p395 = pneg %p44
        %s396 = smul.u32 64, %s26
        %p397 = scmp.lt.s32.totalorder %s396, 255
        %s398 = scalar_select %p397, %s396, 255
        %s399 = smul.addr %s398, 4
        %s400 = scalar_lea.vmem %s1, %s399
        %p401 = pneg %p73
        %p402 = pneg %p70
        %p403 = pneg %p94
        %p404 = pneg %p91
        %p405 = pneg %p115
        %p406 = pneg %p112
        %p407 = pneg %p136
        %p408 = pneg %p133
        %p409 = pneg %p157
        %p410 = pneg %p154
        %p411 = pneg %p178
        %p412 = pneg %p175
        %p413 = pneg %p199
        %p414 = pneg %p196
        %p415 = pneg %p220
        %p416 = pneg %p217
        %p417 = pneg %p246
        %p418 = pneg %p243
        %s419 = smul.u32 64, %s26
        %p420 = scmp.lt.s32.totalorder %s419, 255
        %s421 = scalar_select %p420, %s419, 255
        %s422 = smul.addr %s421, 8
        %s423 = scalar_lea.vmem %s9, %s422
        %s424 = smul.u32 64, %s26
        %p425 = scmp.lt.s32.totalorder %s424, 255
        %s426 = scalar_select %p425, %s424, 255
        %s427 = smul.addr %s426, 4
        %s428 = scalar_lea.vmem %s0, %s427
        %s429 = smul.u32 64, %s26
        %s430 = smul.u32 64, %s26
        %p431 = scmp.lt.s32.totalorder %s430, 255
        %s432 = scalar_select %p431, %s430, 255
        %s433 = smul.addr %s432, 4
        %s434 = scalar_lea.vmem %s1, %s433
        %s435 = smul.u32 64, %s26
        %s436 = smul.u32 64, %s26
        %p437 = scmp.lt.s32.totalorder %s436, 255
        %s438 = scalar_select %p437, %s436, 255
        %s439 = smul.addr %s438, 8
        %s440 = scalar_lea.vmem %s9, %s439
        %s441 = smul.u32 64, %s26
        %v443 = vld [vmem:[%s428] sm:$0xf]
        %v444 = vld [vmem:[%s428 + $0x4] sm:$0xf]
        %v445 = vld [vmem:[%s428 + $0x8] sm:$0xf]
        %v446 = vld [vmem:[%s428 + $0xc] sm:$0xf]
        %v447 = vld [vmem:[%s428 + $0x10] sm:$0xf]
        %v448 = vld [vmem:[%s428 + $0x14] sm:$0xf]
        %v449 = vld [vmem:[%s428 + $0x18] sm:$0xf]
        %v450 = vld [vmem:[%s428 + $0x1c] sm:$0xf]
        %v451 = vld [vmem:[%s428 + $0x20] sm:$0xf]
        %v452 = vld [vmem:[%s428 + $0x24] sm:$0xf]
        %v453 = vld [vmem:[%s428 + $0x28] sm:$0xf]
        %v454 = vld [vmem:[%s428 + $0x2c] sm:$0xf]
        %v455 = vld [vmem:[%s428 + $0x30] sm:$0xf]
        %v456 = vld [vmem:[%s428 + $0x34] sm:$0xf]
        %v457 = vld [vmem:[%s428 + $0x38] sm:$0xf]
        %v458 = vld [vmem:[%s428 + $0x3c] sm:$0xf]
        %v459 = vld [vmem:[%s428 + $0x40] sm:$0xf]
        %v460 = vld [vmem:[%s428 + $0x44] sm:$0xf]
        %v461 = vld [vmem:[%s428 + $0x48] sm:$0xf]
        %v462 = vld [vmem:[%s428 + $0x4c] sm:$0xf]
        %v463 = vld [vmem:[%s428 + $0x50] sm:$0xf]
        %v464 = vld [vmem:[%s428 + $0x54] sm:$0xf]
        %v465 = vld [vmem:[%s428 + $0x58] sm:$0xf]
        %v466 = vld [vmem:[%s428 + $0x5c] sm:$0xf]
        %v467 = vld [vmem:[%s428 + $0x60] sm:$0xf]
        %v468 = vld [vmem:[%s428 + $0x64] sm:$0xf]
        %v469 = vld [vmem:[%s428 + $0x68] sm:$0xf]
        %v470 = vld [vmem:[%s428 + $0x6c] sm:$0xf]
        %v471 = vld [vmem:[%s428 + $0x70] sm:$0xf]
        %v472 = vld [vmem:[%s428 + $0x74] sm:$0xf]
        %v473 = vld [vmem:[%s428 + $0x78] sm:$0xf]
        %v474 = vld [vmem:[%s428 + $0x7c] sm:$0xf]
        %v475 = vld [vmem:[%s428 + $0x80] sm:$0xf]
        %v476 = vld [vmem:[%s428 + $0x84] sm:$0xf]
        %v477 = vld [vmem:[%s428 + $0x88] sm:$0xf]
        %v478 = vld [vmem:[%s428 + $0x8c] sm:$0xf]
        %v479 = vld [vmem:[%s428 + $0x90] sm:$0xf]
        %v480 = vld [vmem:[%s428 + $0x94] sm:$0xf]
        %v481 = vld [vmem:[%s428 + $0x98] sm:$0xf]
        %v482 = vld [vmem:[%s428 + $0x9c] sm:$0xf]
        %v483 = vld [vmem:[%s428 + $0xa0] sm:$0xf]
        %v484 = vld [vmem:[%s428 + $0xa4] sm:$0xf]
        %v485 = vld [vmem:[%s428 + $0xa8] sm:$0xf]
        %v486 = vld [vmem:[%s428 + $0xac] sm:$0xf]
        %v487 = vld [vmem:[%s428 + $0xb0] sm:$0xf]
        %v488 = vld [vmem:[%s428 + $0xb4] sm:$0xf]
        %v489 = vld [vmem:[%s428 + $0xb8] sm:$0xf]
        %v490 = vld [vmem:[%s428 + $0xbc] sm:$0xf]
        %v491 = vld [vmem:[%s428 + $0xc0] sm:$0xf]
        %v492 = vld [vmem:[%s428 + $0xc4] sm:$0xf]
        %v493 = vld [vmem:[%s428 + $0xc8] sm:$0xf]
        %v494 = vld [vmem:[%s428 + $0xcc] sm:$0xf]
        %v495 = vld [vmem:[%s428 + $0xd0] sm:$0xf]
        %v496 = vld [vmem:[%s428 + $0xd4] sm:$0xf]
        %v497 = vld [vmem:[%s428 + $0xd8] sm:$0xf]
        %v498 = vld [vmem:[%s428 + $0xdc] sm:$0xf]
        %v499 = vld [vmem:[%s428 + $0xe0] sm:$0xf]
        %v500 = vld [vmem:[%s428 + $0xe4] sm:$0xf]
        %v501 = vld [vmem:[%s428 + $0xe8] sm:$0xf]
        %v502 = vld [vmem:[%s428 + $0xec] sm:$0xf]
        %v503 = vld [vmem:[%s428 + $0xf0] sm:$0xf]
        %v504 = vld [vmem:[%s428 + $0xf4] sm:$0xf]
        %v505 = vld [vmem:[%s428 + $0xf8] sm:$0xf]
        %v506 = vld [vmem:[%s428 + $0xfc] sm:$0xf]
        %v507 = vld [vmem:[#allocation3] sm:$0xf]
        %v508 = vld [vmem:[#allocation3 + $0x4] sm:$0xf]
        %v509 = vld [vmem:[#allocation3 + $0x8] sm:$0xf]
        %v510 = vld [vmem:[#allocation3 + $0xc] sm:$0xf]
        %v511 = vld [vmem:[%s434] sm:$0xf]
        %v512 = vld [vmem:[%s434 + $0x4] sm:$0xf]
        %v513 = vld [vmem:[%s434 + $0x8] sm:$0xf]
        %v514 = vld [vmem:[%s434 + $0xc] sm:$0xf]
        %v515 = vld [vmem:[%s434 + $0x10] sm:$0xf]
        %v516 = vld [vmem:[%s434 + $0x14] sm:$0xf]
        %v517 = vld [vmem:[%s434 + $0x18] sm:$0xf]
        %v518 = vld [vmem:[%s434 + $0x1c] sm:$0xf]
        %v519 = vld [vmem:[%s434 + $0x20] sm:$0xf]
        %v520 = vld [vmem:[%s434 + $0x24] sm:$0xf]
        %v521 = vld [vmem:[%s434 + $0x28] sm:$0xf]
        %v522 = vld [vmem:[%s434 + $0x2c] sm:$0xf]
        %v523 = vld [vmem:[%s434 + $0x30] sm:$0xf]
        %v524 = vld [vmem:[%s434 + $0x34] sm:$0xf]
        %v525 = vld [vmem:[%s434 + $0x38] sm:$0xf]
        %v526 = vld [vmem:[%s434 + $0x3c] sm:$0xf]
        %v527 = vld [vmem:[%s434 + $0x40] sm:$0xf]
        %v528 = vld [vmem:[%s434 + $0x44] sm:$0xf]
        %v529 = vld [vmem:[%s434 + $0x48] sm:$0xf]
        %v530 = vld [vmem:[%s434 + $0x4c] sm:$0xf]
        %v531 = vld [vmem:[%s434 + $0x50] sm:$0xf]
        %v532 = vld [vmem:[%s434 + $0x54] sm:$0xf]
        %v533 = vld [vmem:[%s434 + $0x58] sm:$0xf]
        %v534 = vld [vmem:[%s434 + $0x5c] sm:$0xf]
        %v535 = vld [vmem:[%s434 + $0x60] sm:$0xf]
        %v536 = vld [vmem:[%s434 + $0x64] sm:$0xf]
        %v537 = vld [vmem:[%s434 + $0x68] sm:$0xf]
        %v538 = vld [vmem:[%s434 + $0x6c] sm:$0xf]
        %v539 = vld [vmem:[%s434 + $0x70] sm:$0xf]
        %v540 = vld [vmem:[%s434 + $0x74] sm:$0xf]
        %v541 = vld [vmem:[%s434 + $0x78] sm:$0xf]
        %v542 = vld [vmem:[%s434 + $0x7c] sm:$0xf]
        %v543 = vld [vmem:[%s434 + $0x80] sm:$0xf]
        %v544 = vld [vmem:[%s434 + $0x84] sm:$0xf]
        %v545 = vld [vmem:[%s434 + $0x88] sm:$0xf]
        %v546 = vld [vmem:[%s434 + $0x8c] sm:$0xf]
        %v547 = vld [vmem:[%s434 + $0x90] sm:$0xf]
        %v548 = vld [vmem:[%s434 + $0x94] sm:$0xf]
        %v549 = vld [vmem:[%s434 + $0x98] sm:$0xf]
        %v550 = vld [vmem:[%s434 + $0x9c] sm:$0xf]
        %v551 = vld [vmem:[%s434 + $0xa0] sm:$0xf]
        %v552 = vld [vmem:[%s434 + $0xa4] sm:$0xf]
        %v553 = vld [vmem:[%s434 + $0xa8] sm:$0xf]
        %v554 = vld [vmem:[%s434 + $0xac] sm:$0xf]
        %v555 = vld [vmem:[%s434 + $0xb0] sm:$0xf]
        %v556 = vld [vmem:[%s434 + $0xb4] sm:$0xf]
        %v557 = vld [vmem:[%s434 + $0xb8] sm:$0xf]
        %v558 = vld [vmem:[%s434 + $0xbc] sm:$0xf]
        %v559 = vld [vmem:[%s434 + $0xc0] sm:$0xf]
        %v560 = vld [vmem:[%s434 + $0xc4] sm:$0xf]
        %v561 = vld [vmem:[%s434 + $0xc8] sm:$0xf]
        %v562 = vld [vmem:[%s434 + $0xcc] sm:$0xf]
        %v563 = vld [vmem:[%s434 + $0xd0] sm:$0xf]
        %v564 = vld [vmem:[%s434 + $0xd4] sm:$0xf]
        %v565 = vld [vmem:[%s434 + $0xd8] sm:$0xf]
        %v566 = vld [vmem:[%s434 + $0xdc] sm:$0xf]
        %v567 = vld [vmem:[%s434 + $0xe0] sm:$0xf]
        %v568 = vld [vmem:[%s434 + $0xe4] sm:$0xf]
        %v569 = vld [vmem:[%s434 + $0xe8] sm:$0xf]
        %v570 = vld [vmem:[%s434 + $0xec] sm:$0xf]
        %v571 = vld [vmem:[%s434 + $0xf0] sm:$0xf]
        %v572 = vld [vmem:[%s434 + $0xf4] sm:$0xf]
        %v573 = vld [vmem:[%s434 + $0xf8] sm:$0xf]
        %v574 = vld [vmem:[%s434 + $0xfc] sm:$0xf]
        %v575 = vld [vmem:[#allocation5] sm:$0xf]
        %v576 = vld [vmem:[#allocation5 + $0x4] sm:$0xf]
        %v577 = vld [vmem:[#allocation5 + $0x8] sm:$0xf]
        %v578 = vld [vmem:[#allocation5 + $0xc] sm:$0xf]
        %v643 = vunpack.c.l.b16 %v511
        %v644 = vunpack.c.l.b16 %v512
        %v645 = vunpack.c.l.b16 %v513
        %v646 = vunpack.c.l.b16 %v514
        %v647 = vunpack.c.l.b16 %v515
        %v648 = vunpack.c.l.b16 %v516
        %v649 = vunpack.c.l.b16 %v517
        %v650 = vunpack.c.l.b16 %v518
        %v651 = vunpack.c.l.b16 %v519
        %v652 = vunpack.c.l.b16 %v520
        %v653 = vunpack.c.l.b16 %v521
        %v654 = vunpack.c.l.b16 %v522
        %v655 = vunpack.c.l.b16 %v523
        %v656 = vunpack.c.l.b16 %v524
        %v657 = vunpack.c.l.b16 %v525
        %v658 = vunpack.c.l.b16 %v526
        %v659 = vunpack.c.l.b16 %v527
        %v660 = vunpack.c.l.b16 %v528
        %v661 = vunpack.c.l.b16 %v529
        %v662 = vunpack.c.l.b16 %v530
        %v663 = vunpack.c.l.b16 %v531
        %v664 = vunpack.c.l.b16 %v532
        %v665 = vunpack.c.l.b16 %v533
        %v666 = vunpack.c.l.b16 %v534
        %v667 = vunpack.c.l.b16 %v535
        %v668 = vunpack.c.l.b16 %v536
        %v669 = vunpack.c.l.b16 %v537
        %v670 = vunpack.c.l.b16 %v538
        %v671 = vunpack.c.l.b16 %v539
        %v672 = vunpack.c.l.b16 %v540
        %v673 = vunpack.c.l.b16 %v541
        %v674 = vunpack.c.l.b16 %v542
        %v675 = vunpack.c.l.b16 %v543
        %v676 = vunpack.c.l.b16 %v544
        %v677 = vunpack.c.l.b16 %v545
        %v678 = vunpack.c.l.b16 %v546
        %v679 = vunpack.c.l.b16 %v547
        %v680 = vunpack.c.l.b16 %v548
        %v681 = vunpack.c.l.b16 %v549
        %v682 = vunpack.c.l.b16 %v550
        %v683 = vunpack.c.l.b16 %v551
        %v684 = vunpack.c.l.b16 %v552
        %v685 = vunpack.c.l.b16 %v553
        %v686 = vunpack.c.l.b16 %v554
        %v687 = vunpack.c.l.b16 %v555
        %v688 = vunpack.c.l.b16 %v556
        %v689 = vunpack.c.l.b16 %v557
        %v690 = vunpack.c.l.b16 %v558
        %v691 = vunpack.c.l.b16 %v559
        %v692 = vunpack.c.l.b16 %v560
        %v693 = vunpack.c.l.b16 %v561
        %v694 = vunpack.c.l.b16 %v562
        %v695 = vunpack.c.l.b16 %v563
        %v696 = vunpack.c.l.b16 %v564
        %v697 = vunpack.c.l.b16 %v565
        %v698 = vunpack.c.l.b16 %v566
        %v699 = vunpack.c.l.b16 %v567
        %v700 = vunpack.c.l.b16 %v568
        %v701 = vunpack.c.l.b16 %v569
        %v702 = vunpack.c.l.b16 %v570
        %v703 = vunpack.c.l.b16 %v571
        %v704 = vunpack.c.l.b16 %v572
        %v705 = vunpack.c.l.b16 %v573
        %v706 = vunpack.c.l.b16 %v574
        %v707 = vpack.c.b16 %v644, %v643
        %v708 = vpack.c.b16 %v646, %v645
        %v709 = vpack.c.b16 %v648, %v647
        %v710 = vpack.c.b16 %v650, %v649
        %v711 = vpack.c.b16 %v652, %v651
        %v712 = vpack.c.b16 %v654, %v653
        %v713 = vpack.c.b16 %v656, %v655
        %v714 = vpack.c.b16 %v658, %v657
        %v715 = vpack.c.b16 %v660, %v659
        %v716 = vpack.c.b16 %v662, %v661
        %v717 = vpack.c.b16 %v664, %v663
        %v718 = vpack.c.b16 %v666, %v665
        %v719 = vpack.c.b16 %v668, %v667
        %v720 = vpack.c.b16 %v670, %v669
        %v721 = vpack.c.b16 %v672, %v671
        %v722 = vpack.c.b16 %v674, %v673
        %v723 = vpack.c.b16 %v676, %v675
        %v724 = vpack.c.b16 %v678, %v677
        %v725 = vpack.c.b16 %v680, %v679
        %v726 = vpack.c.b16 %v682, %v681
        %v727 = vpack.c.b16 %v684, %v683
        %v728 = vpack.c.b16 %v686, %v685
        %v729 = vpack.c.b16 %v688, %v687
        %v730 = vpack.c.b16 %v690, %v689
        %v731 = vpack.c.b16 %v692, %v691
        %v732 = vpack.c.b16 %v694, %v693
        %v733 = vpack.c.b16 %v696, %v695
        %v734 = vpack.c.b16 %v698, %v697
        %v735 = vpack.c.b16 %v700, %v699
        %v736 = vpack.c.b16 %v702, %v701
        %v737 = vpack.c.b16 %v704, %v703
        %v738 = vpack.c.b16 %v706, %v705
        %v743 = vunpack.c.l.b16 %v575
        %v744 = vunpack.c.l.b16 %v576
        %v745 = vunpack.c.l.b16 %v577
        %v746 = vunpack.c.l.b16 %v578
        %v747 = vpack.c.b16 %v744, %v743
        %v748 = vpack.c.b16 %v746, %v745
        %vm751 = vcmask 261120
        %v753 = vsel %vm751, %v707, 0
        %v756 = vsel %vm751, %v708, 0
        %v759 = vsel %vm751, %v709, 0
        %v762 = vsel %vm751, %v710, 0
        %v765 = vsel %vm751, %v711, 0
        %v768 = vsel %vm751, %v712, 0
        %v771 = vsel %vm751, %v713, 0
        %v774 = vsel %vm751, %v714, 0
        %v777 = vsel %vm751, %v715, 0
        %v780 = vsel %vm751, %v716, 0
        %v783 = vsel %vm751, %v717, 0
        %v786 = vsel %vm751, %v718, 0
        %v789 = vsel %vm751, %v719, 0
        %v792 = vsel %vm751, %v720, 0
        %v795 = vsel %vm751, %v721, 0
        %v798 = vsel %vm751, %v722, 0
        %v801 = vsel %vm751, %v723, 0
        %v804 = vsel %vm751, %v724, 0
        %v807 = vsel %vm751, %v725, 0
        %v810 = vsel %vm751, %v726, 0
        %v813 = vsel %vm751, %v727, 0
        %v816 = vsel %vm751, %v728, 0
        %v819 = vsel %vm751, %v729, 0
        %v822 = vsel %vm751, %v730, 0
        %v825 = vsel %vm751, %v731, 0
        %v828 = vsel %vm751, %v732, 0
        %v831 = vsel %vm751, %v733, 0
        %v834 = vsel %vm751, %v734, 0
        %v837 = vsel %vm751, %v735, 0
        %v840 = vsel %vm751, %v736, 0
        %v843 = vsel %vm751, %v737, 0
        %v846 = vsel %vm751, %v738, 0
        %848 = vmatprep.subr.bf16.mxu0 0
        %849 = vmatpush1.bf16.msra.mxu0 %v747
        %850 = vmatprep.subr.bf16.mxu0 0
        %851 = vmatpush1.bf16.msra.mxu0 %v748
        %852 = vmatprep.subr.bf16.mxu0 0
        %853 = vmatpush1.bf16.msra.mxu0 0
        %854 = vmatprep.subr.bf16.mxu0 0
        %855 = vmatpush1.bf16.msra.mxu0 0
        %856 = vmatprep.subr.bf16.mxu0 0
        %857 = vmatpush1.bf16.msra.mxu0 0
        %858 = vmatprep.subr.bf16.mxu0 0
        %859 = vmatpush1.bf16.msra.mxu0 0
        %860 = vmatprep.subr.bf16.mxu0 0
        %861 = vmatpush1.bf16.msra.mxu0 0
        %862 = vmatprep.subr.bf16.mxu0 0
        %863 = vmatpush1.bf16.msra.mxu0 0
        %864 = vmatprep.subr.bf16.mxu0 0
        %865 = vmatpush1.bf16.msra.mxu0 0
        %866 = vmatprep.subr.bf16.mxu0 0
        %867 = vmatpush1.bf16.msra.mxu0 0
        %868 = vmatprep.subr.bf16.mxu0 0
        %869 = vmatpush1.bf16.msra.mxu0 0
        %870 = vmatprep.subr.bf16.mxu0 0
        %871 = vmatpush1.bf16.msra.mxu0 0
        %872 = vmatprep.subr.bf16.mxu0 0
        %873 = vmatpush1.bf16.msra.mxu0 0
        %874 = vmatprep.subr.bf16.mxu0 0
        %875 = vmatpush1.bf16.msra.mxu0 0
        %876 = vmatprep.subr.bf16.mxu0 0
        %877 = vmatpush1.bf16.msra.mxu0 0
        %878 = vmatprep.subr.bf16.mxu0 0
        %879 = vmatpush1.bf16.msra.mxu0 0
        %880 = vmatprep.mubr.bf16.mxu0 0
        %881 = vmatmul.mubr.bf16.gmra.mrb[0].mxu0 %v753
        %v882 = vpop.f32.mrb[0].mxu0
        %v883 = vadd.f32 0.0, %v882
        %v884 = vpop.f32.mrb[0].mxu0
        %v885 = vpop.f32.mrb[0].mxu0
        %v886 = vadd.f32 0.0, %v885
        %v887 = vpop.f32.mrb[0].mxu0
        %888 = vmatprep.mubr.bf16.mxu0 0
        %889 = vmatmul.mubr.bf16.gmra.mrb[0].mxu0 %v756
        %v890 = vpop.f32.mrb[0].mxu0
        %v891 = vadd.f32 0.0, %v890
        %v892 = vpop.f32.mrb[0].mxu0
        %v893 = vpop.f32.mrb[0].mxu0
        %v894 = vadd.f32 0.0, %v893
        %v895 = vpop.f32.mrb[0].mxu0
        %896 = vmatprep.mubr.bf16.mxu0 0
        %897 = vmatmul.mubr.bf16.gmra.mrb[0].mxu0 %v759
        %v898 = vpop.f32.mrb[0].mxu0
        %v899 = vadd.f32 0.0, %v898
        %v900 = vpop.f32.mrb[0].mxu0
        %v901 = vpop.f32.mrb[0].mxu0
        %v902 = vadd.f32 0.0, %v901
        %v903 = vpop.f32.mrb[0].mxu0
        %904 = vmatprep.mubr.bf16.mxu0 0
        %905 = vmatmul.mubr.bf16.gmra.mrb[0].mxu0 %v762
        %v906 = vpop.f32.mrb[0].mxu0
        %v907 = vadd.f32 0.0, %v906
        %v908 = vpop.f32.mrb[0].mxu0
        %v909 = vpop.f32.mrb[0].mxu0
        %v910 = vadd.f32 0.0, %v909
        %v911 = vpop.f32.mrb[0].mxu0
        %912 = vmatprep.mubr.bf16.mxu0 0
        %913 = vmatmul.mubr.bf16.gmra.mrb[0].mxu0 %v765
        %v914 = vpop.f32.mrb[0].mxu0
        %v915 = vadd.f32 0.0, %v914
        %v916 = vpop.f32.mrb[0].mxu0
        %v917 = vpop.f32.mrb[0].mxu0
        %v918 = vadd.f32 0.0, %v917
        %v919 = vpop.f32.mrb[0].mxu0
        %920 = vmatprep.mubr.bf16.mxu0 0
        %921 = vmatmul.mubr.bf16.gmra.mrb[0].mxu0 %v768
        %v922 = vpop.f32.mrb[0].mxu0
        %v923 = vadd.f32 0.0, %v922
        %v924 = vpop.f32.mrb[0].mxu0
        %v925 = vpop.f32.mrb[0].mxu0
        %v926 = vadd.f32 0.0, %v925
        %v927 = vpop.f32.mrb[0].mxu0
        %928 = vmatprep.mubr.bf16.mxu0 0
        %929 = vmatmul.mubr.bf16.gmra.mrb[0].mxu0 %v771
        %v930 = vpop.f32.mrb[0].mxu0
        %v931 = vadd.f32 0.0, %v930
        %v932 = vpop.f32.mrb[0].mxu0
        %v933 = vpop.f32.mrb[0].mxu0
        %v934 = vadd.f32 0.0, %v933
        %v935 = vpop.f32.mrb[0].mxu0
        %936 = vmatprep.mubr.bf16.mxu0 0
        %937 = vmatmul.mubr.bf16.gmra.mrb[0].mxu0 %v774
        %v938 = vpop.f32.mrb[0].mxu0
        %v939 = vadd.f32 0.0, %v938
        %v940 = vpop.f32.mrb[0].mxu0
        %v941 = vpop.f32.mrb[0].mxu0
        %v942 = vadd.f32 0.0, %v941
        %v943 = vpop.f32.mrb[0].mxu0
        %944 = vmatprep.mubr.bf16.mxu0 0
        %945 = vmatmul.mubr.bf16.gmra.mrb[0].mxu0 %v777
        %v946 = vpop.f32.mrb[0].mxu0
        %v947 = vadd.f32 0.0, %v946
        %v948 = vpop.f32.mrb[0].mxu0
        %v949 = vpop.f32.mrb[0].mxu0
        %v950 = vadd.f32 0.0, %v949
        %v951 = vpop.f32.mrb[0].mxu0
        %952 = vmatprep.mubr.bf16.mxu0 0
        %953 = vmatmul.mubr.bf16.gmra.mrb[0].mxu0 %v780
        %v954 = vpop.f32.mrb[0].mxu0
        %v955 = vadd.f32 0.0, %v954
        %v956 = vpop.f32.mrb[0].mxu0
        %v957 = vpop.f32.mrb[0].mxu0
        %v958 = vadd.f32 0.0, %v957
        %v959 = vpop.f32.mrb[0].mxu0
        %960 = vmatprep.mubr.bf16.mxu0 0
        %961 = vmatmul.mubr.bf16.gmra.mrb[0].mxu0 %v783
        %v962 = vpop.f32.mrb[0].mxu0
        %v963 = vadd.f32 0.0, %v962
        %v964 = vpop.f32.mrb[0].mxu0
        %v965 = vpop.f32.mrb[0].mxu0
        %v966 = vadd.f32 0.0, %v965
        %v967 = vpop.f32.mrb[0].mxu0
        %968 = vmatprep.mubr.bf16.mxu0 0
        %969 = vmatmul.mubr.bf16.gmra.mrb[0].mxu0 %v786
        %v970 = vpop.f32.mrb[0].mxu0
        %v971 = vadd.f32 0.0, %v970
        %v972 = vpop.f32.mrb[0].mxu0
        %v973 = vpop.f32.mrb[0].mxu0
        %v974 = vadd.f32 0.0, %v973
        %v975 = vpop.f32.mrb[0].mxu0
        %976 = vmatprep.mubr.bf16.mxu0 0
        %977 = vmatmul.mubr.bf16.gmra.mrb[0].mxu0 %v789
        %v978 = vpop.f32.mrb[0].mxu0
        %v979 = vadd.f32 0.0, %v978
        %v980 = vpop.f32.mrb[0].mxu0
        %v981 = vpop.f32.mrb[0].mxu0
        %v982 = vadd.f32 0.0, %v981
        %v983 = vpop.f32.mrb[0].mxu0
        %984 = vmatprep.mubr.bf16.mxu0 0
        %985 = vmatmul.mubr.bf16.gmra.mrb[0].mxu0 %v792
        %v986 = vpop.f32.mrb[0].mxu0
        %v987 = vadd.f32 0.0, %v986
        %v988 = vpop.f32.mrb[0].mxu0
        %v989 = vpop.f32.mrb[0].mxu0
        %v990 = vadd.f32 0.0, %v989
        %v991 = vpop.f32.mrb[0].mxu0
        %992 = vmatprep.mubr.bf16.mxu0 0
        %993 = vmatmul.mubr.bf16.gmra.mrb[0].mxu0 %v795
        %v994 = vpop.f32.mrb[0].mxu0
        %v995 = vadd.f32 0.0, %v994
        %v996 = vpop.f32.mrb[0].mxu0
        %v997 = vpop.f32.mrb[0].mxu0
        %v998 = vadd.f32 0.0, %v997
        %v999 = vpop.f32.mrb[0].mxu0
        %1000 = vmatprep.mubr.bf16.mxu0 0
        %1001 = vmatmul.mubr.bf16.gmra.mrb[0].mxu0 %v798
        %v1002 = vpop.f32.mrb[0].mxu0
        %v1003 = vadd.f32 0.0, %v1002
        %v1004 = vpop.f32.mrb[0].mxu0
        %v1005 = vpop.f32.mrb[0].mxu0
        %v1006 = vadd.f32 0.0, %v1005
        %v1007 = vpop.f32.mrb[0].mxu0
        %1008 = vmatprep.mubr.bf16.mxu0 0
        %1009 = vmatmul.mubr.bf16.gmra.mrb[0].mxu0 %v801
        %v1010 = vpop.f32.mrb[0].mxu0
        %v1011 = vadd.f32 0.0, %v1010
        %v1012 = vpop.f32.mrb[0].mxu0
        %v1013 = vpop.f32.mrb[0].mxu0
        %v1014 = vadd.f32 0.0, %v1013
        %v1015 = vpop.f32.mrb[0].mxu0
        %1016 = vmatprep.mubr.bf16.mxu0 0
        %1017 = vmatmul.mubr.bf16.gmra.mrb[0].mxu0 %v804
        %v1018 = vpop.f32.mrb[0].mxu0
        %v1019 = vadd.f32 0.0, %v1018
        %v1020 = vpop.f32.mrb[0].mxu0
        %v1021 = vpop.f32.mrb[0].mxu0
        %v1022 = vadd.f32 0.0, %v1021
        %v1023 = vpop.f32.mrb[0].mxu0
        %1024 = vmatprep.mubr.bf16.mxu0 0
        %1025 = vmatmul.mubr.bf16.gmra.mrb[0].mxu0 %v807
        %v1026 = vpop.f32.mrb[0].mxu0
        %v1027 = vadd.f32 0.0, %v1026
        %v1028 = vpop.f32.mrb[0].mxu0
        %v1029 = vpop.f32.mrb[0].mxu0
        %v1030 = vadd.f32 0.0, %v1029
        %v1031 = vpop.f32.mrb[0].mxu0
        %1032 = vmatprep.mubr.bf16.mxu0 0
        %1033 = vmatmul.mubr.bf16.gmra.mrb[0].mxu0 %v810
        %v1034 = vpop.f32.mrb[0].mxu0
        %v1035 = vadd.f32 0.0, %v1034
        %v1036 = vpop.f32.mrb[0].mxu0
        %v1037 = vpop.f32.mrb[0].mxu0
        %v1038 = vadd.f32 0.0, %v1037
        %v1039 = vpop.f32.mrb[0].mxu0
        %1040 = vmatprep.mubr.bf16.mxu0 0
        %1041 = vmatmul.mubr.bf16.gmra.mrb[0].mxu0 %v813
        %v1042 = vpop.f32.mrb[0].mxu0
        %v1043 = vadd.f32 0.0, %v1042
        %v1044 = vpop.f32.mrb[0].mxu0
        %v1045 = vpop.f32.mrb[0].mxu0
        %v1046 = vadd.f32 0.0, %v1045
        %v1047 = vpop.f32.mrb[0].mxu0
        %1048 = vmatprep.mubr.bf16.mxu0 0
        %1049 = vmatmul.mubr.bf16.gmra.mrb[0].mxu0 %v816
        %v1050 = vpop.f32.mrb[0].mxu0
        %v1051 = vadd.f32 0.0, %v1050
        %v1052 = vpop.f32.mrb[0].mxu0
        %v1053 = vpop.f32.mrb[0].mxu0
        %v1054 = vadd.f32 0.0, %v1053
        %v1055 = vpop.f32.mrb[0].mxu0
        %1056 = vmatprep.mubr.bf16.mxu0 0
        %1057 = vmatmul.mubr.bf16.gmra.mrb[0].mxu0 %v819
        %v1058 = vpop.f32.mrb[0].mxu0
        %v1059 = vadd.f32 0.0, %v1058
        %v1060 = vpop.f32.mrb[0].mxu0
        %v1061 = vpop.f32.mrb[0].mxu0
        %v1062 = vadd.f32 0.0, %v1061
        %v1063 = vpop.f32.mrb[0].mxu0
        %1064 = vmatprep.mubr.bf16.mxu0 0
        %1065 = vmatmul.mubr.bf16.gmra.mrb[0].mxu0 %v822
        %v1066 = vpop.f32.mrb[0].mxu0
        %v1067 = vadd.f32 0.0, %v1066
        %v1068 = vpop.f32.mrb[0].mxu0
        %v1069 = vpop.f32.mrb[0].mxu0
        %v1070 = vadd.f32 0.0, %v1069
        %v1071 = vpop.f32.mrb[0].mxu0
        %1072 = vmatprep.mubr.bf16.mxu0 0
        %1073 = vmatmul.mubr.bf16.gmra.mrb[0].mxu0 %v825
        %v1074 = vpop.f32.mrb[0].mxu0
        %v1075 = vadd.f32 0.0, %v1074
        %v1076 = vpop.f32.mrb[0].mxu0
        %v1077 = vpop.f32.mrb[0].mxu0
        %v1078 = vadd.f32 0.0, %v1077
        %v1079 = vpop.f32.mrb[0].mxu0
        %1080 = vmatprep.mubr.bf16.mxu0 0
        %1081 = vmatmul.mubr.bf16.gmra.mrb[0].mxu0 %v828
        %v1082 = vpop.f32.mrb[0].mxu0
        %v1083 = vadd.f32 0.0, %v1082
        %v1084 = vpop.f32.mrb[0].mxu0
        %v1085 = vpop.f32.mrb[0].mxu0
        %v1086 = vadd.f32 0.0, %v1085
        %v1087 = vpop.f32.mrb[0].mxu0
        %1088 = vmatprep.mubr.bf16.mxu0 0
        %1089 = vmatmul.mubr.bf16.gmra.mrb[0].mxu0 %v831
        %v1090 = vpop.f32.mrb[0].mxu0
        %v1091 = vadd.f32 0.0, %v1090
        %v1092 = vpop.f32.mrb[0].mxu0
        %v1093 = vpop.f32.mrb[0].mxu0
        %v1094 = vadd.f32 0.0, %v1093
        %v1095 = vpop.f32.mrb[0].mxu0
        %1096 = vmatprep.mubr.bf16.mxu0 0
        %1097 = vmatmul.mubr.bf16.gmra.mrb[0].mxu0 %v834
        %v1098 = vpop.f32.mrb[0].mxu0
        %v1099 = vadd.f32 0.0, %v1098
        %v1100 = vpop.f32.mrb[0].mxu0
        %v1101 = vpop.f32.mrb[0].mxu0
        %v1102 = vadd.f32 0.0, %v1101
        %v1103 = vpop.f32.mrb[0].mxu0
        %1104 = vmatprep.mubr.bf16.mxu0 0
        %1105 = vmatmul.mubr.bf16.gmra.mrb[0].mxu0 %v837
        %v1106 = vpop.f32.mrb[0].mxu0
        %v1107 = vadd.f32 0.0, %v1106
        %v1108 = vpop.f32.mrb[0].mxu0
        %v1109 = vpop.f32.mrb[0].mxu0
        %v1110 = vadd.f32 0.0, %v1109
        %v1111 = vpop.f32.mrb[0].mxu0
        %1112 = vmatprep.mubr.bf16.mxu0 0
        %1113 = vmatmul.mubr.bf16.gmra.mrb[0].mxu0 %v840
        %v1114 = vpop.f32.mrb[0].mxu0
        %v1115 = vadd.f32 0.0, %v1114
        %v1116 = vpop.f32.mrb[0].mxu0
        %v1117 = vpop.f32.mrb[0].mxu0
        %v1118 = vadd.f32 0.0, %v1117
        %v1119 = vpop.f32.mrb[0].mxu0
        %1120 = vmatprep.mubr.bf16.mxu0 0
        %1121 = vmatmul.mubr.bf16.gmra.mrb[0].mxu0 %v843
        %v1122 = vpop.f32.mrb[0].mxu0
        %v1123 = vadd.f32 0.0, %v1122
        %v1124 = vpop.f32.mrb[0].mxu0
        %v1125 = vpop.f32.mrb[0].mxu0
        %v1126 = vadd.f32 0.0, %v1125
        %v1127 = vpop.f32.mrb[0].mxu0
        %1128 = vmatprep.mubr.bf16.mxu0 0
        %1129 = vmatmul.mubr.bf16.gmra.mrb[0].mxu0 %v846
        %v1130 = vpop.f32.mrb[0].mxu0
        %v1131 = vadd.f32 0.0, %v1130
        %v1132 = vpop.f32.mrb[0].mxu0
        %v1133 = vpop.f32.mrb[0].mxu0
        %v1134 = vadd.f32 0.0, %v1133
        %v1135 = vpop.f32.mrb[0].mxu0
        %1136 = vdwg.mxu0
        %v1201 = vunpack.c.l.b16 %v443
        %v1202 = vunpack.c.l.b16 %v444
        %v1203 = vunpack.c.l.b16 %v445
        %v1204 = vunpack.c.l.b16 %v446
        %v1205 = vunpack.c.l.b16 %v447
        %v1206 = vunpack.c.l.b16 %v448
        %v1207 = vunpack.c.l.b16 %v449
        %v1208 = vunpack.c.l.b16 %v450
        %v1209 = vunpack.c.l.b16 %v451
        %v1210 = vunpack.c.l.b16 %v452
        %v1211 = vunpack.c.l.b16 %v453
        %v1212 = vunpack.c.l.b16 %v454
        %v1213 = vunpack.c.l.b16 %v455
        %v1214 = vunpack.c.l.b16 %v456
        %v1215 = vunpack.c.l.b16 %v457
        %v1216 = vunpack.c.l.b16 %v458
        %v1217 = vunpack.c.l.b16 %v459
        %v1218 = vunpack.c.l.b16 %v460
        %v1219 = vunpack.c.l.b16 %v461
        %v1220 = vunpack.c.l.b16 %v462
        %v1221 = vunpack.c.l.b16 %v463
        %v1222 = vunpack.c.l.b16 %v464
        %v1223 = vunpack.c.l.b16 %v465
        %v1224 = vunpack.c.l.b16 %v466
        %v1225 = vunpack.c.l.b16 %v467
        %v1226 = vunpack.c.l.b16 %v468
        %v1227 = vunpack.c.l.b16 %v469
        %v1228 = vunpack.c.l.b16 %v470
        %v1229 = vunpack.c.l.b16 %v471
        %v1230 = vunpack.c.l.b16 %v472
        %v1231 = vunpack.c.l.b16 %v473
        %v1232 = vunpack.c.l.b16 %v474
        %v1233 = vunpack.c.l.b16 %v475
        %v1234 = vunpack.c.l.b16 %v476
        %v1235 = vunpack.c.l.b16 %v477
        %v1236 = vunpack.c.l.b16 %v478
        %v1237 = vunpack.c.l.b16 %v479
        %v1238 = vunpack.c.l.b16 %v480
        %v1239 = vunpack.c.l.b16 %v481
        %v1240 = vunpack.c.l.b16 %v482
        %v1241 = vunpack.c.l.b16 %v483
        %v1242 = vunpack.c.l.b16 %v484
        %v1243 = vunpack.c.l.b16 %v485
        %v1244 = vunpack.c.l.b16 %v486
        %v1245 = vunpack.c.l.b16 %v487
        %v1246 = vunpack.c.l.b16 %v488
        %v1247 = vunpack.c.l.b16 %v489
        %v1248 = vunpack.c.l.b16 %v490
        %v1249 = vunpack.c.l.b16 %v491
        %v1250 = vunpack.c.l.b16 %v492
        %v1251 = vunpack.c.l.b16 %v493
        %v1252 = vunpack.c.l.b16 %v494
        %v1253 = vunpack.c.l.b16 %v495
        %v1254 = vunpack.c.l.b16 %v496
        %v1255 = vunpack.c.l.b16 %v497
        %v1256 = vunpack.c.l.b16 %v498
        %v1257 = vunpack.c.l.b16 %v499
        %v1258 = vunpack.c.l.b16 %v500
        %v1259 = vunpack.c.l.b16 %v501
        %v1260 = vunpack.c.l.b16 %v502
        %v1261 = vunpack.c.l.b16 %v503
        %v1262 = vunpack.c.l.b16 %v504
        %v1263 = vunpack.c.l.b16 %v505
        %v1264 = vunpack.c.l.b16 %v506
        %v1265 = vpack.c.b16 %v1202, %v1201
        %v1266 = vpack.c.b16 %v1204, %v1203
        %v1267 = vpack.c.b16 %v1206, %v1205
        %v1268 = vpack.c.b16 %v1208, %v1207
        %v1269 = vpack.c.b16 %v1210, %v1209
        %v1270 = vpack.c.b16 %v1212, %v1211
        %v1271 = vpack.c.b16 %v1214, %v1213
        %v1272 = vpack.c.b16 %v1216, %v1215
        %v1273 = vpack.c.b16 %v1218, %v1217
        %v1274 = vpack.c.b16 %v1220, %v1219
        %v1275 = vpack.c.b16 %v1222, %v1221
        %v1276 = vpack.c.b16 %v1224, %v1223
        %v1277 = vpack.c.b16 %v1226, %v1225
        %v1278 = vpack.c.b16 %v1228, %v1227
        %v1279 = vpack.c.b16 %v1230, %v1229
        %v1280 = vpack.c.b16 %v1232, %v1231
        %v1281 = vpack.c.b16 %v1234, %v1233
        %v1282 = vpack.c.b16 %v1236, %v1235
        %v1283 = vpack.c.b16 %v1238, %v1237
        %v1284 = vpack.c.b16 %v1240, %v1239
        %v1285 = vpack.c.b16 %v1242, %v1241
        %v1286 = vpack.c.b16 %v1244, %v1243
        %v1287 = vpack.c.b16 %v1246, %v1245
        %v1288 = vpack.c.b16 %v1248, %v1247
        %v1289 = vpack.c.b16 %v1250, %v1249
        %v1290 = vpack.c.b16 %v1252, %v1251
        %v1291 = vpack.c.b16 %v1254, %v1253
        %v1292 = vpack.c.b16 %v1256, %v1255
        %v1293 = vpack.c.b16 %v1258, %v1257
        %v1294 = vpack.c.b16 %v1260, %v1259
        %v1295 = vpack.c.b16 %v1262, %v1261
        %v1296 = vpack.c.b16 %v1264, %v1263
        %v1301 = vunpack.c.l.b16 %v507
        %v1302 = vunpack.c.l.b16 %v508
        %v1303 = vunpack.c.l.b16 %v509
        %v1304 = vunpack.c.l.b16 %v510
        %v1305 = vpack.c.b16 %v1302, %v1301
        %v1306 = vpack.c.b16 %v1304, %v1303
        %v1310 = vsel %vm751, %v1265, 0
        %v1313 = vsel %vm751, %v1266, 0
        %v1316 = vsel %vm751, %v1267, 0
        %v1319 = vsel %vm751, %v1268, 0
        %v1322 = vsel %vm751, %v1269, 0
        %v1325 = vsel %vm751, %v1270, 0
        %v1328 = vsel %vm751, %v1271, 0
        %v1331 = vsel %vm751, %v1272, 0
        %v1334 = vsel %vm751, %v1273, 0
        %v1337 = vsel %vm751, %v1274, 0
        %v1340 = vsel %vm751, %v1275, 0
        %v1343 = vsel %vm751, %v1276, 0
        %v1346 = vsel %vm751, %v1277, 0
        %v1349 = vsel %vm751, %v1278, 0
        %v1352 = vsel %vm751, %v1279, 0
        %v1355 = vsel %vm751, %v1280, 0
        %v1358 = vsel %vm751, %v1281, 0
        %v1361 = vsel %vm751, %v1282, 0
        %v1364 = vsel %vm751, %v1283, 0
        %v1367 = vsel %vm751, %v1284, 0
        %v1370 = vsel %vm751, %v1285, 0
        %v1373 = vsel %vm751, %v1286, 0
        %v1376 = vsel %vm751, %v1287, 0
        %v1379 = vsel %vm751, %v1288, 0
        %v1382 = vsel %vm751, %v1289, 0
        %v1385 = vsel %vm751, %v1290, 0
        %v1388 = vsel %vm751, %v1291, 0
        %v1391 = vsel %vm751, %v1292, 0
        %v1394 = vsel %vm751, %v1293, 0
        %v1397 = vsel %vm751, %v1294, 0
        %v1400 = vsel %vm751, %v1295, 0
        %v1403 = vsel %vm751, %v1296, 0
        %1405 = vmatprep.subr.bf16.mxu0 0
        %1406 = vmatpush1.bf16.msra.mxu0 %v1305
        %1407 = vmatprep.subr.bf16.mxu0 0
        %1408 = vmatpush1.bf16.msra.mxu0 %v1306
        %1409 = vmatprep.subr.bf16.mxu0 0
        %1410 = vmatpush1.bf16.msra.mxu0 0
        %1411 = vmatprep.subr.bf16.mxu0 0
        %1412 = vmatpush1.bf16.msra.mxu0 0
        %1413 = vmatprep.subr.bf16.mxu0 0
        %1414 = vmatpush1.bf16.msra.mxu0 0
        %1415 = vmatprep.subr.bf16.mxu0 0
        %1416 = vmatpush1.bf16.msra.mxu0 0
        %1417 = vmatprep.subr.bf16.mxu0 0
        %1418 = vmatpush1.bf16.msra.mxu0 0
        %1419 = vmatprep.subr.bf16.mxu0 0
        %1420 = vmatpush1.bf16.msra.mxu0 0
        %1421 = vmatprep.subr.bf16.mxu0 0
        %1422 = vmatpush1.bf16.msra.mxu0 0
        %1423 = vmatprep.subr.bf16.mxu0 0
        %1424 = vmatpush1.bf16.msra.mxu0 0
        %1425 = vmatprep.subr.bf16.mxu0 0
        %1426 = vmatpush1.bf16.msra.mxu0 0
        %1427 = vmatprep.subr.bf16.mxu0 0
        %1428 = vmatpush1.bf16.msra.mxu0 0
        %1429 = vmatprep.subr.bf16.mxu0 0
        %1430 = vmatpush1.bf16.msra.mxu0 0
        %1431 = vmatprep.subr.bf16.mxu0 0
        %1432 = vmatpush1.bf16.msra.mxu0 0
        %1433 = vmatprep.subr.bf16.mxu0 0
        %1434 = vmatpush1.bf16.msra.mxu0 0
        %1435 = vmatprep.subr.bf16.mxu0 0
        %1436 = vmatpush1.bf16.msra.mxu0 0
        %1437 = vmatprep.mubr.bf16.mxu0 0
        %1438 = vmatmul.mubr.bf16.gmra.mrb[0].mxu0 %v1310
        %v1439 = vpop.f32.mrb[0].mxu0
        %v1440 = vadd.f32 %v883, %v1439
        %v1441 = vpop.f32.mrb[0].mxu0
        %v1442 = vpop.f32.mrb[0].mxu0
        %v1443 = vadd.f32 %v886, %v1442
        %v1444 = vpop.f32.mrb[0].mxu0
        %1445 = vmatprep.mubr.bf16.mxu0 0
        %1446 = vmatmul.mubr.bf16.gmra.mrb[0].mxu0 %v1313
        %v1447 = vpop.f32.mrb[0].mxu0
        %v1448 = vadd.f32 %v891, %v1447
        %v1449 = vpop.f32.mrb[0].mxu0
        %v1450 = vpop.f32.mrb[0].mxu0
        %v1451 = vadd.f32 %v894, %v1450
        %v1452 = vpop.f32.mrb[0].mxu0
        %1453 = vmatprep.mubr.bf16.mxu0 0
        %1454 = vmatmul.mubr.bf16.gmra.mrb[0].mxu0 %v1316
        %v1455 = vpop.f32.mrb[0].mxu0
        %v1456 = vadd.f32 %v899, %v1455
        %v1457 = vpop.f32.mrb[0].mxu0
        %v1458 = vpop.f32.mrb[0].mxu0
        %v1459 = vadd.f32 %v902, %v1458
        %v1460 = vpop.f32.mrb[0].mxu0
        %1461 = vmatprep.mubr.bf16.mxu0 0
        %1462 = vmatmul.mubr.bf16.gmra.mrb[0].mxu0 %v1319
        %v1463 = vpop.f32.mrb[0].mxu0
        %v1464 = vadd.f32 %v907, %v1463
        %v1465 = vpop.f32.mrb[0].mxu0
        %v1466 = vpop.f32.mrb[0].mxu0
        %v1467 = vadd.f32 %v910, %v1466
        %v1468 = vpop.f32.mrb[0].mxu0
        %1469 = vmatprep.mubr.bf16.mxu0 0
        %1470 = vmatmul.mubr.bf16.gmra.mrb[0].mxu0 %v1322
        %v1471 = vpop.f32.mrb[0].mxu0
        %v1472 = vadd.f32 %v915, %v1471
        %v1473 = vpop.f32.mrb[0].mxu0
        %v1474 = vpop.f32.mrb[0].mxu0
        %v1475 = vadd.f32 %v918, %v1474
        %v1476 = vpop.f32.mrb[0].mxu0
        %1477 = vmatprep.mubr.bf16.mxu0 0
        %1478 = vmatmul.mubr.bf16.gmra.mrb[0].mxu0 %v1325
        %v1479 = vpop.f32.mrb[0].mxu0
        %v1480 = vadd.f32 %v923, %v1479
        %v1481 = vpop.f32.mrb[0].mxu0
        %v1482 = vpop.f32.mrb[0].mxu0
        %v1483 = vadd.f32 %v926, %v1482
        %v1484 = vpop.f32.mrb[0].mxu0
        %1485 = vmatprep.mubr.bf16.mxu0 0
        %1486 = vmatmul.mubr.bf16.gmra.mrb[0].mxu0 %v1328
        %v1487 = vpop.f32.mrb[0].mxu0
        %v1488 = vadd.f32 %v931, %v1487
        %v1489 = vpop.f32.mrb[0].mxu0
        %v1490 = vpop.f32.mrb[0].mxu0
        %v1491 = vadd.f32 %v934, %v1490
        %v1492 = vpop.f32.mrb[0].mxu0
        %1493 = vmatprep.mubr.bf16.mxu0 0
        %1494 = vmatmul.mubr.bf16.gmra.mrb[0].mxu0 %v1331
        %v1495 = vpop.f32.mrb[0].mxu0
        %v1496 = vadd.f32 %v939, %v1495
        %v1497 = vpop.f32.mrb[0].mxu0
        %v1498 = vpop.f32.mrb[0].mxu0
        %v1499 = vadd.f32 %v942, %v1498
        %v1500 = vpop.f32.mrb[0].mxu0
        %1501 = vmatprep.mubr.bf16.mxu0 0
        %1502 = vmatmul.mubr.bf16.gmra.mrb[0].mxu0 %v1334
        %v1503 = vpop.f32.mrb[0].mxu0
        %v1504 = vadd.f32 %v947, %v1503
        %v1505 = vpop.f32.mrb[0].mxu0
        %v1506 = vpop.f32.mrb[0].mxu0
        %v1507 = vadd.f32 %v950, %v1506
        %v1508 = vpop.f32.mrb[0].mxu0
        %1509 = vmatprep.mubr.bf16.mxu0 0
        %1510 = vmatmul.mubr.bf16.gmra.mrb[0].mxu0 %v1337
        %v1511 = vpop.f32.mrb[0].mxu0
        %v1512 = vadd.f32 %v955, %v1511
        %v1513 = vpop.f32.mrb[0].mxu0
        %v1514 = vpop.f32.mrb[0].mxu0
        %v1515 = vadd.f32 %v958, %v1514
        %v1516 = vpop.f32.mrb[0].mxu0
        %1517 = vmatprep.mubr.bf16.mxu0 0
        %1518 = vmatmul.mubr.bf16.gmra.mrb[0].mxu0 %v1340
        %v1519 = vpop.f32.mrb[0].mxu0
        %v1520 = vadd.f32 %v963, %v1519
        %v1521 = vpop.f32.mrb[0].mxu0
        %v1522 = vpop.f32.mrb[0].mxu0
        %v1523 = vadd.f32 %v966, %v1522
        %v1524 = vpop.f32.mrb[0].mxu0
        %1525 = vmatprep.mubr.bf16.mxu0 0
        %1526 = vmatmul.mubr.bf16.gmra.mrb[0].mxu0 %v1343
        %v1527 = vpop.f32.mrb[0].mxu0
        %v1528 = vadd.f32 %v971, %v1527
        %v1529 = vpop.f32.mrb[0].mxu0
        %v1530 = vpop.f32.mrb[0].mxu0
        %v1531 = vadd.f32 %v974, %v1530
        %v1532 = vpop.f32.mrb[0].mxu0
        %1533 = vmatprep.mubr.bf16.mxu0 0
        %1534 = vmatmul.mubr.bf16.gmra.mrb[0].mxu0 %v1346
        %v1535 = vpop.f32.mrb[0].mxu0
        %v1536 = vadd.f32 %v979, %v1535
        %v1537 = vpop.f32.mrb[0].mxu0
        %v1538 = vpop.f32.mrb[0].mxu0
        %v1539 = vadd.f32 %v982, %v1538
        %v1540 = vpop.f32.mrb[0].mxu0
        %1541 = vmatprep.mubr.bf16.mxu0 0
        %1542 = vmatmul.mubr.bf16.gmra.mrb[0].mxu0 %v1349
        %v1543 = vpop.f32.mrb[0].mxu0
        %v1544 = vadd.f32 %v987, %v1543
        %v1545 = vpop.f32.mrb[0].mxu0
        %v1546 = vpop.f32.mrb[0].mxu0
        %v1547 = vadd.f32 %v990, %v1546
        %v1548 = vpop.f32.mrb[0].mxu0
        %1549 = vmatprep.mubr.bf16.mxu0 0
        %1550 = vmatmul.mubr.bf16.gmra.mrb[0].mxu0 %v1352
        %v1551 = vpop.f32.mrb[0].mxu0
        %v1552 = vadd.f32 %v995, %v1551
        %v1553 = vpop.f32.mrb[0].mxu0
        %v1554 = vpop.f32.mrb[0].mxu0
        %v1555 = vadd.f32 %v998, %v1554
        %v1556 = vpop.f32.mrb[0].mxu0
        %1557 = vmatprep.mubr.bf16.mxu0 0
        %1558 = vmatmul.mubr.bf16.gmra.mrb[0].mxu0 %v1355
        %v1559 = vpop.f32.mrb[0].mxu0
        %v1560 = vadd.f32 %v1003, %v1559
        %v1561 = vpop.f32.mrb[0].mxu0
        %v1562 = vpop.f32.mrb[0].mxu0
        %v1563 = vadd.f32 %v1006, %v1562
        %v1564 = vpop.f32.mrb[0].mxu0
        %1565 = vmatprep.mubr.bf16.mxu0 0
        %1566 = vmatmul.mubr.bf16.gmra.mrb[0].mxu0 %v1358
        %v1567 = vpop.f32.mrb[0].mxu0
        %v1568 = vadd.f32 %v1011, %v1567
        %v1569 = vpop.f32.mrb[0].mxu0
        %v1570 = vpop.f32.mrb[0].mxu0
        %v1571 = vadd.f32 %v1014, %v1570
        %v1572 = vpop.f32.mrb[0].mxu0
        %1573 = vmatprep.mubr.bf16.mxu0 0
        %1574 = vmatmul.mubr.bf16.gmra.mrb[0].mxu0 %v1361
        %v1575 = vpop.f32.mrb[0].mxu0
        %v1576 = vadd.f32 %v1019, %v1575
        %v1577 = vpop.f32.mrb[0].mxu0
        %v1578 = vpop.f32.mrb[0].mxu0
        %v1579 = vadd.f32 %v1022, %v1578
        %v1580 = vpop.f32.mrb[0].mxu0
        %1581 = vmatprep.mubr.bf16.mxu0 0
        %1582 = vmatmul.mubr.bf16.gmra.mrb[0].mxu0 %v1364
        %v1583 = vpop.f32.mrb[0].mxu0
        %v1584 = vadd.f32 %v1027, %v1583
        %v1585 = vpop.f32.mrb[0].mxu0
        %v1586 = vpop.f32.mrb[0].mxu0
        %v1587 = vadd.f32 %v1030, %v1586
        %v1588 = vpop.f32.mrb[0].mxu0
        %1589 = vmatprep.mubr.bf16.mxu0 0
        %1590 = vmatmul.mubr.bf16.gmra.mrb[0].mxu0 %v1367
        %v1591 = vpop.f32.mrb[0].mxu0
        %v1592 = vadd.f32 %v1035, %v1591
        %v1593 = vpop.f32.mrb[0].mxu0
        %v1594 = vpop.f32.mrb[0].mxu0
        %v1595 = vadd.f32 %v1038, %v1594
        %v1596 = vpop.f32.mrb[0].mxu0
        %1597 = vmatprep.mubr.bf16.mxu0 0
        %1598 = vmatmul.mubr.bf16.gmra.mrb[0].mxu0 %v1370
        %v1599 = vpop.f32.mrb[0].mxu0
        %v1600 = vadd.f32 %v1043, %v1599
        %v1601 = vpop.f32.mrb[0].mxu0
        %v1602 = vpop.f32.mrb[0].mxu0
        %v1603 = vadd.f32 %v1046, %v1602
        %v1604 = vpop.f32.mrb[0].mxu0
        %1605 = vmatprep.mubr.bf16.mxu0 0
        %1606 = vmatmul.mubr.bf16.gmra.mrb[0].mxu0 %v1373
        %v1607 = vpop.f32.mrb[0].mxu0
        %v1608 = vadd.f32 %v1051, %v1607
        %v1609 = vpop.f32.mrb[0].mxu0
        %v1610 = vpop.f32.mrb[0].mxu0
        %v1611 = vadd.f32 %v1054, %v1610
        %v1612 = vpop.f32.mrb[0].mxu0
        %1613 = vmatprep.mubr.bf16.mxu0 0
        %1614 = vmatmul.mubr.bf16.gmra.mrb[0].mxu0 %v1376
        %v1615 = vpop.f32.mrb[0].mxu0
        %v1616 = vadd.f32 %v1059, %v1615
        %v1617 = vpop.f32.mrb[0].mxu0
        %v1618 = vpop.f32.mrb[0].mxu0
        %v1619 = vadd.f32 %v1062, %v1618
        %v1620 = vpop.f32.mrb[0].mxu0
        %1621 = vmatprep.mubr.bf16.mxu0 0
        %1622 = vmatmul.mubr.bf16.gmra.mrb[0].mxu0 %v1379
        %v1623 = vpop.f32.mrb[0].mxu0
        %v1624 = vadd.f32 %v1067, %v1623
        %v1625 = vpop.f32.mrb[0].mxu0
        %v1626 = vpop.f32.mrb[0].mxu0
        %v1627 = vadd.f32 %v1070, %v1626
        %v1628 = vpop.f32.mrb[0].mxu0
        %1629 = vmatprep.mubr.bf16.mxu0 0
        %1630 = vmatmul.mubr.bf16.gmra.mrb[0].mxu0 %v1382
        %v1631 = vpop.f32.mrb[0].mxu0
        %v1632 = vadd.f32 %v1075, %v1631
        %v1633 = vpop.f32.mrb[0].mxu0
        %v1634 = vpop.f32.mrb[0].mxu0
        %v1635 = vadd.f32 %v1078, %v1634
        %v1636 = vpop.f32.mrb[0].mxu0
        %1637 = vmatprep.mubr.bf16.mxu0 0
        %1638 = vmatmul.mubr.bf16.gmra.mrb[0].mxu0 %v1385
        %v1639 = vpop.f32.mrb[0].mxu0
        %v1640 = vadd.f32 %v1083, %v1639
        %v1641 = vpop.f32.mrb[0].mxu0
        %v1642 = vpop.f32.mrb[0].mxu0
        %v1643 = vadd.f32 %v1086, %v1642
        %v1644 = vpop.f32.mrb[0].mxu0
        %1645 = vmatprep.mubr.bf16.mxu0 0
        %1646 = vmatmul.mubr.bf16.gmra.mrb[0].mxu0 %v1388
        %v1647 = vpop.f32.mrb[0].mxu0
        %v1648 = vadd.f32 %v1091, %v1647
        %v1649 = vpop.f32.mrb[0].mxu0
        %v1650 = vpop.f32.mrb[0].mxu0
        %v1651 = vadd.f32 %v1094, %v1650
        %v1652 = vpop.f32.mrb[0].mxu0
        %1653 = vmatprep.mubr.bf16.mxu0 0
        %1654 = vmatmul.mubr.bf16.gmra.mrb[0].mxu0 %v1391
        %v1655 = vpop.f32.mrb[0].mxu0
        %v1656 = vadd.f32 %v1099, %v1655
        %v1657 = vpop.f32.mrb[0].mxu0
        %v1658 = vpop.f32.mrb[0].mxu0
        %v1659 = vadd.f32 %v1102, %v1658
        %v1660 = vpop.f32.mrb[0].mxu0
        %1661 = vmatprep.mubr.bf16.mxu0 0
        %1662 = vmatmul.mubr.bf16.gmra.mrb[0].mxu0 %v1394
        %v1663 = vpop.f32.mrb[0].mxu0
        %v1664 = vadd.f32 %v1107, %v1663
        %v1665 = vpop.f32.mrb[0].mxu0
        %v1666 = vpop.f32.mrb[0].mxu0
        %v1667 = vadd.f32 %v1110, %v1666
        %v1668 = vpop.f32.mrb[0].mxu0
        %1669 = vmatprep.mubr.bf16.mxu0 0
        %1670 = vmatmul.mubr.bf16.gmra.mrb[0].mxu0 %v1397
        %v1671 = vpop.f32.mrb[0].mxu0
        %v1672 = vadd.f32 %v1115, %v1671
        %v1673 = vpop.f32.mrb[0].mxu0
        %v1674 = vpop.f32.mrb[0].mxu0
        %v1675 = vadd.f32 %v1118, %v1674
        %v1676 = vpop.f32.mrb[0].mxu0
        %1677 = vmatprep.mubr.bf16.mxu0 0
        %1678 = vmatmul.mubr.bf16.gmra.mrb[0].mxu0 %v1400
        %v1679 = vpop.f32.mrb[0].mxu0
        %v1680 = vadd.f32 %v1123, %v1679
        %v1681 = vpop.f32.mrb[0].mxu0
        %v1682 = vpop.f32.mrb[0].mxu0
        %v1683 = vadd.f32 %v1126, %v1682
        %v1684 = vpop.f32.mrb[0].mxu0
        %1685 = vmatprep.mubr.bf16.mxu0 0
        %1686 = vmatmul.mubr.bf16.gmra.mrb[0].mxu0 %v1403
        %v1687 = vpop.f32.mrb[0].mxu0
        %v1688 = vadd.f32 %v1131, %v1687
        %v1689 = vpop.f32.mrb[0].mxu0
        %v1690 = vpop.f32.mrb[0].mxu0
        %v1691 = vadd.f32 %v1134, %v1690
        %v1692 = vpop.f32.mrb[0].mxu0
        %1693 = vdwg.mxu0
        %v1694 = vld [vmem:[#allocation7] sm:$0x1]
        %v1696 = vlaneseq
        %v1697 = vshrl.u32 %v1696, 7
        %v1698 = vsub.s32 0, %v1697
        %v1699 = vrot.slane %v1694, %v1698
        %v1701 = vadd.f32 %v1440, %v1699
        %v1702 = vadd.f32 %v1443, %v1699
        %v1703 = vadd.f32 %v1448, %v1699
        %v1704 = vadd.f32 %v1451, %v1699
        %v1705 = vadd.f32 %v1456, %v1699
        %v1706 = vadd.f32 %v1459, %v1699
        %v1707 = vadd.f32 %v1464, %v1699
        %v1708 = vadd.f32 %v1467, %v1699
        %v1709 = vadd.f32 %v1472, %v1699
        %v1710 = vadd.f32 %v1475, %v1699
        %v1711 = vadd.f32 %v1480, %v1699
        %v1712 = vadd.f32 %v1483, %v1699
        %v1713 = vadd.f32 %v1488, %v1699
        %v1714 = vadd.f32 %v1491, %v1699
        %v1715 = vadd.f32 %v1496, %v1699
        %v1716 = vadd.f32 %v1499, %v1699
        %v1717 = vadd.f32 %v1504, %v1699
        %v1718 = vadd.f32 %v1507, %v1699
        %v1719 = vadd.f32 %v1512, %v1699
        %v1720 = vadd.f32 %v1515, %v1699
        %v1721 = vadd.f32 %v1520, %v1699
        %v1722 = vadd.f32 %v1523, %v1699
        %v1723 = vadd.f32 %v1528, %v1699
        %v1724 = vadd.f32 %v1531, %v1699
        %v1725 = vadd.f32 %v1536, %v1699
        %v1726 = vadd.f32 %v1539, %v1699
        %v1727 = vadd.f32 %v1544, %v1699
        %v1728 = vadd.f32 %v1547, %v1699
        %v1729 = vadd.f32 %v1552, %v1699
        %v1730 = vadd.f32 %v1555, %v1699
        %v1731 = vadd.f32 %v1560, %v1699
        %v1732 = vadd.f32 %v1563, %v1699
        %v1733 = vadd.f32 %v1568, %v1699
        %v1734 = vadd.f32 %v1571, %v1699
        %v1735 = vadd.f32 %v1576, %v1699
        %v1736 = vadd.f32 %v1579, %v1699
        %v1737 = vadd.f32 %v1584, %v1699
        %v1738 = vadd.f32 %v1587, %v1699
        %v1739 = vadd.f32 %v1592, %v1699
        %v1740 = vadd.f32 %v1595, %v1699
        %v1741 = vadd.f32 %v1600, %v1699
        %v1742 = vadd.f32 %v1603, %v1699
        %v1743 = vadd.f32 %v1608, %v1699
        %v1744 = vadd.f32 %v1611, %v1699
        %v1745 = vadd.f32 %v1616, %v1699
        %v1746 = vadd.f32 %v1619, %v1699
        %v1747 = vadd.f32 %v1624, %v1699
        %v1748 = vadd.f32 %v1627, %v1699
        %v1749 = vadd.f32 %v1632, %v1699
        %v1750 = vadd.f32 %v1635, %v1699
        %v1751 = vadd.f32 %v1640, %v1699
        %v1752 = vadd.f32 %v1643, %v1699
        %v1753 = vadd.f32 %v1648, %v1699
        %v1754 = vadd.f32 %v1651, %v1699
        %v1755 = vadd.f32 %v1656, %v1699
        %v1756 = vadd.f32 %v1659, %v1699
        %v1757 = vadd.f32 %v1664, %v1699
        %v1758 = vadd.f32 %v1667, %v1699
        %v1759 = vadd.f32 %v1672, %v1699
        %v1760 = vadd.f32 %v1675, %v1699
        %v1761 = vadd.f32 %v1680, %v1699
        %v1762 = vadd.f32 %v1683, %v1699
        %v1763 = vadd.f32 %v1688, %v1699
        %v1764 = vadd.f32 %v1691, %v1699
        %v1765 = vmax.f32 %v1701, 0.0
        %v1766 = vmax.f32 %v1702, 0.0
        %v1767 = vmax.f32 %v1703, 0.0
        %v1768 = vmax.f32 %v1704, 0.0
        %v1769 = vmax.f32 %v1705, 0.0
        %v1770 = vmax.f32 %v1706, 0.0
        %v1771 = vmax.f32 %v1707, 0.0
        %v1772 = vmax.f32 %v1708, 0.0
        %v1773 = vmax.f32 %v1709, 0.0
        %v1774 = vmax.f32 %v1710, 0.0
        %v1775 = vmax.f32 %v1711, 0.0
        %v1776 = vmax.f32 %v1712, 0.0
        %v1777 = vmax.f32 %v1713, 0.0
        %v1778 = vmax.f32 %v1714, 0.0
        %v1779 = vmax.f32 %v1715, 0.0
        %v1780 = vmax.f32 %v1716, 0.0
        %v1781 = vmax.f32 %v1717, 0.0
        %v1782 = vmax.f32 %v1718, 0.0
        %v1783 = vmax.f32 %v1719, 0.0
        %v1784 = vmax.f32 %v1720, 0.0
        %v1785 = vmax.f32 %v1721, 0.0
        %v1786 = vmax.f32 %v1722, 0.0
        %v1787 = vmax.f32 %v1723, 0.0
        %v1788 = vmax.f32 %v1724, 0.0
        %v1789 = vmax.f32 %v1725, 0.0
        %v1790 = vmax.f32 %v1726, 0.0
        %v1791 = vmax.f32 %v1727, 0.0
        %v1792 = vmax.f32 %v1728, 0.0
        %v1793 = vmax.f32 %v1729, 0.0
        %v1794 = vmax.f32 %v1730, 0.0
        %v1795 = vmax.f32 %v1731, 0.0
        %v1796 = vmax.f32 %v1732, 0.0
        %v1797 = vmax.f32 %v1733, 0.0
        %v1798 = vmax.f32 %v1734, 0.0
        %v1799 = vmax.f32 %v1735, 0.0
        %v1800 = vmax.f32 %v1736, 0.0
        %v1801 = vmax.f32 %v1737, 0.0
        %v1802 = vmax.f32 %v1738, 0.0
        %v1803 = vmax.f32 %v1739, 0.0
        %v1804 = vmax.f32 %v1740, 0.0
        %v1805 = vmax.f32 %v1741, 0.0
        %v1806 = vmax.f32 %v1742, 0.0
        %v1807 = vmax.f32 %v1743, 0.0
        %v1808 = vmax.f32 %v1744, 0.0
        %v1809 = vmax.f32 %v1745, 0.0
        %v1810 = vmax.f32 %v1746, 0.0
        %v1811 = vmax.f32 %v1747, 0.0
        %v1812 = vmax.f32 %v1748, 0.0
        %v1813 = vmax.f32 %v1749, 0.0
        %v1814 = vmax.f32 %v1750, 0.0
        %v1815 = vmax.f32 %v1751, 0.0
        %v1816 = vmax.f32 %v1752, 0.0
        %v1817 = vmax.f32 %v1753, 0.0
        %v1818 = vmax.f32 %v1754, 0.0
        %v1819 = vmax.f32 %v1755, 0.0
        %v1820 = vmax.f32 %v1756, 0.0
        %v1821 = vmax.f32 %v1757, 0.0
        %v1822 = vmax.f32 %v1758, 0.0
        %v1823 = vmax.f32 %v1759, 0.0
        %v1824 = vmax.f32 %v1760, 0.0
        %v1825 = vmax.f32 %v1761, 0.0
        %v1826 = vmax.f32 %v1762, 0.0
        %v1827 = vmax.f32 %v1763, 0.0
        %v1828 = vmax.f32 %v1764, 0.0
        %v1829 = vpack.c.bf16 %v1766, %v1765
        %v1830 = vpack.c.bf16 %v1768, %v1767
        %v1831 = vpack.c.bf16 %v1770, %v1769
        %v1832 = vpack.c.bf16 %v1772, %v1771
        %v1833 = vpack.c.bf16 %v1774, %v1773
        %v1834 = vpack.c.bf16 %v1776, %v1775
        %v1835 = vpack.c.bf16 %v1778, %v1777
        %v1836 = vpack.c.bf16 %v1780, %v1779
        %v1837 = vpack.c.bf16 %v1782, %v1781
        %v1838 = vpack.c.bf16 %v1784, %v1783
        %v1839 = vpack.c.bf16 %v1786, %v1785
        %v1840 = vpack.c.bf16 %v1788, %v1787
        %v1841 = vpack.c.bf16 %v1790, %v1789
        %v1842 = vpack.c.bf16 %v1792, %v1791
        %v1843 = vpack.c.bf16 %v1794, %v1793
        %v1844 = vpack.c.bf16 %v1796, %v1795
        %v1845 = vpack.c.bf16 %v1798, %v1797
        %v1846 = vpack.c.bf16 %v1800, %v1799
        %v1847 = vpack.c.bf16 %v1802, %v1801
        %v1848 = vpack.c.bf16 %v1804, %v1803
        %v1849 = vpack.c.bf16 %v1806, %v1805
        %v1850 = vpack.c.bf16 %v1808, %v1807
        %v1851 = vpack.c.bf16 %v1810, %v1809
        %v1852 = vpack.c.bf16 %v1812, %v1811
        %v1853 = vpack.c.bf16 %v1814, %v1813
        %v1854 = vpack.c.bf16 %v1816, %v1815
        %v1855 = vpack.c.bf16 %v1818, %v1817
        %v1856 = vpack.c.bf16 %v1820, %v1819
        %v1857 = vpack.c.bf16 %v1822, %v1821
        %v1858 = vpack.c.bf16 %v1824, %v1823
        %v1859 = vpack.c.bf16 %v1826, %v1825
        %v1860 = vpack.c.bf16 %v1828, %v1827
        %v1861 = vld [vmem:[#allocation8] sm:$0xf]
        %v1862 = vld [vmem:[#allocation8 + $0x4] sm:$0xf]
        %v1863 = vld [vmem:[#allocation8 + $0x8] sm:$0xf]
        %v1864 = vld [vmem:[#allocation8 + $0xc] sm:$0xf]
        %v1865 = vld [vmem:[#allocation10] sm:$0x1]
        %v1867 = vlaneseq
        %v1868 = vshrl.u32 %v1867, 7
        %v1869 = vsub.s32 0, %v1868
        %v1870 = vrot.slane %v1865, %v1869
        %v1876 = vunpack.c.l.b16 %v1861
        %v1877 = vunpack.c.l.b16 %v1862
        %v1878 = vunpack.c.l.b16 %v1863
        %v1879 = vunpack.c.l.b16 %v1864
        %v1880 = vpack.c.b16 %v1877, %v1876
        %v1881 = vpack.c.b16 %v1879, %v1878
        %v1885 = vsel %vm751, %v1829, 0
        %v1888 = vsel %vm751, %v1830, 0
        %v1891 = vsel %vm751, %v1831, 0
        %v1894 = vsel %vm751, %v1832, 0
        %v1897 = vsel %vm751, %v1833, 0
        %v1900 = vsel %vm751, %v1834, 0
        %v1903 = vsel %vm751, %v1835, 0
        %v1906 = vsel %vm751, %v1836, 0
        %v1909 = vsel %vm751, %v1837, 0
        %v1912 = vsel %vm751, %v1838, 0
        %v1915 = vsel %vm751, %v1839, 0
        %v1918 = vsel %vm751, %v1840, 0
        %v1921 = vsel %vm751, %v1841, 0
        %v1924 = vsel %vm751, %v1842, 0
        %v1927 = vsel %vm751, %v1843, 0
        %v1930 = vsel %vm751, %v1844, 0
        %v1933 = vsel %vm751, %v1845, 0
        %v1936 = vsel %vm751, %v1846, 0
        %v1939 = vsel %vm751, %v1847, 0
        %v1942 = vsel %vm751, %v1848, 0
        %v1945 = vsel %vm751, %v1849, 0
        %v1948 = vsel %vm751, %v1850, 0
        %v1951 = vsel %vm751, %v1851, 0
        %v1954 = vsel %vm751, %v1852, 0
        %v1957 = vsel %vm751, %v1853, 0
        %v1960 = vsel %vm751, %v1854, 0
        %v1963 = vsel %vm751, %v1855, 0
        %v1966 = vsel %vm751, %v1856, 0
        %v1969 = vsel %vm751, %v1857, 0
        %v1972 = vsel %vm751, %v1858, 0
        %v1975 = vsel %vm751, %v1859, 0
        %v1978 = vsel %vm751, %v1860, 0
        %1980 = vmatprep.subr.bf16.mxu0 0
        %1981 = vmatpush1.bf16.msra.mxu0 %v1880
        %1982 = vmatprep.subr.bf16.mxu0 0
        %1983 = vmatpush1.bf16.msra.mxu0 %v1881
        %1984 = vmatprep.subr.bf16.mxu0 0
        %1985 = vmatpush1.bf16.msra.mxu0 0
        %1986 = vmatprep.subr.bf16.mxu0 0
        %1987 = vmatpush1.bf16.msra.mxu0 0
        %1988 = vmatprep.subr.bf16.mxu0 0
        %1989 = vmatpush1.bf16.msra.mxu0 0
        %1990 = vmatprep.subr.bf16.mxu0 0
        %1991 = vmatpush1.bf16.msra.mxu0 0
        %1992 = vmatprep.subr.bf16.mxu0 0
        %1993 = vmatpush1.bf16.msra.mxu0 0
        %1994 = vmatprep.subr.bf16.mxu0 0
        %1995 = vmatpush1.bf16.msra.mxu0 0
        %1996 = vmatprep.subr.bf16.mxu0 0
        %1997 = vmatpush1.bf16.msra.mxu0 0
        %1998 = vmatprep.subr.bf16.mxu0 0
        %1999 = vmatpush1.bf16.msra.mxu0 0
        %2000 = vmatprep.subr.bf16.mxu0 0
        %2001 = vmatpush1.bf16.msra.mxu0 0
        %2002 = vmatprep.subr.bf16.mxu0 0
        %2003 = vmatpush1.bf16.msra.mxu0 0
        %2004 = vmatprep.subr.bf16.mxu0 0
        %2005 = vmatpush1.bf16.msra.mxu0 0
        %2006 = vmatprep.subr.bf16.mxu0 0
        %2007 = vmatpush1.bf16.msra.mxu0 0
        %2008 = vmatprep.subr.bf16.mxu0 0
        %2009 = vmatpush1.bf16.msra.mxu0 0
        %2010 = vmatprep.subr.bf16.mxu0 0
        %2011 = vmatpush1.bf16.msra.mxu0 0
        %2012 = vmatprep.mubr.bf16.mxu0 0
        %2013 = vmatmul.mubr.bf16.gmra.mrb[0].mxu0 %v1885
        %v2014 = vpop.f32.mrb[0].mxu0
        %v2015 = vadd.f32 %v1870, %v2014
        %v2016 = vpop.f32.mrb[0].mxu0
        %v2017 = vpop.f32.mrb[0].mxu0
        %v2018 = vadd.f32 %v1870, %v2017
        %v2019 = vpop.f32.mrb[0].mxu0
        %2020 = vmatprep.mubr.bf16.mxu0 0
        %2021 = vmatmul.mubr.bf16.gmra.mrb[0].mxu0 %v1888
        %v2022 = vpop.f32.mrb[0].mxu0
        %v2023 = vadd.f32 %v1870, %v2022
        %v2024 = vpop.f32.mrb[0].mxu0
        %v2025 = vpop.f32.mrb[0].mxu0
        %v2026 = vadd.f32 %v1870, %v2025
        %v2027 = vpop.f32.mrb[0].mxu0
        %2028 = vmatprep.mubr.bf16.mxu0 0
        %2029 = vmatmul.mubr.bf16.gmra.mrb[0].mxu0 %v1891
        %v2030 = vpop.f32.mrb[0].mxu0
        %v2031 = vadd.f32 %v1870, %v2030
        %v2032 = vpop.f32.mrb[0].mxu0
        %v2033 = vpop.f32.mrb[0].mxu0
        %v2034 = vadd.f32 %v1870, %v2033
        %v2035 = vpop.f32.mrb[0].mxu0
        %2036 = vmatprep.mubr.bf16.mxu0 0
        %2037 = vmatmul.mubr.bf16.gmra.mrb[0].mxu0 %v1894
        %v2038 = vpop.f32.mrb[0].mxu0
        %v2039 = vadd.f32 %v1870, %v2038
        %v2040 = vpop.f32.mrb[0].mxu0
        %v2041 = vpop.f32.mrb[0].mxu0
        %v2042 = vadd.f32 %v1870, %v2041
        %v2043 = vpop.f32.mrb[0].mxu0
        %2044 = vmatprep.mubr.bf16.mxu0 0
        %2045 = vmatmul.mubr.bf16.gmra.mrb[0].mxu0 %v1897
        %v2046 = vpop.f32.mrb[0].mxu0
        %v2047 = vadd.f32 %v1870, %v2046
        %v2048 = vpop.f32.mrb[0].mxu0
        %v2049 = vpop.f32.mrb[0].mxu0
        %v2050 = vadd.f32 %v1870, %v2049
        %v2051 = vpop.f32.mrb[0].mxu0
        %2052 = vmatprep.mubr.bf16.mxu0 0
        %2053 = vmatmul.mubr.bf16.gmra.mrb[0].mxu0 %v1900
        %v2054 = vpop.f32.mrb[0].mxu0
        %v2055 = vadd.f32 %v1870, %v2054
        %v2056 = vpop.f32.mrb[0].mxu0
        %v2057 = vpop.f32.mrb[0].mxu0
        %v2058 = vadd.f32 %v1870, %v2057
        %v2059 = vpop.f32.mrb[0].mxu0
        %2060 = vmatprep.mubr.bf16.mxu0 0
        %2061 = vmatmul.mubr.bf16.gmra.mrb[0].mxu0 %v1903
        %v2062 = vpop.f32.mrb[0].mxu0
        %v2063 = vadd.f32 %v1870, %v2062
        %v2064 = vpop.f32.mrb[0].mxu0
        %v2065 = vpop.f32.mrb[0].mxu0
        %v2066 = vadd.f32 %v1870, %v2065
        %v2067 = vpop.f32.mrb[0].mxu0
        %2068 = vmatprep.mubr.bf16.mxu0 0
        %2069 = vmatmul.mubr.bf16.gmra.mrb[0].mxu0 %v1906
        %v2070 = vpop.f32.mrb[0].mxu0
        %v2071 = vadd.f32 %v1870, %v2070
        %v2072 = vpop.f32.mrb[0].mxu0
        %v2073 = vpop.f32.mrb[0].mxu0
        %v2074 = vadd.f32 %v1870, %v2073
        %v2075 = vpop.f32.mrb[0].mxu0
        %2076 = vmatprep.mubr.bf16.mxu0 0
        %2077 = vmatmul.mubr.bf16.gmra.mrb[0].mxu0 %v1909
        %v2078 = vpop.f32.mrb[0].mxu0
        %v2079 = vadd.f32 %v1870, %v2078
        %v2080 = vpop.f32.mrb[0].mxu0
        %v2081 = vpop.f32.mrb[0].mxu0
        %v2082 = vadd.f32 %v1870, %v2081
        %v2083 = vpop.f32.mrb[0].mxu0
        %2084 = vmatprep.mubr.bf16.mxu0 0
        %2085 = vmatmul.mubr.bf16.gmra.mrb[0].mxu0 %v1912
        %v2086 = vpop.f32.mrb[0].mxu0
        %v2087 = vadd.f32 %v1870, %v2086
        %v2088 = vpop.f32.mrb[0].mxu0
        %v2089 = vpop.f32.mrb[0].mxu0
        %v2090 = vadd.f32 %v1870, %v2089
        %v2091 = vpop.f32.mrb[0].mxu0
        %2092 = vmatprep.mubr.bf16.mxu0 0
        %2093 = vmatmul.mubr.bf16.gmra.mrb[0].mxu0 %v1915
        %v2094 = vpop.f32.mrb[0].mxu0
        %v2095 = vadd.f32 %v1870, %v2094
        %v2096 = vpop.f32.mrb[0].mxu0
        %v2097 = vpop.f32.mrb[0].mxu0
        %v2098 = vadd.f32 %v1870, %v2097
        %v2099 = vpop.f32.mrb[0].mxu0
        %2100 = vmatprep.mubr.bf16.mxu0 0
        %2101 = vmatmul.mubr.bf16.gmra.mrb[0].mxu0 %v1918
        %v2102 = vpop.f32.mrb[0].mxu0
        %v2103 = vadd.f32 %v1870, %v2102
        %v2104 = vpop.f32.mrb[0].mxu0
        %v2105 = vpop.f32.mrb[0].mxu0
        %v2106 = vadd.f32 %v1870, %v2105
        %v2107 = vpop.f32.mrb[0].mxu0
        %2108 = vmatprep.mubr.bf16.mxu0 0
        %2109 = vmatmul.mubr.bf16.gmra.mrb[0].mxu0 %v1921
        %v2110 = vpop.f32.mrb[0].mxu0
        %v2111 = vadd.f32 %v1870, %v2110
        %v2112 = vpop.f32.mrb[0].mxu0
        %v2113 = vpop.f32.mrb[0].mxu0
        %v2114 = vadd.f32 %v1870, %v2113
        %v2115 = vpop.f32.mrb[0].mxu0
        %2116 = vmatprep.mubr.bf16.mxu0 0
        %2117 = vmatmul.mubr.bf16.gmra.mrb[0].mxu0 %v1924
        %v2118 = vpop.f32.mrb[0].mxu0
        %v2119 = vadd.f32 %v1870, %v2118
        %v2120 = vpop.f32.mrb[0].mxu0
        %v2121 = vpop.f32.mrb[0].mxu0
        %v2122 = vadd.f32 %v1870, %v2121
        %v2123 = vpop.f32.mrb[0].mxu0
        %2124 = vmatprep.mubr.bf16.mxu0 0
        %2125 = vmatmul.mubr.bf16.gmra.mrb[0].mxu0 %v1927
        %v2126 = vpop.f32.mrb[0].mxu0
        %v2127 = vadd.f32 %v1870, %v2126
        %v2128 = vpop.f32.mrb[0].mxu0
        %v2129 = vpop.f32.mrb[0].mxu0
        %v2130 = vadd.f32 %v1870, %v2129
        %v2131 = vpop.f32.mrb[0].mxu0
        %2132 = vmatprep.mubr.bf16.mxu0 0
        %2133 = vmatmul.mubr.bf16.gmra.mrb[0].mxu0 %v1930
        %v2134 = vpop.f32.mrb[0].mxu0
        %v2135 = vadd.f32 %v1870, %v2134
        %v2136 = vpop.f32.mrb[0].mxu0
        %v2137 = vpop.f32.mrb[0].mxu0
        %v2138 = vadd.f32 %v1870, %v2137
        %v2139 = vpop.f32.mrb[0].mxu0
        %2140 = vmatprep.mubr.bf16.mxu0 0
        %2141 = vmatmul.mubr.bf16.gmra.mrb[0].mxu0 %v1933
        %v2142 = vpop.f32.mrb[0].mxu0
        %v2143 = vadd.f32 %v1870, %v2142
        %v2144 = vpop.f32.mrb[0].mxu0
        %v2145 = vpop.f32.mrb[0].mxu0
        %v2146 = vadd.f32 %v1870, %v2145
        %v2147 = vpop.f32.mrb[0].mxu0
        %2148 = vmatprep.mubr.bf16.mxu0 0
        %2149 = vmatmul.mubr.bf16.gmra.mrb[0].mxu0 %v1936
        %v2150 = vpop.f32.mrb[0].mxu0
        %v2151 = vadd.f32 %v1870, %v2150
        %v2152 = vpop.f32.mrb[0].mxu0
        %v2153 = vpop.f32.mrb[0].mxu0
        %v2154 = vadd.f32 %v1870, %v2153
        %v2155 = vpop.f32.mrb[0].mxu0
        %2156 = vmatprep.mubr.bf16.mxu0 0
        %2157 = vmatmul.mubr.bf16.gmra.mrb[0].mxu0 %v1939
        %v2158 = vpop.f32.mrb[0].mxu0
        %v2159 = vadd.f32 %v1870, %v2158
        %v2160 = vpop.f32.mrb[0].mxu0
        %v2161 = vpop.f32.mrb[0].mxu0
        %v2162 = vadd.f32 %v1870, %v2161
        %v2163 = vpop.f32.mrb[0].mxu0
        %2164 = vmatprep.mubr.bf16.mxu0 0
        %2165 = vmatmul.mubr.bf16.gmra.mrb[0].mxu0 %v1942
        %v2166 = vpop.f32.mrb[0].mxu0
        %v2167 = vadd.f32 %v1870, %v2166
        %v2168 = vpop.f32.mrb[0].mxu0
        %v2169 = vpop.f32.mrb[0].mxu0
        %v2170 = vadd.f32 %v1870, %v2169
        %v2171 = vpop.f32.mrb[0].mxu0
        %2172 = vmatprep.mubr.bf16.mxu0 0
        %2173 = vmatmul.mubr.bf16.gmra.mrb[0].mxu0 %v1945
        %v2174 = vpop.f32.mrb[0].mxu0
        %v2175 = vadd.f32 %v1870, %v2174
        %v2176 = vpop.f32.mrb[0].mxu0
        %v2177 = vpop.f32.mrb[0].mxu0
        %v2178 = vadd.f32 %v1870, %v2177
        %v2179 = vpop.f32.mrb[0].mxu0
        %2180 = vmatprep.mubr.bf16.mxu0 0
        %2181 = vmatmul.mubr.bf16.gmra.mrb[0].mxu0 %v1948
        %v2182 = vpop.f32.mrb[0].mxu0
        %v2183 = vadd.f32 %v1870, %v2182
        %v2184 = vpop.f32.mrb[0].mxu0
        %v2185 = vpop.f32.mrb[0].mxu0
        %v2186 = vadd.f32 %v1870, %v2185
        %v2187 = vpop.f32.mrb[0].mxu0
        %2188 = vmatprep.mubr.bf16.mxu0 0
        %2189 = vmatmul.mubr.bf16.gmra.mrb[0].mxu0 %v1951
        %v2190 = vpop.f32.mrb[0].mxu0
        %v2191 = vadd.f32 %v1870, %v2190
        %v2192 = vpop.f32.mrb[0].mxu0
        %v2193 = vpop.f32.mrb[0].mxu0
        %v2194 = vadd.f32 %v1870, %v2193
        %v2195 = vpop.f32.mrb[0].mxu0
        %2196 = vmatprep.mubr.bf16.mxu0 0
        %2197 = vmatmul.mubr.bf16.gmra.mrb[0].mxu0 %v1954
        %v2198 = vpop.f32.mrb[0].mxu0
        %v2199 = vadd.f32 %v1870, %v2198
        %v2200 = vpop.f32.mrb[0].mxu0
        %v2201 = vpop.f32.mrb[0].mxu0
        %v2202 = vadd.f32 %v1870, %v2201
        %v2203 = vpop.f32.mrb[0].mxu0
        %2204 = vmatprep.mubr.bf16.mxu0 0
        %2205 = vmatmul.mubr.bf16.gmra.mrb[0].mxu0 %v1957
        %v2206 = vpop.f32.mrb[0].mxu0
        %v2207 = vadd.f32 %v1870, %v2206
        %v2208 = vpop.f32.mrb[0].mxu0
        %v2209 = vpop.f32.mrb[0].mxu0
        %v2210 = vadd.f32 %v1870, %v2209
        %v2211 = vpop.f32.mrb[0].mxu0
        %2212 = vmatprep.mubr.bf16.mxu0 0
        %2213 = vmatmul.mubr.bf16.gmra.mrb[0].mxu0 %v1960
        %v2214 = vpop.f32.mrb[0].mxu0
        %v2215 = vadd.f32 %v1870, %v2214
        %v2216 = vpop.f32.mrb[0].mxu0
        %v2217 = vpop.f32.mrb[0].mxu0
        %v2218 = vadd.f32 %v1870, %v2217
        %v2219 = vpop.f32.mrb[0].mxu0
        %2220 = vmatprep.mubr.bf16.mxu0 0
        %2221 = vmatmul.mubr.bf16.gmra.mrb[0].mxu0 %v1963
        %v2222 = vpop.f32.mrb[0].mxu0
        %v2223 = vadd.f32 %v1870, %v2222
        %v2224 = vpop.f32.mrb[0].mxu0
        %v2225 = vpop.f32.mrb[0].mxu0
        %v2226 = vadd.f32 %v1870, %v2225
        %v2227 = vpop.f32.mrb[0].mxu0
        %2228 = vmatprep.mubr.bf16.mxu0 0
        %2229 = vmatmul.mubr.bf16.gmra.mrb[0].mxu0 %v1966
        %v2230 = vpop.f32.mrb[0].mxu0
        %v2231 = vadd.f32 %v1870, %v2230
        %v2232 = vpop.f32.mrb[0].mxu0
        %v2233 = vpop.f32.mrb[0].mxu0
        %v2234 = vadd.f32 %v1870, %v2233
        %v2235 = vpop.f32.mrb[0].mxu0
        %2236 = vmatprep.mubr.bf16.mxu0 0
        %2237 = vmatmul.mubr.bf16.gmra.mrb[0].mxu0 %v1969
        %v2238 = vpop.f32.mrb[0].mxu0
        %v2239 = vadd.f32 %v1870, %v2238
        %v2240 = vpop.f32.mrb[0].mxu0
        %v2241 = vpop.f32.mrb[0].mxu0
        %v2242 = vadd.f32 %v1870, %v2241
        %v2243 = vpop.f32.mrb[0].mxu0
        %2244 = vmatprep.mubr.bf16.mxu0 0
        %2245 = vmatmul.mubr.bf16.gmra.mrb[0].mxu0 %v1972
        %v2246 = vpop.f32.mrb[0].mxu0
        %v2247 = vadd.f32 %v1870, %v2246
        %v2248 = vpop.f32.mrb[0].mxu0
        %v2249 = vpop.f32.mrb[0].mxu0
        %v2250 = vadd.f32 %v1870, %v2249
        %v2251 = vpop.f32.mrb[0].mxu0
        %2252 = vmatprep.mubr.bf16.mxu0 0
        %2253 = vmatmul.mubr.bf16.gmra.mrb[0].mxu0 %v1975
        %v2254 = vpop.f32.mrb[0].mxu0
        %v2255 = vadd.f32 %v1870, %v2254
        %v2256 = vpop.f32.mrb[0].mxu0
        %v2257 = vpop.f32.mrb[0].mxu0
        %v2258 = vadd.f32 %v1870, %v2257
        %v2259 = vpop.f32.mrb[0].mxu0
        %2260 = vmatprep.mubr.bf16.mxu0 0
        %2261 = vmatmul.mubr.bf16.gmra.mrb[0].mxu0 %v1978
        %v2262 = vpop.f32.mrb[0].mxu0
        %v2263 = vadd.f32 %v1870, %v2262
        %v2264 = vpop.f32.mrb[0].mxu0
        %v2265 = vpop.f32.mrb[0].mxu0
        %v2266 = vadd.f32 %v1870, %v2265
        %v2267 = vpop.f32.mrb[0].mxu0
        %2268 = vdwg.mxu0
        %v2269 = vmax.f32 %v2015, 0.0
        %v2270 = vmax.f32 %v2018, 0.0
        %v2271 = vmax.f32 %v2023, 0.0
        %v2272 = vmax.f32 %v2026, 0.0
        %v2273 = vmax.f32 %v2031, 0.0
        %v2274 = vmax.f32 %v2034, 0.0
        %v2275 = vmax.f32 %v2039, 0.0
        %v2276 = vmax.f32 %v2042, 0.0
        %v2277 = vmax.f32 %v2047, 0.0
        %v2278 = vmax.f32 %v2050, 0.0
        %v2279 = vmax.f32 %v2055, 0.0
        %v2280 = vmax.f32 %v2058, 0.0
        %v2281 = vmax.f32 %v2063, 0.0
        %v2282 = vmax.f32 %v2066, 0.0
        %v2283 = vmax.f32 %v2071, 0.0
        %v2284 = vmax.f32 %v2074, 0.0
        %v2285 = vmax.f32 %v2079, 0.0
        %v2286 = vmax.f32 %v2082, 0.0
        %v2287 = vmax.f32 %v2087, 0.0
        %v2288 = vmax.f32 %v2090, 0.0
        %v2289 = vmax.f32 %v2095, 0.0
        %v2290 = vmax.f32 %v2098, 0.0
        %v2291 = vmax.f32 %v2103, 0.0
        %v2292 = vmax.f32 %v2106, 0.0
        %v2293 = vmax.f32 %v2111, 0.0
        %v2294 = vmax.f32 %v2114, 0.0
        %v2295 = vmax.f32 %v2119, 0.0
        %v2296 = vmax.f32 %v2122, 0.0
        %v2297 = vmax.f32 %v2127, 0.0
        %v2298 = vmax.f32 %v2130, 0.0
        %v2299 = vmax.f32 %v2135, 0.0
        %v2300 = vmax.f32 %v2138, 0.0
        %v2301 = vmax.f32 %v2143, 0.0
        %v2302 = vmax.f32 %v2146, 0.0
        %v2303 = vmax.f32 %v2151, 0.0
        %v2304 = vmax.f32 %v2154, 0.0
        %v2305 = vmax.f32 %v2159, 0.0
        %v2306 = vmax.f32 %v2162, 0.0
        %v2307 = vmax.f32 %v2167, 0.0
        %v2308 = vmax.f32 %v2170, 0.0
        %v2309 = vmax.f32 %v2175, 0.0
        %v2310 = vmax.f32 %v2178, 0.0
        %v2311 = vmax.f32 %v2183, 0.0
        %v2312 = vmax.f32 %v2186, 0.0
        %v2313 = vmax.f32 %v2191, 0.0
        %v2314 = vmax.f32 %v2194, 0.0
        %v2315 = vmax.f32 %v2199, 0.0
        %v2316 = vmax.f32 %v2202, 0.0
        %v2317 = vmax.f32 %v2207, 0.0
        %v2318 = vmax.f32 %v2210, 0.0
        %v2319 = vmax.f32 %v2215, 0.0
        %v2320 = vmax.f32 %v2218, 0.0
        %v2321 = vmax.f32 %v2223, 0.0
        %v2322 = vmax.f32 %v2226, 0.0
        %v2323 = vmax.f32 %v2231, 0.0
        %v2324 = vmax.f32 %v2234, 0.0
        %v2325 = vmax.f32 %v2239, 0.0
        %v2326 = vmax.f32 %v2242, 0.0
        %v2327 = vmax.f32 %v2247, 0.0
        %v2328 = vmax.f32 %v2250, 0.0
        %v2329 = vmax.f32 %v2255, 0.0
        %v2330 = vmax.f32 %v2258, 0.0
        %v2331 = vmax.f32 %v2263, 0.0
        %v2332 = vmax.f32 %v2266, 0.0
        %v2333 = vld [vmem:[#allocation11] sm:$0x1]
        %v2335 = vlaneseq
        %v2336 = vshrl.u32 %v2335, 7
        %v2337 = vsub.s32 0, %v2336
        %v2338 = vrot.slane %v2333, %v2337
        %v2340 = vmul.f32 %v2269, %v2338
        %v2341 = vmul.f32 %v2270, %v2338
        %v2342 = vmul.f32 %v2271, %v2338
        %v2343 = vmul.f32 %v2272, %v2338
        %v2344 = vmul.f32 %v2273, %v2338
        %v2345 = vmul.f32 %v2274, %v2338
        %v2346 = vmul.f32 %v2275, %v2338
        %v2347 = vmul.f32 %v2276, %v2338
        %v2348 = vmul.f32 %v2277, %v2338
        %v2349 = vmul.f32 %v2278, %v2338
        %v2350 = vmul.f32 %v2279, %v2338
        %v2351 = vmul.f32 %v2280, %v2338
        %v2352 = vmul.f32 %v2281, %v2338
        %v2353 = vmul.f32 %v2282, %v2338
        %v2354 = vmul.f32 %v2283, %v2338
        %v2355 = vmul.f32 %v2284, %v2338
        %v2356 = vmul.f32 %v2285, %v2338
        %v2357 = vmul.f32 %v2286, %v2338
        %v2358 = vmul.f32 %v2287, %v2338
        %v2359 = vmul.f32 %v2288, %v2338
        %v2360 = vmul.f32 %v2289, %v2338
        %v2361 = vmul.f32 %v2290, %v2338
        %v2362 = vmul.f32 %v2291, %v2338
        %v2363 = vmul.f32 %v2292, %v2338
        %v2364 = vmul.f32 %v2293, %v2338
        %v2365 = vmul.f32 %v2294, %v2338
        %v2366 = vmul.f32 %v2295, %v2338
        %v2367 = vmul.f32 %v2296, %v2338
        %v2368 = vmul.f32 %v2297, %v2338
        %v2369 = vmul.f32 %v2298, %v2338
        %v2370 = vmul.f32 %v2299, %v2338
        %v2371 = vmul.f32 %v2300, %v2338
        %v2372 = vmul.f32 %v2301, %v2338
        %v2373 = vmul.f32 %v2302, %v2338
        %v2374 = vmul.f32 %v2303, %v2338
        %v2375 = vmul.f32 %v2304, %v2338
        %v2376 = vmul.f32 %v2305, %v2338
        %v2377 = vmul.f32 %v2306, %v2338
        %v2378 = vmul.f32 %v2307, %v2338
        %v2379 = vmul.f32 %v2308, %v2338
        %v2380 = vmul.f32 %v2309, %v2338
        %v2381 = vmul.f32 %v2310, %v2338
        %v2382 = vmul.f32 %v2311, %v2338
        %v2383 = vmul.f32 %v2312, %v2338
        %v2384 = vmul.f32 %v2313, %v2338
        %v2385 = vmul.f32 %v2314, %v2338
        %v2386 = vmul.f32 %v2315, %v2338
        %v2387 = vmul.f32 %v2316, %v2338
        %v2388 = vmul.f32 %v2317, %v2338
        %v2389 = vmul.f32 %v2318, %v2338
        %v2390 = vmul.f32 %v2319, %v2338
        %v2391 = vmul.f32 %v2320, %v2338
        %v2392 = vmul.f32 %v2321, %v2338
        %v2393 = vmul.f32 %v2322, %v2338
        %v2394 = vmul.f32 %v2323, %v2338
        %v2395 = vmul.f32 %v2324, %v2338
        %v2396 = vmul.f32 %v2325, %v2338
        %v2397 = vmul.f32 %v2326, %v2338
        %v2398 = vmul.f32 %v2327, %v2338
        %v2399 = vmul.f32 %v2328, %v2338
        %v2400 = vmul.f32 %v2329, %v2338
        %v2401 = vmul.f32 %v2330, %v2338
        %v2402 = vmul.f32 %v2331, %v2338
        %v2403 = vmul.f32 %v2332, %v2338
        %v2404 = vsel %vm751, %v2340, 0.0
        %2405 = vadd.xlane.f32.xlu0 %v2404
        %v2406 = vpop.xlane.xlu0 %2405
        %v2407 = vsel %vm751, %v2341, 0.0
        %2408 = vadd.xlane.f32.xlu0 %v2407
        %v2409 = vpop.xlane.xlu0 %2408
        %v2410 = vsel %vm751, %v2342, 0.0
        %2411 = vadd.xlane.f32.xlu0 %v2410
        %v2412 = vpop.xlane.xlu0 %2411
        %v2413 = vsel %vm751, %v2343, 0.0
        %2414 = vadd.xlane.f32.xlu0 %v2413
        %v2415 = vpop.xlane.xlu0 %2414
        %v2416 = vsel %vm751, %v2344, 0.0
        %2417 = vadd.xlane.f32.xlu0 %v2416
        %v2418 = vpop.xlane.xlu0 %2417
        %v2419 = vsel %vm751, %v2345, 0.0
        %2420 = vadd.xlane.f32.xlu0 %v2419
        %v2421 = vpop.xlane.xlu0 %2420
        %v2422 = vsel %vm751, %v2346, 0.0
        %2423 = vadd.xlane.f32.xlu0 %v2422
        %v2424 = vpop.xlane.xlu0 %2423
        %v2425 = vsel %vm751, %v2347, 0.0
        %2426 = vadd.xlane.f32.xlu0 %v2425
        %v2427 = vpop.xlane.xlu0 %2426
        %v2428 = vsel %vm751, %v2348, 0.0
        %2429 = vadd.xlane.f32.xlu0 %v2428
        %v2430 = vpop.xlane.xlu0 %2429
        %v2431 = vsel %vm751, %v2349, 0.0
        %2432 = vadd.xlane.f32.xlu0 %v2431
        %v2433 = vpop.xlane.xlu0 %2432
        %v2434 = vsel %vm751, %v2350, 0.0
        %2435 = vadd.xlane.f32.xlu0 %v2434
        %v2436 = vpop.xlane.xlu0 %2435
        %v2437 = vsel %vm751, %v2351, 0.0
        %2438 = vadd.xlane.f32.xlu0 %v2437
        %v2439 = vpop.xlane.xlu0 %2438
        %v2440 = vsel %vm751, %v2352, 0.0
        %2441 = vadd.xlane.f32.xlu0 %v2440
        %v2442 = vpop.xlane.xlu0 %2441
        %v2443 = vsel %vm751, %v2353, 0.0
        %2444 = vadd.xlane.f32.xlu0 %v2443
        %v2445 = vpop.xlane.xlu0 %2444
        %v2446 = vsel %vm751, %v2354, 0.0
        %2447 = vadd.xlane.f32.xlu0 %v2446
        %v2448 = vpop.xlane.xlu0 %2447
        %v2449 = vsel %vm751, %v2355, 0.0
        %2450 = vadd.xlane.f32.xlu0 %v2449
        %v2451 = vpop.xlane.xlu0 %2450
        %v2452 = vsel %vm751, %v2356, 0.0
        %2453 = vadd.xlane.f32.xlu0 %v2452
        %v2454 = vpop.xlane.xlu0 %2453
        %v2455 = vsel %vm751, %v2357, 0.0
        %2456 = vadd.xlane.f32.xlu0 %v2455
        %v2457 = vpop.xlane.xlu0 %2456
        %v2458 = vsel %vm751, %v2358, 0.0
        %2459 = vadd.xlane.f32.xlu0 %v2458
        %v2460 = vpop.xlane.xlu0 %2459
        %v2461 = vsel %vm751, %v2359, 0.0
        %2462 = vadd.xlane.f32.xlu0 %v2461
        %v2463 = vpop.xlane.xlu0 %2462
        %v2464 = vsel %vm751, %v2360, 0.0
        %2465 = vadd.xlane.f32.xlu0 %v2464
        %v2466 = vpop.xlane.xlu0 %2465
        %v2467 = vsel %vm751, %v2361, 0.0
        %2468 = vadd.xlane.f32.xlu0 %v2467
        %v2469 = vpop.xlane.xlu0 %2468
        %v2470 = vsel %vm751, %v2362, 0.0
        %2471 = vadd.xlane.f32.xlu0 %v2470
        %v2472 = vpop.xlane.xlu0 %2471
        %v2473 = vsel %vm751, %v2363, 0.0
        %2474 = vadd.xlane.f32.xlu0 %v2473
        %v2475 = vpop.xlane.xlu0 %2474
        %v2476 = vsel %vm751, %v2364, 0.0
        %2477 = vadd.xlane.f32.xlu0 %v2476
        %v2478 = vpop.xlane.xlu0 %2477
        %v2479 = vsel %vm751, %v2365, 0.0
        %2480 = vadd.xlane.f32.xlu0 %v2479
        %v2481 = vpop.xlane.xlu0 %2480
        %v2482 = vsel %vm751, %v2366, 0.0
        %2483 = vadd.xlane.f32.xlu0 %v2482
        %v2484 = vpop.xlane.xlu0 %2483
        %v2485 = vsel %vm751, %v2367, 0.0
        %2486 = vadd.xlane.f32.xlu0 %v2485
        %v2487 = vpop.xlane.xlu0 %2486
        %v2488 = vsel %vm751, %v2368, 0.0
        %2489 = vadd.xlane.f32.xlu0 %v2488
        %v2490 = vpop.xlane.xlu0 %2489
        %v2491 = vsel %vm751, %v2369, 0.0
        %2492 = vadd.xlane.f32.xlu0 %v2491
        %v2493 = vpop.xlane.xlu0 %2492
        %v2494 = vsel %vm751, %v2370, 0.0
        %2495 = vadd.xlane.f32.xlu0 %v2494
        %v2496 = vpop.xlane.xlu0 %2495
        %v2497 = vsel %vm751, %v2371, 0.0
        %2498 = vadd.xlane.f32.xlu0 %v2497
        %v2499 = vpop.xlane.xlu0 %2498
        %v2500 = vsel %vm751, %v2372, 0.0
        %2501 = vadd.xlane.f32.xlu0 %v2500
        %v2502 = vpop.xlane.xlu0 %2501
        %v2503 = vsel %vm751, %v2373, 0.0
        %2504 = vadd.xlane.f32.xlu0 %v2503
        %v2505 = vpop.xlane.xlu0 %2504
        %v2506 = vsel %vm751, %v2374, 0.0
        %2507 = vadd.xlane.f32.xlu0 %v2506
        %v2508 = vpop.xlane.xlu0 %2507
        %v2509 = vsel %vm751, %v2375, 0.0
        %2510 = vadd.xlane.f32.xlu0 %v2509
        %v2511 = vpop.xlane.xlu0 %2510
        %v2512 = vsel %vm751, %v2376, 0.0
        %2513 = vadd.xlane.f32.xlu0 %v2512
        %v2514 = vpop.xlane.xlu0 %2513
        %v2515 = vsel %vm751, %v2377, 0.0
        %2516 = vadd.xlane.f32.xlu0 %v2515
        %v2517 = vpop.xlane.xlu0 %2516
        %v2518 = vsel %vm751, %v2378, 0.0
        %2519 = vadd.xlane.f32.xlu0 %v2518
        %v2520 = vpop.xlane.xlu0 %2519
        %v2521 = vsel %vm751, %v2379, 0.0
        %2522 = vadd.xlane.f32.xlu0 %v2521
        %v2523 = vpop.xlane.xlu0 %2522
        %v2524 = vsel %vm751, %v2380, 0.0
        %2525 = vadd.xlane.f32.xlu0 %v2524
        %v2526 = vpop.xlane.xlu0 %2525
        %v2527 = vsel %vm751, %v2381, 0.0
        %2528 = vadd.xlane.f32.xlu0 %v2527
        %v2529 = vpop.xlane.xlu0 %2528
        %v2530 = vsel %vm751, %v2382, 0.0
        %2531 = vadd.xlane.f32.xlu0 %v2530
        %v2532 = vpop.xlane.xlu0 %2531
        %v2533 = vsel %vm751, %v2383, 0.0
        %2534 = vadd.xlane.f32.xlu0 %v2533
        %v2535 = vpop.xlane.xlu0 %2534
        %v2536 = vsel %vm751, %v2384, 0.0
        %2537 = vadd.xlane.f32.xlu0 %v2536
        %v2538 = vpop.xlane.xlu0 %2537
        %v2539 = vsel %vm751, %v2385, 0.0
        %2540 = vadd.xlane.f32.xlu0 %v2539
        %v2541 = vpop.xlane.xlu0 %2540
        %v2542 = vsel %vm751, %v2386, 0.0
        %2543 = vadd.xlane.f32.xlu0 %v2542
        %v2544 = vpop.xlane.xlu0 %2543
        %v2545 = vsel %vm751, %v2387, 0.0
        %2546 = vadd.xlane.f32.xlu0 %v2545
        %v2547 = vpop.xlane.xlu0 %2546
        %v2548 = vsel %vm751, %v2388, 0.0
        %2549 = vadd.xlane.f32.xlu0 %v2548
        %v2550 = vpop.xlane.xlu0 %2549
        %v2551 = vsel %vm751, %v2389, 0.0
        %2552 = vadd.xlane.f32.xlu0 %v2551
        %v2553 = vpop.xlane.xlu0 %2552
        %v2554 = vsel %vm751, %v2390, 0.0
        %2555 = vadd.xlane.f32.xlu0 %v2554
        %v2556 = vpop.xlane.xlu0 %2555
        %v2557 = vsel %vm751, %v2391, 0.0
        %2558 = vadd.xlane.f32.xlu0 %v2557
        %v2559 = vpop.xlane.xlu0 %2558
        %v2560 = vsel %vm751, %v2392, 0.0
        %2561 = vadd.xlane.f32.xlu0 %v2560
        %v2562 = vpop.xlane.xlu0 %2561
        %v2563 = vsel %vm751, %v2393, 0.0
        %2564 = vadd.xlane.f32.xlu0 %v2563
        %v2565 = vpop.xlane.xlu0 %2564
        %v2566 = vsel %vm751, %v2394, 0.0
        %2567 = vadd.xlane.f32.xlu0 %v2566
        %v2568 = vpop.xlane.xlu0 %2567
        %v2569 = vsel %vm751, %v2395, 0.0
        %2570 = vadd.xlane.f32.xlu0 %v2569
        %v2571 = vpop.xlane.xlu0 %2570
        %v2572 = vsel %vm751, %v2396, 0.0
        %2573 = vadd.xlane.f32.xlu0 %v2572
        %v2574 = vpop.xlane.xlu0 %2573
        %v2575 = vsel %vm751, %v2397, 0.0
        %2576 = vadd.xlane.f32.xlu0 %v2575
        %v2577 = vpop.xlane.xlu0 %2576
        %v2578 = vsel %vm751, %v2398, 0.0
        %2579 = vadd.xlane.f32.xlu0 %v2578
        %v2580 = vpop.xlane.xlu0 %2579
        %v2581 = vsel %vm751, %v2399, 0.0
        %2582 = vadd.xlane.f32.xlu0 %v2581
        %v2583 = vpop.xlane.xlu0 %2582
        %v2584 = vsel %vm751, %v2400, 0.0
        %2585 = vadd.xlane.f32.xlu0 %v2584
        %v2586 = vpop.xlane.xlu0 %2585
        %v2587 = vsel %vm751, %v2401, 0.0
        %2588 = vadd.xlane.f32.xlu0 %v2587
        %v2589 = vpop.xlane.xlu0 %2588
        %v2590 = vsel %vm751, %v2402, 0.0
        %2591 = vadd.xlane.f32.xlu0 %v2590
        %v2592 = vpop.xlane.xlu0 %2591
        %v2593 = vsel %vm751, %v2403, 0.0
        %2594 = vadd.xlane.f32.xlu0 %v2593
        %v2595 = vpop.xlane.xlu0 %2594
        %v2596 = vld [vmem:[#allocation2] sm:$0x1]
        %v2598 = vlaneseq
        %v2599 = vshrl.u32 %v2598, 7
        %v2600 = vsub.s32 0, %v2599
        %v2601 = vrot.slane %v2596, %v2600
        %v2603 = vadd.f32 %v2406, %v2601
        %v2604 = vadd.f32 %v2409, %v2601
        %v2605 = vadd.f32 %v2412, %v2601
        %v2606 = vadd.f32 %v2415, %v2601
        %v2607 = vadd.f32 %v2418, %v2601
        %v2608 = vadd.f32 %v2421, %v2601
        %v2609 = vadd.f32 %v2424, %v2601
        %v2610 = vadd.f32 %v2427, %v2601
        %v2611 = vadd.f32 %v2430, %v2601
        %v2612 = vadd.f32 %v2433, %v2601
        %v2613 = vadd.f32 %v2436, %v2601
        %v2614 = vadd.f32 %v2439, %v2601
        %v2615 = vadd.f32 %v2442, %v2601
        %v2616 = vadd.f32 %v2445, %v2601
        %v2617 = vadd.f32 %v2448, %v2601
        %v2618 = vadd.f32 %v2451, %v2601
        %v2619 = vadd.f32 %v2454, %v2601
        %v2620 = vadd.f32 %v2457, %v2601
        %v2621 = vadd.f32 %v2460, %v2601
        %v2622 = vadd.f32 %v2463, %v2601
        %v2623 = vadd.f32 %v2466, %v2601
        %v2624 = vadd.f32 %v2469, %v2601
        %v2625 = vadd.f32 %v2472, %v2601
        %v2626 = vadd.f32 %v2475, %v2601
        %v2627 = vadd.f32 %v2478, %v2601
        %v2628 = vadd.f32 %v2481, %v2601
        %v2629 = vadd.f32 %v2484, %v2601
        %v2630 = vadd.f32 %v2487, %v2601
        %v2631 = vadd.f32 %v2490, %v2601
        %v2632 = vadd.f32 %v2493, %v2601
        %v2633 = vadd.f32 %v2496, %v2601
        %v2634 = vadd.f32 %v2499, %v2601
        %v2635 = vadd.f32 %v2502, %v2601
        %v2636 = vadd.f32 %v2505, %v2601
        %v2637 = vadd.f32 %v2508, %v2601
        %v2638 = vadd.f32 %v2511, %v2601
        %v2639 = vadd.f32 %v2514, %v2601
        %v2640 = vadd.f32 %v2517, %v2601
        %v2641 = vadd.f32 %v2520, %v2601
        %v2642 = vadd.f32 %v2523, %v2601
        %v2643 = vadd.f32 %v2526, %v2601
        %v2644 = vadd.f32 %v2529, %v2601
        %v2645 = vadd.f32 %v2532, %v2601
        %v2646 = vadd.f32 %v2535, %v2601
        %v2647 = vadd.f32 %v2538, %v2601
        %v2648 = vadd.f32 %v2541, %v2601
        %v2649 = vadd.f32 %v2544, %v2601
        %v2650 = vadd.f32 %v2547, %v2601
        %v2651 = vadd.f32 %v2550, %v2601
        %v2652 = vadd.f32 %v2553, %v2601
        %v2653 = vadd.f32 %v2556, %v2601
        %v2654 = vadd.f32 %v2559, %v2601
        %v2655 = vadd.f32 %v2562, %v2601
        %v2656 = vadd.f32 %v2565, %v2601
        %v2657 = vadd.f32 %v2568, %v2601
        %v2658 = vadd.f32 %v2571, %v2601
        %v2659 = vadd.f32 %v2574, %v2601
        %v2660 = vadd.f32 %v2577, %v2601
        %v2661 = vadd.f32 %v2580, %v2601
        %v2662 = vadd.f32 %v2583, %v2601
        %v2663 = vadd.f32 %v2586, %v2601
        %v2664 = vadd.f32 %v2589, %v2601
        %v2665 = vadd.f32 %v2592, %v2601
        %v2666 = vadd.f32 %v2595, %v2601
        %vm2667 = vcmask 7168
        %2668 = vst.msk [vmem:[%s440] sm:$0xff] %vm2667, %v2603
        %2669 = vst.msk [vmem:[%s440 + $0x8] sm:$0xff] %vm2667, %v2604
        %2670 = vst.msk [vmem:[%s440 + $0x10] sm:$0xff] %vm2667, %v2605
        %2671 = vst.msk [vmem:[%s440 + $0x18] sm:$0xff] %vm2667, %v2606
        %2672 = vst.msk [vmem:[%s440 + $0x20] sm:$0xff] %vm2667, %v2607
        %2673 = vst.msk [vmem:[%s440 + $0x28] sm:$0xff] %vm2667, %v2608
        %2674 = vst.msk [vmem:[%s440 + $0x30] sm:$0xff] %vm2667, %v2609
        %2675 = vst.msk [vmem:[%s440 + $0x38] sm:$0xff] %vm2667, %v2610
        %2676 = vst.msk [vmem:[%s440 + $0x40] sm:$0xff] %vm2667, %v2611
        %2677 = vst.msk [vmem:[%s440 + $0x48] sm:$0xff] %vm2667, %v2612
        %2678 = vst.msk [vmem:[%s440 + $0x50] sm:$0xff] %vm2667, %v2613
        %2679 = vst.msk [vmem:[%s440 + $0x58] sm:$0xff] %vm2667, %v2614
        %2680 = vst.msk [vmem:[%s440 + $0x60] sm:$0xff] %vm2667, %v2615
        %2681 = vst.msk [vmem:[%s440 + $0x68] sm:$0xff] %vm2667, %v2616
        %2682 = vst.msk [vmem:[%s440 + $0x70] sm:$0xff] %vm2667, %v2617
        %2683 = vst.msk [vmem:[%s440 + $0x78] sm:$0xff] %vm2667, %v2618
        %2684 = vst.msk [vmem:[%s440 + $0x80] sm:$0xff] %vm2667, %v2619
        %2685 = vst.msk [vmem:[%s440 + $0x88] sm:$0xff] %vm2667, %v2620
        %2686 = vst.msk [vmem:[%s440 + $0x90] sm:$0xff] %vm2667, %v2621
        %2687 = vst.msk [vmem:[%s440 + $0x98] sm:$0xff] %vm2667, %v2622
        %2688 = vst.msk [vmem:[%s440 + $0xa0] sm:$0xff] %vm2667, %v2623
        %2689 = vst.msk [vmem:[%s440 + $0xa8] sm:$0xff] %vm2667, %v2624
        %2690 = vst.msk [vmem:[%s440 + $0xb0] sm:$0xff] %vm2667, %v2625
        %2691 = vst.msk [vmem:[%s440 + $0xb8] sm:$0xff] %vm2667, %v2626
        %2692 = vst.msk [vmem:[%s440 + $0xc0] sm:$0xff] %vm2667, %v2627
        %2693 = vst.msk [vmem:[%s440 + $0xc8] sm:$0xff] %vm2667, %v2628
        %2694 = vst.msk [vmem:[%s440 + $0xd0] sm:$0xff] %vm2667, %v2629
        %2695 = vst.msk [vmem:[%s440 + $0xd8] sm:$0xff] %vm2667, %v2630
        %2696 = vst.msk [vmem:[%s440 + $0xe0] sm:$0xff] %vm2667, %v2631
        %2697 = vst.msk [vmem:[%s440 + $0xe8] sm:$0xff] %vm2667, %v2632
        %2698 = vst.msk [vmem:[%s440 + $0xf0] sm:$0xff] %vm2667, %v2633
        %2699 = vst.msk [vmem:[%s440 + $0xf8] sm:$0xff] %vm2667, %v2634
        %2700 = vst.msk [vmem:[%s440 + $0x100] sm:$0xff] %vm2667, %v2635
        %2701 = vst.msk [vmem:[%s440 + $0x108] sm:$0xff] %vm2667, %v2636
        %2702 = vst.msk [vmem:[%s440 + $0x110] sm:$0xff] %vm2667, %v2637
        %2703 = vst.msk [vmem:[%s440 + $0x118] sm:$0xff] %vm2667, %v2638
        %2704 = vst.msk [vmem:[%s440 + $0x120] sm:$0xff] %vm2667, %v2639
        %2705 = vst.msk [vmem:[%s440 + $0x128] sm:$0xff] %vm2667, %v2640
        %2706 = vst.msk [vmem:[%s440 + $0x130] sm:$0xff] %vm2667, %v2641
        %2707 = vst.msk [vmem:[%s440 + $0x138] sm:$0xff] %vm2667, %v2642
        %2708 = vst.msk [vmem:[%s440 + $0x140] sm:$0xff] %vm2667, %v2643
        %2709 = vst.msk [vmem:[%s440 + $0x148] sm:$0xff] %vm2667, %v2644
        %2710 = vst.msk [vmem:[%s440 + $0x150] sm:$0xff] %vm2667, %v2645
        %2711 = vst.msk [vmem:[%s440 + $0x158] sm:$0xff] %vm2667, %v2646
        %2712 = vst.msk [vmem:[%s440 + $0x160] sm:$0xff] %vm2667, %v2647
        %2713 = vst.msk [vmem:[%s440 + $0x168] sm:$0xff] %vm2667, %v2648
        %2714 = vst.msk [vmem:[%s440 + $0x170] sm:$0xff] %vm2667, %v2649
        %2715 = vst.msk [vmem:[%s440 + $0x178] sm:$0xff] %vm2667, %v2650
        %2716 = vst.msk [vmem:[%s440 + $0x180] sm:$0xff] %vm2667, %v2651
        %2717 = vst.msk [vmem:[%s440 + $0x188] sm:$0xff] %vm2667, %v2652
        %2718 = vst.msk [vmem:[%s440 + $0x190] sm:$0xff] %vm2667, %v2653
        %2719 = vst.msk [vmem:[%s440 + $0x198] sm:$0xff] %vm2667, %v2654
        %2720 = vst.msk [vmem:[%s440 + $0x1a0] sm:$0xff] %vm2667, %v2655
        %2721 = vst.msk [vmem:[%s440 + $0x1a8] sm:$0xff] %vm2667, %v2656
        %2722 = vst.msk [vmem:[%s440 + $0x1b0] sm:$0xff] %vm2667, %v2657
        %2723 = vst.msk [vmem:[%s440 + $0x1b8] sm:$0xff] %vm2667, %v2658
        %2724 = vst.msk [vmem:[%s440 + $0x1c0] sm:$0xff] %vm2667, %v2659
        %2725 = vst.msk [vmem:[%s440 + $0x1c8] sm:$0xff] %vm2667, %v2660
        %2726 = vst.msk [vmem:[%s440 + $0x1d0] sm:$0xff] %vm2667, %v2661
        %2727 = vst.msk [vmem:[%s440 + $0x1d8] sm:$0xff] %vm2667, %v2662
        %2728 = vst.msk [vmem:[%s440 + $0x1e0] sm:$0xff] %vm2667, %v2663
        %2729 = vst.msk [vmem:[%s440 + $0x1e8] sm:$0xff] %vm2667, %v2664
        %2730 = vst.msk [vmem:[%s440 + $0x1f0] sm:$0xff] %vm2667, %v2665
        %2731 = vst.msk [vmem:[%s440 + $0x1f8] sm:$0xff] %vm2667, %v2666
        %s2732 = smul.u32 64, %s26
        %p2733 = scmp.lt.s32.totalorder %s2732, 255
        %s2734 = scalar_select %p2733, %s2732, 255
        %s2735 = smul.addr %s2734, 8
        %s2736 = scalar_lea.vmem %s9, %s2735
        // Predicated region
        $region81: #{tpu_custom_call.1} parent=55 // pred_check
          %p2737 = pneg %p243
        $region82: #{tpu_custom_call.1} parent=55 // pred_check_branch
          %2739 = sbr.rel (%p2737) target = $region84
        $region83: #{tpu_custom_call.1} parent=55 // pred_region
          %s2740 = smul.u32 64, %s26
        $region84: #{tpu_custom_call.1} parent=55 // pred_fallthru
          _
      $region56: #{tpu_custom_call.1} parent=5 // pred_fallthru
        _
      %p2741 = scmp.le.s32.totalorder 2, %s21
      // Predicated region
      $region85: #{tpu_custom_call.1} parent=5 // pred_check
        %p2742 = pneg %p2741
      $region86: #{tpu_custom_call.1} parent=5 // pred_check_branch
        %2744 = sbr.rel (%p2742) target = $region88
      $region87: #{tpu_custom_call.1} parent=5 // pred_region
        %s2745 = ssub.s32 %s21, 2
        // Predicated region
        $region89: #{tpu_custom_call.1} parent=87 // pred_check
          %p2746 = pneg %p249
        $region90: #{tpu_custom_call.1} parent=87 // pred_check_branch
          %2748 = sbr.rel (%p2746) target = $region92
        $region91: #{tpu_custom_call.1} parent=87 // pred_region
          %s2749 = smul.u32 64, %s27
          %p2750 = scmp.lt.s32.totalorder %s2749, 255
          %s2751 = scalar_select %p2750, %s2749, 255
          %s2752 = smul.addr %s2751, 8
          %s2753 = scalar_lea.vmem %s9, %s2752
        $region92: #{tpu_custom_call.1} parent=87 // pred_fallthru
          _
      $region88: #{tpu_custom_call.1} parent=5 // pred_fallthru
        _
    $region6: #{tpu_custom_call.1} parent=1 // loop_footer
      %s25 = sadd.s32 1, %s21
    $region7: #{tpu_custom_call.1} parent=1 // loop_footer_branch
      %20 = sbr.rel target = $region3
    $region8: #{tpu_custom_call.1} parent=1 // loop_exit
      _
    %2754 = vsyncpa [#allocation4], 1
    %s2755 = scalar_lea.sflag [#allocation4], 1
    %2756 = vsyncpa %s2755, 1
    %2757 = vsyncpa [#allocation6], 1
    %2758 = vsyncpa [#allocation9], 1
    %2759 = vsyncpa [#allocation12], 1

</llo_original>
